<compile_context>
chip_gen: v7x
topology: tpu7x:2x2x1
jax: 0.10.0
libtpu: 0.0.40
codegen_flags: <defaults>
</compile_context>

<pallas_src>
import functools
import math

import jax
import jax.numpy as jnp
from jax.experimental import pallas as pl
from jax.experimental.pallas import tpu as pltpu


# ----------------------------- fused kernel --------------------------------

def _disc_forward_kernel(
    x_ref,        # (BT, S, V)   compute dtype
    wenc_ref,     # (V, E)       compute dtype
    benc_ref,     # (1, E)       f32
    wqkv_ref,     # (L, E, 3E)   compute dtype  (1/sqrt(dh) folded into Q cols)
    bqkv_ref,     # (L, 1, 3E)   f32
    wo_ref,       # (L, E, E)    compute dtype
    bo_ref,       # (L, 1, E)    f32
    g_ref,        # (L, 1, E)    f32   layernorm gamma
    beta_ref,     # (L, 1, E)    f32   layernorm beta
    wfc_ref,      # (1, E)       f32   final head row
    bfc_ref,      # (1, 1)       f32
    o_ref,        # (1, 1, BT)   f32   lane-dense logits for this batch tile
    cls_ref,      # (BT, S_cls, E) f32 scratch for CLS prepend
    *,
    num_heads,
    n_blocks,
    layers_per_block,
    n_out_layers,
    pooling,
    out_mode,
    compute_dtype,
):
    bt, s_in, v = x_ref.shape
    e = wenc_ref.shape[1]
    dh = e // num_heads

    def mha_with_norm(x, l, s_cur):
        """LayerNorm(MultiheadSelfAttention(x) + x); x: (bt*s_cur, E)."""
        r = bt * s_cur
        # Fused, lane-dense QKV projection over ALL bt samples at once; single
        # f32 -> compute_dtype cast of the whole (r, 3E) slab.
        qkv = (jnp.dot(x, wqkv_ref[l], preferred_element_type=jnp.float32)
               + bqkv_ref[l]).astype(compute_dtype)           # (r, 3E)
        wo_l = wo_ref[l]                                       # (E, E)
        # Residual + output-projection bias start the f32 accumulator; the
        # per-head "concat + Wo" is folded into per-head partial matmuls.
        acc = x.astype(jnp.float32) + bo_ref[l]                # (r, E) f32
        for h in range(num_heads):                             # small static unroll
            qh = qkv[:, h * dh:(h + 1) * dh].reshape(bt, s_cur, dh)
            kh = qkv[:, e + h * dh:e + (h + 1) * dh].reshape(bt, s_cur, dh)
            vh = qkv[:, 2 * e + h * dh:2 * e + (h + 1) * dh].reshape(bt, s_cur, dh)
            # sample-batched scores (bt, s, s), f32 acc (scale folded into Wq)
            s = jnp.einsum('bqd,bkd->bqk', qh, kh,
                           preferred_element_type=jnp.float32)
            s = s - jnp.max(s, axis=-1, keepdims=True)
            p = jnp.exp(s)
            p = p * pl.reciprocal(jnp.sum(p, axis=-1, keepdims=True),
                                  approx=True)
            oh = jnp.einsum('bqk,bkd->bqd', p.astype(compute_dtype), vh,
                            preferred_element_type=jnp.float32)  # (bt, s, dh)
            acc = acc + jnp.dot(oh.reshape(r, dh).astype(compute_dtype),
                                wo_l[h * dh:(h + 1) * dh, :],
                                preferred_element_type=jnp.float32)
        mu = jnp.mean(acc, axis=-1, keepdims=True)
        var = jnp.mean((acc - mu) ** 2, axis=-1, keepdims=True)
        yn = (acc - mu) * jax.lax.rsqrt(var + 1e-5)
        yn = yn * g_ref[l] + beta_ref[l]
        return yn.astype(compute_dtype)

    # encoder linear over all bt*s rows at once: (bt*s, V) x (V, E)
    x = x_ref[...].reshape(bt * s_in, v)
    x = (jnp.dot(x, wenc_ref[...], preferred_element_type=jnp.float32)
         + benc_ref[...]).astype(compute_dtype)

    s_cur = s_in
    layer = 0
    for _ in range(n_blocks):                                   # discBlocks
        for _ in range(layers_per_block):
            x = mha_with_norm(x, layer, s_cur)
            layer += 1
        if pooling in ("avg", "max"):
            xr = x.astype(jnp.float32).reshape(bt, s_cur // 2, 2, e)
            xp = jnp.mean(xr, axis=2) if pooling == "avg" else jnp.max(xr, axis=2)
            s_cur //= 2
            x = xp.reshape(bt * s_cur, e).astype(compute_dtype)
        # TODO(synk): original discBlock source unavailable; other pooling
        # modes fall through unpooled.

    # prepend the 0.5 cls token per sample via the VMEM staging slab (no
    # sublane concatenate of the whole activation).
    s_cls = s_cur + 1
    cls_ref[:, 0:1, :] = jnp.full((bt, 1, e), 0.5, jnp.float32)
    cls_ref[:, 1:, :] = x.astype(jnp.float32).reshape(bt, s_cur, e)
    x = cls_ref[...].astype(compute_dtype).reshape(bt * s_cls, e)
    s_cur = s_cls

    for _ in range(n_out_layers):                               # outEmb
        x = mha_with_norm(x, layer, s_cur)
        layer += 1

    # final head: pick each sample's CLS row, VPU lane reduction, lane-dense
    # (1, bt) writeback.
    x_cls = x.reshape(bt, s_cur, e)[:, 0, :].astype(jnp.float32)  # (bt, E)
    y = jnp.sum(x_cls * wfc_ref[...], axis=-1)                    # (bt,)
    y = y.reshape(1, bt) + bfc_ref[...]                           # (1, bt)
    if out_mode == "sigmoid":
        y = jax.nn.sigmoid(y)
    elif out_mode == "tanh":
        y = jnp.tanh(y)
    o_ref[0] = y


# ------------------------------ jitted wrapper ------------------------------

def _disc_forward(params, X, *, out_mode, num_heads, n_blocks,
                  layers_per_block, n_out_layers, pooling, compute_dtype):
    Bsz, S, V = X.shape
    E = params["wenc"].shape[1]
    L = params["wqkv"].shape[0]

    s_final = S
    if pooling in ("avg", "max"):
        for _ in range(n_blocks):
            assert s_final % 2 == 0, "sequence length must halve evenly under pooling"
            s_final //= 2
    s_cls = s_final + 1

    # --- choose the batch tile BT (review item 1 / 8) ---
    # Aim for ~128 rows per step (fills MXU/sublanes), but keep >= 2 grid
    # steps when the batch allows it so v7x's 2 TensorCores both get work.
    bt = max(1, min(Bsz, 128 // max(S, 1)))
    if Bsz >= 2:
        bt = min(bt, (Bsz + 1) // 2)
    g = -(-Bsz // bt)                      # cdiv
    pad = g * bt - Bsz

    Xc = X.astype(compute_dtype)           # bf16 at the kernel boundary
    if pad:
        Xc = jnp.concatenate(
            [Xc, jnp.zeros((pad, S, V), compute_dtype)], axis=0)

    kernel = functools.partial(
        _disc_forward_kernel, num_heads=num_heads, n_blocks=n_blocks,
        layers_per_block=layers_per_block, n_out_layers=n_out_layers,
        pooling=pooling, out_mode=out_mode, compute_dtype=compute_dtype)

    out = pl.pallas_call(
        kernel,
        out_shape=jax.ShapeDtypeStruct((g, 1, bt), jnp.float32),
        grid=(g,),
        in_specs=[
            pl.BlockSpec((bt, S, V), lambda b: (b, 0, 0)),        # X tile
            pl.BlockSpec((V, E), lambda b: (0, 0)),               # w_enc
            pl.BlockSpec((1, E), lambda b: (0, 0)),               # b_enc
            pl.BlockSpec((L, E, 3 * E), lambda b: (0, 0, 0)),     # Wqkv stacked
            pl.BlockSpec((L, 1, 3 * E), lambda b: (0, 0, 0)),     # Bqkv
            pl.BlockSpec((L, E, E), lambda b: (0, 0, 0)),         # Wo
            pl.BlockSpec((L, 1, E), lambda b: (0, 0, 0)),         # Bo
            pl.BlockSpec((L, 1, E), lambda b: (0, 0, 0)),         # ln gamma
            pl.BlockSpec((L, 1, E), lambda b: (0, 0, 0)),         # ln beta
            pl.BlockSpec((1, E), lambda b: (0, 0)),               # w_fc row
            pl.BlockSpec((1, 1), lambda b: (0, 0)),               # b_fc
        ],
        out_specs=pl.BlockSpec((1, 1, bt), lambda b: (b, 0, 0)),  # lane-dense
        scratch_shapes=[pltpu.VMEM((bt, s_cls, E), jnp.float32)],
        compiler_params=pltpu.CompilerParams(
            # batch axis is independent -> shards across the 2 v7x TensorCores
            dimension_semantics=("parallel",)),
    )(Xc, params["wenc"], params["benc"], params["wqkv"], params["bqkv"],
      params["wo"], params["bo"], params["ln_g"], params["ln_b"],
      params["wfc"], params["bfc"])

    return out.reshape(g * bt, 1)[:Bsz]


# ------------------------- parameter initialization ------------------------

def _init_linear(key, din, dout):
    k1, k2 = jax.random.split(key)
    bound = 1.0 / math.sqrt(din)
    w_t = jax.random.uniform(k1, (din, dout), jnp.float32, -bound, bound)
    b = jax.random.uniform(k2, (1, dout), jnp.float32, -bound, bound)
    return w_t, b


def _init_mha_layer(key, E, H):
    dh = E // H
    kq, kk, kv, ko = jax.random.split(key, 4)
    wq, bq = _init_linear(kq, E, E)
    wk, bk = _init_linear(kk, E, E)
    wv, bv = _init_linear(kv, E, E)
    wo, bo = _init_linear(ko, E, E)
    scale = 1.0 / math.sqrt(dh)
    # fold the 1/sqrt(dh) attention scale into the Q projection (weights+bias)
    wqkv = jnp.concatenate([wq * scale, wk, wv], axis=1)    # (E, 3E) lane-dense
    bqkv = jnp.concatenate([bq * scale, bk, bv], axis=1)    # (1, 3E)
    return dict(wqkv=wqkv, bqkv=bqkv, wo=wo, bo=bo,
                ln_g=jnp.ones((1, E), jnp.float32),
                ln_b=jnp.zeros((1, E), jnp.float32))


# ------------------------------- model glue --------------------------------

class DiscriminatorPallas:
    def __init__(self, T, B, O, outMode, batchSize, vocab_size, embedding_size,
                 num_heads, pooling, embed_mode, key,
                 compute_dtype=jnp.bfloat16):
        assert embedding_size % num_heads == 0
        self.out_mode = outMode.lower()
        self.embed_mode = embed_mode.lower()
        self.pooling = (pooling or "none").lower()
        self.E = embedding_size
        self.H = num_heads
        self.T, self.B, self.O = T, B, O
        self.batchSize = batchSize
        self.compute_dtype = compute_dtype

        if self.embed_mode == "pca":
            # TODO(synk): torch.pca_lowrank (SVD) has no clean Pallas equivalent.
            raise NotImplementedError("pca embed_mode not supported")

        n_layers = B * T + O
        assert n_layers >= 1
        keys = jax.random.split(key, n_layers + 2)

        wenc, benc = _init_linear(keys[0], vocab_size, embedding_size)
        layers = [_init_mha_layer(keys[1 + i], embedding_size, num_heads)
                  for i in range(n_layers)]
        wfc, bfc = _init_linear(keys[-1], embedding_size, 1)

        cd = compute_dtype
        self.params = dict(
            wenc=wenc.astype(cd), benc=benc,
            wqkv=jnp.stack([l["wqkv"] for l in layers]).astype(cd),
            bqkv=jnp.stack([l["bqkv"] for l in layers]),
            wo=jnp.stack([l["wo"] for l in layers]).astype(cd),
            bo=jnp.stack([l["bo"] for l in layers]),
            ln_g=jnp.stack([l["ln_g"] for l in layers]),
            ln_b=jnp.stack([l["ln_b"] for l in layers]),
            wfc=wfc.reshape(1, embedding_size),   # row vector for VPU head
            bfc=bfc.reshape(1, 1),
        )

        self._forward = jax.jit(functools.partial(
            _disc_forward, out_mode=self.out_mode, num_heads=self.H,
            n_blocks=self.B, layers_per_block=self.T, n_out_layers=self.O,
            pooling=self.pooling, compute_dtype=cd))

    def __call__(self, X):
        return self._forward(self.params, X)


# ---------------------------------- main ------------------------------------

if __name__ == "__main__":
    key = jax.random.PRNGKey(0)
    kparams, kx = jax.random.split(key)

    batch, seq, vocab = 4, 8, 16
    E, heads = 32, 2
    T, Bblocks, O = 1, 2, 1

    model = DiscriminatorPallas(
        T=T, B=Bblocks, O=O, outMode="sigmoid", batchSize=batch,
        vocab_size=vocab, embedding_size=E, num_heads=heads,
        pooling="avg", embed_mode="fc", key=kparams)

    X = jax.random.normal(kx, (batch, seq, vocab), jnp.float32)
    out = model(X)
    out = jax.block_until_ready(out)
    assert out.shape == (batch, 1), out.shape
    assert bool(jnp.all(jnp.isfinite(out)))
    print("KERNEL_OK")
</pallas_src>

<mosaic_0001>
module attributes {stable_mosaic.version = 11 : i64} {
  func.func @_disc_forward_kernel(%arg0: i32, %arg1: memref<2x8x16xbf16, #tpu.memory_space<vmem>>, %arg2: memref<16x32xbf16, #tpu.memory_space<vmem>>, %arg3: memref<1x32xf32, #tpu.memory_space<vmem>>, %arg4: memref<3x32x96xbf16, #tpu.memory_space<vmem>>, %arg5: memref<3x1x96xf32, #tpu.memory_space<vmem>>, %arg6: memref<3x32x32xbf16, #tpu.memory_space<vmem>>, %arg7: memref<3x1x32xf32, #tpu.memory_space<vmem>>, %arg8: memref<3x1x32xf32, #tpu.memory_space<vmem>>, %arg9: memref<3x1x32xf32, #tpu.memory_space<vmem>>, %arg10: memref<1x32xf32, #tpu.memory_space<vmem>>, %arg11: memref<1x1xf32, #tpu.memory_space<vmem>>, %arg12: memref<1x1x2xf32, #tpu.memory_space<vmem>>, %arg13: memref<2x3x32xf32, #tpu.memory_space<vmem>>) attributes {dimension_semantics = [#tpu.dimension_semantics<parallel>], iteration_bounds = array<i64: 2>, scalar_prefetch = 0 : i64, scratch_operands = 1 : i64, tpu.core_type = #tpu.core_type<tc>, window_params = [{transform_indices = @transform_0, window_bounds = array<i64: 2, 8, 16>}, {pipeline_mode = #tpu.pipeline_mode<synchronous>, transform_indices = @transform_1, window_bounds = array<i64: 16, 32>}, {pipeline_mode = #tpu.pipeline_mode<synchronous>, transform_indices = @transform_2, window_bounds = array<i64: 1, 32>}, {pipeline_mode = #tpu.pipeline_mode<synchronous>, transform_indices = @transform_3, window_bounds = array<i64: 3, 32, 96>}, {pipeline_mode = #tpu.pipeline_mode<synchronous>, transform_indices = @transform_4, window_bounds = array<i64: 3, 1, 96>}, {pipeline_mode = #tpu.pipeline_mode<synchronous>, transform_indices = @transform_5, window_bounds = array<i64: 3, 32, 32>}, {pipeline_mode = #tpu.pipeline_mode<synchronous>, transform_indices = @transform_6, window_bounds = array<i64: 3, 1, 32>}, {pipeline_mode = #tpu.pipeline_mode<synchronous>, transform_indices = @transform_7, window_bounds = array<i64: 3, 1, 32>}, {pipeline_mode = #tpu.pipeline_mode<synchronous>, transform_indices = @transform_8, window_bounds = array<i64: 3, 1, 32>}, {pipeline_mode = #tpu.pipeline_mode<synchronous>, transform_indices = @transform_9, window_bounds = array<i64: 1, 32>}, {pipeline_mode = #tpu.pipeline_mode<synchronous>, transform_indices = @transform_10, window_bounds = array<i64: 1, 1>}, {transform_indices = @transform_11, window_bounds = array<i64: 1, 1, 2>}]} {
    %c0 = arith.constant 0 : index
    %c0_0 = arith.constant 0 : index
    %c0_1 = arith.constant 0 : index
    %0 = vector.load %arg1[%c0, %c0_0, %c0_1] : memref<2x8x16xbf16, #tpu.memory_space<vmem>>, vector<2x8x16xbf16>
    %1 = vector.shape_cast %0 : vector<2x8x16xbf16> to vector<16x16xbf16>
    %c0_2 = arith.constant 0 : index
    %c0_3 = arith.constant 0 : index
    %2 = vector.load %arg2[%c0_2, %c0_3] : memref<16x32xbf16, #tpu.memory_space<vmem>>, vector<16x32xbf16>
    %cst = arith.constant dense<0.000000e+00> : vector<16x32xf32>
    %3 = tpu.matmul %1, %2, %cst {dimension_numbers = #tpu.dot_dimension_numbers<[1], [0], [0], [1], [0, 0, 1, 1], [], []>} : vector<16x16xbf16>, vector<16x32xbf16>, vector<16x32xf32> -> vector<16x32xf32>
    %c0_4 = arith.constant 0 : index
    %c0_5 = arith.constant 0 : index
    %4 = vector.load %arg3[%c0_4, %c0_5] : memref<1x32xf32, #tpu.memory_space<vmem>>, vector<1x32xf32>
    %5 = vector.broadcast %4 : vector<1x32xf32> to vector<16x32xf32>
    %6 = arith.addf %3, %5 : vector<16x32xf32>
    %7 = arith.truncf %6 : vector<16x32xf32> to vector<16x32xbf16>
    %c0_6 = arith.constant 0 : index
    %c0_7 = arith.constant 0 : index
    %c0_8 = arith.constant 0 : index
    %8 = vector.load %arg4[%c0_6, %c0_7, %c0_8] : memref<3x32x96xbf16, #tpu.memory_space<vmem>>, vector<1x32x96xbf16>
    %9 = vector.shape_cast %8 : vector<1x32x96xbf16> to vector<32x96xbf16>
    %cst_9 = arith.constant dense<0.000000e+00> : vector<16x96xf32>
    %10 = tpu.matmul %7, %9, %cst_9 {dimension_numbers = #tpu.dot_dimension_numbers<[1], [0], [0], [1], [0, 0, 1, 1], [], []>} : vector<16x32xbf16>, vector<32x96xbf16>, vector<16x96xf32> -> vector<16x96xf32>
    %c0_10 = arith.constant 0 : index
    %c0_11 = arith.constant 0 : index
    %c0_12 = arith.constant 0 : index
    %11 = vector.load %arg5[%c0_10, %c0_11, %c0_12] : memref<3x1x96xf32, #tpu.memory_space<vmem>>, vector<1x1x96xf32>
    %12 = vector.shape_cast %11 : vector<1x1x96xf32> to vector<1x96xf32>
    %13 = vector.broadcast %12 : vector<1x96xf32> to vector<16x96xf32>
    %14 = arith.addf %10, %13 : vector<16x96xf32>
    %15 = arith.truncf %14 : vector<16x96xf32> to vector<16x96xbf16>
    %c0_13 = arith.constant 0 : index
    %c0_14 = arith.constant 0 : index
    %c0_15 = arith.constant 0 : index
    %16 = vector.load %arg6[%c0_13, %c0_14, %c0_15] : memref<3x32x32xbf16, #tpu.memory_space<vmem>>, vector<1x32x32xbf16>
    %17 = vector.shape_cast %16 : vector<1x32x32xbf16> to vector<32x32xbf16>
    %18 = arith.extf %7 : vector<16x32xbf16> to vector<16x32xf32>
    %c0_16 = arith.constant 0 : index
    %c0_17 = arith.constant 0 : index
    %c0_18 = arith.constant 0 : index
    %19 = vector.load %arg7[%c0_16, %c0_17, %c0_18] : memref<3x1x32xf32, #tpu.memory_space<vmem>>, vector<1x1x32xf32>
    %20 = vector.shape_cast %19 : vector<1x1x32xf32> to vector<1x32xf32>
    %21 = vector.broadcast %20 : vector<1x32xf32> to vector<16x32xf32>
    %22 = arith.addf %18, %21 : vector<16x32xf32>
    %23 = vector.extract_strided_slice %15 {offsets = [0, 0], sizes = [16, 16], strides = [1, 1]} : vector<16x96xbf16> to vector<16x16xbf16>
    %24 = vector.shape_cast %23 : vector<16x16xbf16> to vector<2x8x16xbf16>
    %25 = vector.extract_strided_slice %15 {offsets = [0, 32], sizes = [16, 16], strides = [1, 1]} : vector<16x96xbf16> to vector<16x16xbf16>
    %26 = vector.shape_cast %25 : vector<16x16xbf16> to vector<2x8x16xbf16>
    %27 = vector.extract_strided_slice %15 {offsets = [0, 64], sizes = [16, 16], strides = [1, 1]} : vector<16x96xbf16> to vector<16x16xbf16>
    %28 = vector.shape_cast %27 : vector<16x16xbf16> to vector<2x8x16xbf16>
    "tpu.trace_start"() <{level = 10 : i32, message = "bqd,bkd->bqk"}> : () -> ()
    %cst_19 = arith.constant dense<0.000000e+00> : vector<2x8x8xf32>
    %29 = tpu.matmul %24, %26, %cst_19 {dimension_numbers = #tpu.dot_dimension_numbers<[2], [2], [1], [1], [0, 0, 0, 1, 1, 1], [0], [0]>} : vector<2x8x16xbf16>, vector<2x8x16xbf16>, vector<2x8x8xf32> -> vector<2x8x8xf32>
    "tpu.trace_stop"() : () -> ()
    %cst_20 = arith.constant dense<0xFF800000> : vector<2x8xf32>
    %30 = vector.multi_reduction <maximumf>, %29, %cst_20 [2] : vector<2x8x8xf32> to vector<2x8xf32>
    %31 = vector.shape_cast %30 : vector<2x8xf32> to vector<2x8x1xf32>
    %32 = vector.broadcast %31 : vector<2x8x1xf32> to vector<2x8x8xf32>
    %33 = arith.subf %29, %32 : vector<2x8x8xf32>
    %34 = math.exp %33 : vector<2x8x8xf32>
    %cst_21 = arith.constant dense<0.000000e+00> : vector<2x8xf32>
    %35 = vector.multi_reduction <add>, %34, %cst_21 [2] : vector<2x8x8xf32> to vector<2x8xf32>
    %36 = vector.shape_cast %35 : vector<2x8xf32> to vector<2x8x1xf32>
    %37 = tpu.reciprocal %36 {approx = true} : vector<2x8x1xf32> -> vector<2x8x1xf32>
    %38 = vector.broadcast %37 : vector<2x8x1xf32> to vector<2x8x8xf32>
    %39 = arith.mulf %34, %38 : vector<2x8x8xf32>
    %40 = arith.truncf %39 : vector<2x8x8xf32> to vector<2x8x8xbf16>
    "tpu.trace_start"() <{level = 10 : i32, message = "bqk,bkd->bqd"}> : () -> ()
    %cst_22 = arith.constant dense<0.000000e+00> : vector<2x8x16xf32>
    %41 = tpu.matmul %40, %28, %cst_22 {dimension_numbers = #tpu.dot_dimension_numbers<[2], [1], [1], [2], [0, 0, 0, 1, 1, 2], [0], [0]>} : vector<2x8x8xbf16>, vector<2x8x16xbf16>, vector<2x8x16xf32> -> vector<2x8x16xf32>
    "tpu.trace_stop"() : () -> ()
    %42 = vector.shape_cast %41 : vector<2x8x16xf32> to vector<16x16xf32>
    %43 = arith.truncf %42 : vector<16x16xf32> to vector<16x16xbf16>
    %44 = vector.extract_strided_slice %17 {offsets = [0, 0], sizes = [16, 32], strides = [1, 1]} : vector<32x32xbf16> to vector<16x32xbf16>
    %cst_23 = arith.constant dense<0.000000e+00> : vector<16x32xf32>
    %45 = tpu.matmul %43, %44, %cst_23 {dimension_numbers = #tpu.dot_dimension_numbers<[1], [0], [0], [1], [0, 0, 1, 1], [], []>} : vector<16x16xbf16>, vector<16x32xbf16>, vector<16x32xf32> -> vector<16x32xf32>
    %46 = arith.addf %22, %45 : vector<16x32xf32>
    %47 = vector.extract_strided_slice %15 {offsets = [0, 16], sizes = [16, 16], strides = [1, 1]} : vector<16x96xbf16> to vector<16x16xbf16>
    %48 = vector.shape_cast %47 : vector<16x16xbf16> to vector<2x8x16xbf16>
    %49 = vector.extract_strided_slice %15 {offsets = [0, 48], sizes = [16, 16], strides = [1, 1]} : vector<16x96xbf16> to vector<16x16xbf16>
    %50 = vector.shape_cast %49 : vector<16x16xbf16> to vector<2x8x16xbf16>
    %51 = vector.extract_strided_slice %15 {offsets = [0, 80], sizes = [16, 16], strides = [1, 1]} : vector<16x96xbf16> to vector<16x16xbf16>
    %52 = vector.shape_cast %51 : vector<16x16xbf16> to vector<2x8x16xbf16>
    "tpu.trace_start"() <{level = 10 : i32, message = "bqd,bkd->bqk"}> : () -> ()
    %cst_24 = arith.constant dense<0.000000e+00> : vector<2x8x8xf32>
    %53 = tpu.matmul %48, %50, %cst_24 {dimension_numbers = #tpu.dot_dimension_numbers<[2], [2], [1], [1], [0, 0, 0, 1, 1, 1], [0], [0]>} : vector<2x8x16xbf16>, vector<2x8x16xbf16>, vector<2x8x8xf32> -> vector<2x8x8xf32>
    "tpu.trace_stop"() : () -> ()
    %cst_25 = arith.constant dense<0xFF800000> : vector<2x8xf32>
    %54 = vector.multi_reduction <maximumf>, %53, %cst_25 [2] : vector<2x8x8xf32> to vector<2x8xf32>
    %55 = vector.shape_cast %54 : vector<2x8xf32> to vector<2x8x1xf32>
    %56 = vector.broadcast %55 : vector<2x8x1xf32> to vector<2x8x8xf32>
    %57 = arith.subf %53, %56 : vector<2x8x8xf32>
    %58 = math.exp %57 : vector<2x8x8xf32>
    %cst_26 = arith.constant dense<0.000000e+00> : vector<2x8xf32>
    %59 = vector.multi_reduction <add>, %58, %cst_26 [2] : vector<2x8x8xf32> to vector<2x8xf32>
    %60 = vector.shape_cast %59 : vector<2x8xf32> to vector<2x8x1xf32>
    %61 = tpu.reciprocal %60 {approx = true} : vector<2x8x1xf32> -> vector<2x8x1xf32>
    %62 = vector.broadcast %61 : vector<2x8x1xf32> to vector<2x8x8xf32>
    %63 = arith.mulf %58, %62 : vector<2x8x8xf32>
    %64 = arith.truncf %63 : vector<2x8x8xf32> to vector<2x8x8xbf16>
    "tpu.trace_start"() <{level = 10 : i32, message = "bqk,bkd->bqd"}> : () -> ()
    %cst_27 = arith.constant dense<0.000000e+00> : vector<2x8x16xf32>
    %65 = tpu.matmul %64, %52, %cst_27 {dimension_numbers = #tpu.dot_dimension_numbers<[2], [1], [1], [2], [0, 0, 0, 1, 1, 2], [0], [0]>} : vector<2x8x8xbf16>, vector<2x8x16xbf16>, vector<2x8x16xf32> -> vector<2x8x16xf32>
    "tpu.trace_stop"() : () -> ()
    %66 = vector.shape_cast %65 : vector<2x8x16xf32> to vector<16x16xf32>
    %67 = arith.truncf %66 : vector<16x16xf32> to vector<16x16xbf16>
    %68 = vector.extract_strided_slice %17 {offsets = [16, 0], sizes = [16, 32], strides = [1, 1]} : vector<32x32xbf16> to vector<16x32xbf16>
    %cst_28 = arith.constant dense<0.000000e+00> : vector<16x32xf32>
    %69 = tpu.matmul %67, %68, %cst_28 {dimension_numbers = #tpu.dot_dimension_numbers<[1], [0], [0], [1], [0, 0, 1, 1], [], []>} : vector<16x16xbf16>, vector<16x32xbf16>, vector<16x32xf32> -> vector<16x32xf32>
    %70 = arith.addf %46, %69 : vector<16x32xf32>
    %cst_29 = arith.constant dense<0.000000e+00> : vector<16xf32>
    %71 = vector.multi_reduction <add>, %70, %cst_29 [1] : vector<16x32xf32> to vector<16xf32>
    %72 = vector.shape_cast %71 : vector<16xf32> to vector<16x1xf32>
    %cst_30 = arith.constant 3.200000e+01 : f32
    %73 = vector.broadcast %cst_30 : f32 to vector<16x1xf32>
    %74 = arith.divf %72, %73 : vector<16x1xf32>
    %75 = vector.broadcast %74 : vector<16x1xf32> to vector<16x32xf32>
    %76 = arith.subf %70, %75 : vector<16x32xf32>
    %77 = arith.mulf %76, %76 : vector<16x32xf32>
    %cst_31 = arith.constant dense<0.000000e+00> : vector<16xf32>
    %78 = vector.multi_reduction <add>, %77, %cst_31 [1] : vector<16x32xf32> to vector<16xf32>
    %79 = vector.shape_cast %78 : vector<16xf32> to vector<16x1xf32>
    %cst_32 = arith.constant 3.200000e+01 : f32
    %80 = vector.broadcast %cst_32 : f32 to vector<16x1xf32>
    %81 = arith.divf %79, %80 : vector<16x1xf32>
    %82 = vector.broadcast %74 : vector<16x1xf32> to vector<16x32xf32>
    %83 = arith.subf %70, %82 : vector<16x32xf32>
    %cst_33 = arith.constant 9.99999974E-6 : f32
    %84 = vector.broadcast %cst_33 : f32 to vector<16x1xf32>
    %85 = arith.addf %81, %84 : vector<16x1xf32>
    %86 = math.rsqrt %85 : vector<16x1xf32>
    %87 = vector.broadcast %86 : vector<16x1xf32> to vector<16x32xf32>
    %88 = arith.mulf %83, %87 : vector<16x32xf32>
    %c0_34 = arith.constant 0 : index
    %c0_35 = arith.constant 0 : index
    %c0_36 = arith.constant 0 : index
    %89 = vector.load %arg8[%c0_34, %c0_35, %c0_36] : memref<3x1x32xf32, #tpu.memory_space<vmem>>, vector<1x1x32xf32>
    %90 = vector.shape_cast %89 : vector<1x1x32xf32> to vector<1x32xf32>
    %91 = vector.broadcast %90 : vector<1x32xf32> to vector<16x32xf32>
    %92 = arith.mulf %88, %91 : vector<16x32xf32>
    %c0_37 = arith.constant 0 : index
    %c0_38 = arith.constant 0 : index
    %c0_39 = arith.constant 0 : index
    %93 = vector.load %arg9[%c0_37, %c0_38, %c0_39] : memref<3x1x32xf32, #tpu.memory_space<vmem>>, vector<1x1x32xf32>
    %94 = vector.shape_cast %93 : vector<1x1x32xf32> to vector<1x32xf32>
    %95 = vector.broadcast %94 : vector<1x32xf32> to vector<16x32xf32>
    %96 = arith.addf %92, %95 : vector<16x32xf32>
    %97 = arith.truncf %96 : vector<16x32xf32> to vector<16x32xbf16>
    %98 = arith.extf %97 : vector<16x32xbf16> to vector<16x32xf32>
    %99 = vector.shape_cast %98 : vector<16x32xf32> to vector<2x4x2x32xf32>
    %cst_40 = arith.constant dense<0.000000e+00> : vector<2x4x32xf32>
    %100 = vector.multi_reduction <add>, %99, %cst_40 [2] : vector<2x4x2x32xf32> to vector<2x4x32xf32>
    %cst_41 = arith.constant 2.000000e+00 : f32
    %101 = vector.broadcast %cst_41 : f32 to vector<2x4x32xf32>
    %102 = arith.divf %100, %101 : vector<2x4x32xf32>
    %103 = vector.shape_cast %102 : vector<2x4x32xf32> to vector<8x32xf32>
    %104 = arith.truncf %103 : vector<8x32xf32> to vector<8x32xbf16>
    %c1 = arith.constant 1 : index
    %c0_42 = arith.constant 0 : index
    %c0_43 = arith.constant 0 : index
    %105 = vector.load %arg4[%c1, %c0_42, %c0_43] : memref<3x32x96xbf16, #tpu.memory_space<vmem>>, vector<1x32x96xbf16>
    %106 = vector.shape_cast %105 : vector<1x32x96xbf16> to vector<32x96xbf16>
    %cst_44 = arith.constant dense<0.000000e+00> : vector<8x96xf32>
    %107 = tpu.matmul %104, %106, %cst_44 {dimension_numbers = #tpu.dot_dimension_numbers<[1], [0], [0], [1], [0, 0, 1, 1], [], []>} : vector<8x32xbf16>, vector<32x96xbf16>, vector<8x96xf32> -> vector<8x96xf32>
    %c1_45 = arith.constant 1 : index
    %c0_46 = arith.constant 0 : index
    %c0_47 = arith.constant 0 : index
    %108 = vector.load %arg5[%c1_45, %c0_46, %c0_47] : memref<3x1x96xf32, #tpu.memory_space<vmem>>, vector<1x1x96xf32>
    %109 = vector.shape_cast %108 : vector<1x1x96xf32> to vector<1x96xf32>
    %110 = vector.broadcast %109 : vector<1x96xf32> to vector<8x96xf32>
    %111 = arith.addf %107, %110 : vector<8x96xf32>
    %112 = arith.truncf %111 : vector<8x96xf32> to vector<8x96xbf16>
    %c1_48 = arith.constant 1 : index
    %c0_49 = arith.constant 0 : index
    %c0_50 = arith.constant 0 : index
    %113 = vector.load %arg6[%c1_48, %c0_49, %c0_50] : memref<3x32x32xbf16, #tpu.memory_space<vmem>>, vector<1x32x32xbf16>
    %114 = vector.shape_cast %113 : vector<1x32x32xbf16> to vector<32x32xbf16>
    %115 = arith.extf %104 : vector<8x32xbf16> to vector<8x32xf32>
    %c1_51 = arith.constant 1 : index
    %c0_52 = arith.constant 0 : index
    %c0_53 = arith.constant 0 : index
    %116 = vector.load %arg7[%c1_51, %c0_52, %c0_53] : memref<3x1x32xf32, #tpu.memory_space<vmem>>, vector<1x1x32xf32>
    %117 = vector.shape_cast %116 : vector<1x1x32xf32> to vector<1x32xf32>
    %118 = vector.broadcast %117 : vector<1x32xf32> to vector<8x32xf32>
    %119 = arith.addf %115, %118 : vector<8x32xf32>
    %120 = vector.extract_strided_slice %112 {offsets = [0, 0], sizes = [8, 16], strides = [1, 1]} : vector<8x96xbf16> to vector<8x16xbf16>
    %121 = vector.shape_cast %120 : vector<8x16xbf16> to vector<2x4x16xbf16>
    %122 = vector.extract_strided_slice %112 {offsets = [0, 32], sizes = [8, 16], strides = [1, 1]} : vector<8x96xbf16> to vector<8x16xbf16>
    %123 = vector.shape_cast %122 : vector<8x16xbf16> to vector<2x4x16xbf16>
    %124 = vector.extract_strided_slice %112 {offsets = [0, 64], sizes = [8, 16], strides = [1, 1]} : vector<8x96xbf16> to vector<8x16xbf16>
    %125 = vector.shape_cast %124 : vector<8x16xbf16> to vector<2x4x16xbf16>
    "tpu.trace_start"() <{level = 10 : i32, message = "bqd,bkd->bqk"}> : () -> ()
    %cst_54 = arith.constant dense<0.000000e+00> : vector<2x4x4xf32>
    %126 = tpu.matmul %121, %123, %cst_54 {dimension_numbers = #tpu.dot_dimension_numbers<[2], [2], [1], [1], [0, 0, 0, 1, 1, 1], [0], [0]>} : vector<2x4x16xbf16>, vector<2x4x16xbf16>, vector<2x4x4xf32> -> vector<2x4x4xf32>
    "tpu.trace_stop"() : () -> ()
    %cst_55 = arith.constant dense<0xFF800000> : vector<2x4xf32>
    %127 = vector.multi_reduction <maximumf>, %126, %cst_55 [2] : vector<2x4x4xf32> to vector<2x4xf32>
    %128 = vector.shape_cast %127 : vector<2x4xf32> to vector<2x4x1xf32>
    %129 = vector.broadcast %128 : vector<2x4x1xf32> to vector<2x4x4xf32>
    %130 = arith.subf %126, %129 : vector<2x4x4xf32>
    %131 = math.exp %130 : vector<2x4x4xf32>
    %cst_56 = arith.constant dense<0.000000e+00> : vector<2x4xf32>
    %132 = vector.multi_reduction <add>, %131, %cst_56 [2] : vector<2x4x4xf32> to vector<2x4xf32>
    %133 = vector.shape_cast %132 : vector<2x4xf32> to vector<2x4x1xf32>
    %134 = tpu.reciprocal %133 {approx = true} : vector<2x4x1xf32> -> vector<2x4x1xf32>
    %135 = vector.broadcast %134 : vector<2x4x1xf32> to vector<2x4x4xf32>
    %136 = arith.mulf %131, %135 : vector<2x4x4xf32>
    %137 = arith.truncf %136 : vector<2x4x4xf32> to vector<2x4x4xbf16>
    "tpu.trace_start"() <{level = 10 : i32, message = "bqk,bkd->bqd"}> : () -> ()
    %cst_57 = arith.constant dense<0.000000e+00> : vector<2x4x16xf32>
    %138 = tpu.matmul %137, %125, %cst_57 {dimension_numbers = #tpu.dot_dimension_numbers<[2], [1], [1], [2], [0, 0, 0, 1, 1, 2], [0], [0]>} : vector<2x4x4xbf16>, vector<2x4x16xbf16>, vector<2x4x16xf32> -> vector<2x4x16xf32>
    "tpu.trace_stop"() : () -> ()
    %139 = vector.shape_cast %138 : vector<2x4x16xf32> to vector<8x16xf32>
    %140 = arith.truncf %139 : vector<8x16xf32> to vector<8x16xbf16>
    %141 = vector.extract_strided_slice %114 {offsets = [0, 0], sizes = [16, 32], strides = [1, 1]} : vector<32x32xbf16> to vector<16x32xbf16>
    %cst_58 = arith.constant dense<0.000000e+00> : vector<8x32xf32>
    %142 = tpu.matmul %140, %141, %cst_58 {dimension_numbers = #tpu.dot_dimension_numbers<[1], [0], [0], [1], [0, 0, 1, 1], [], []>} : vector<8x16xbf16>, vector<16x32xbf16>, vector<8x32xf32> -> vector<8x32xf32>
    %143 = arith.addf %119, %142 : vector<8x32xf32>
    %144 = vector.extract_strided_slice %112 {offsets = [0, 16], sizes = [8, 16], strides = [1, 1]} : vector<8x96xbf16> to vector<8x16xbf16>
    %145 = vector.shape_cast %144 : vector<8x16xbf16> to vector<2x4x16xbf16>
    %146 = vector.extract_strided_slice %112 {offsets = [0, 48], sizes = [8, 16], strides = [1, 1]} : vector<8x96xbf16> to vector<8x16xbf16>
    %147 = vector.shape_cast %146 : vector<8x16xbf16> to vector<2x4x16xbf16>
    %148 = vector.extract_strided_slice %112 {offsets = [0, 80], sizes = [8, 16], strides = [1, 1]} : vector<8x96xbf16> to vector<8x16xbf16>
    %149 = vector.shape_cast %148 : vector<8x16xbf16> to vector<2x4x16xbf16>
    "tpu.trace_start"() <{level = 10 : i32, message = "bqd,bkd->bqk"}> : () -> ()
    %cst_59 = arith.constant dense<0.000000e+00> : vector<2x4x4xf32>
    %150 = tpu.matmul %145, %147, %cst_59 {dimension_numbers = #tpu.dot_dimension_numbers<[2], [2], [1], [1], [0, 0, 0, 1, 1, 1], [0], [0]>} : vector<2x4x16xbf16>, vector<2x4x16xbf16>, vector<2x4x4xf32> -> vector<2x4x4xf32>
    "tpu.trace_stop"() : () -> ()
    %cst_60 = arith.constant dense<0xFF800000> : vector<2x4xf32>
    %151 = vector.multi_reduction <maximumf>, %150, %cst_60 [2] : vector<2x4x4xf32> to vector<2x4xf32>
    %152 = vector.shape_cast %151 : vector<2x4xf32> to vector<2x4x1xf32>
    %153 = vector.broadcast %152 : vector<2x4x1xf32> to vector<2x4x4xf32>
    %154 = arith.subf %150, %153 : vector<2x4x4xf32>
    %155 = math.exp %154 : vector<2x4x4xf32>
    %cst_61 = arith.constant dense<0.000000e+00> : vector<2x4xf32>
    %156 = vector.multi_reduction <add>, %155, %cst_61 [2] : vector<2x4x4xf32> to vector<2x4xf32>
    %157 = vector.shape_cast %156 : vector<2x4xf32> to vector<2x4x1xf32>
    %158 = tpu.reciprocal %157 {approx = true} : vector<2x4x1xf32> -> vector<2x4x1xf32>
    %159 = vector.broadcast %158 : vector<2x4x1xf32> to vector<2x4x4xf32>
    %160 = arith.mulf %155, %159 : vector<2x4x4xf32>
    %161 = arith.truncf %160 : vector<2x4x4xf32> to vector<2x4x4xbf16>
    "tpu.trace_start"() <{level = 10 : i32, message = "bqk,bkd->bqd"}> : () -> ()
    %cst_62 = arith.constant dense<0.000000e+00> : vector<2x4x16xf32>
    %162 = tpu.matmul %161, %149, %cst_62 {dimension_numbers = #tpu.dot_dimension_numbers<[2], [1], [1], [2], [0, 0, 0, 1, 1, 2], [0], [0]>} : vector<2x4x4xbf16>, vector<2x4x16xbf16>, vector<2x4x16xf32> -> vector<2x4x16xf32>
    "tpu.trace_stop"() : () -> ()
    %163 = vector.shape_cast %162 : vector<2x4x16xf32> to vector<8x16xf32>
    %164 = arith.truncf %163 : vector<8x16xf32> to vector<8x16xbf16>
    %165 = vector.extract_strided_slice %114 {offsets = [16, 0], sizes = [16, 32], strides = [1, 1]} : vector<32x32xbf16> to vector<16x32xbf16>
    %cst_63 = arith.constant dense<0.000000e+00> : vector<8x32xf32>
    %166 = tpu.matmul %164, %165, %cst_63 {dimension_numbers = #tpu.dot_dimension_numbers<[1], [0], [0], [1], [0, 0, 1, 1], [], []>} : vector<8x16xbf16>, vector<16x32xbf16>, vector<8x32xf32> -> vector<8x32xf32>
    %167 = arith.addf %143, %166 : vector<8x32xf32>
    %cst_64 = arith.constant dense<0.000000e+00> : vector<8xf32>
    %168 = vector.multi_reduction <add>, %167, %cst_64 [1] : vector<8x32xf32> to vector<8xf32>
    %169 = vector.shape_cast %168 : vector<8xf32> to vector<8x1xf32>
    %cst_65 = arith.constant 3.200000e+01 : f32
    %170 = vector.broadcast %cst_65 : f32 to vector<8x1xf32>
    %171 = arith.divf %169, %170 : vector<8x1xf32>
    %172 = vector.broadcast %171 : vector<8x1xf32> to vector<8x32xf32>
    %173 = arith.subf %167, %172 : vector<8x32xf32>
    %174 = arith.mulf %173, %173 : vector<8x32xf32>
    %cst_66 = arith.constant dense<0.000000e+00> : vector<8xf32>
    %175 = vector.multi_reduction <add>, %174, %cst_66 [1] : vector<8x32xf32> to vector<8xf32>
    %176 = vector.shape_cast %175 : vector<8xf32> to vector<8x1xf32>
    %cst_67 = arith.constant 3.200000e+01 : f32
    %177 = vector.broadcast %cst_67 : f32 to vector<8x1xf32>
    %178 = arith.divf %176, %177 : vector<8x1xf32>
    %179 = vector.broadcast %171 : vector<8x1xf32> to vector<8x32xf32>
    %180 = arith.subf %167, %179 : vector<8x32xf32>
    %cst_68 = arith.constant 9.99999974E-6 : f32
    %181 = vector.broadcast %cst_68 : f32 to vector<8x1xf32>
    %182 = arith.addf %178, %181 : vector<8x1xf32>
    %183 = math.rsqrt %182 : vector<8x1xf32>
    %184 = vector.broadcast %183 : vector<8x1xf32> to vector<8x32xf32>
    %185 = arith.mulf %180, %184 : vector<8x32xf32>
    %c1_69 = arith.constant 1 : index
    %c0_70 = arith.constant 0 : index
    %c0_71 = arith.constant 0 : index
    %186 = vector.load %arg8[%c1_69, %c0_70, %c0_71] : memref<3x1x32xf32, #tpu.memory_space<vmem>>, vector<1x1x32xf32>
    %187 = vector.shape_cast %186 : vector<1x1x32xf32> to vector<1x32xf32>
    %188 = vector.broadcast %187 : vector<1x32xf32> to vector<8x32xf32>
    %189 = arith.mulf %185, %188 : vector<8x32xf32>
    %c1_72 = arith.constant 1 : index
    %c0_73 = arith.constant 0 : index
    %c0_74 = arith.constant 0 : index
    %190 = vector.load %arg9[%c1_72, %c0_73, %c0_74] : memref<3x1x32xf32, #tpu.memory_space<vmem>>, vector<1x1x32xf32>
    %191 = vector.shape_cast %190 : vector<1x1x32xf32> to vector<1x32xf32>
    %192 = vector.broadcast %191 : vector<1x32xf32> to vector<8x32xf32>
    %193 = arith.addf %189, %192 : vector<8x32xf32>
    %194 = arith.truncf %193 : vector<8x32xf32> to vector<8x32xbf16>
    %195 = arith.extf %194 : vector<8x32xbf16> to vector<8x32xf32>
    %196 = vector.shape_cast %195 : vector<8x32xf32> to vector<2x2x2x32xf32>
    %cst_75 = arith.constant dense<0.000000e+00> : vector<2x2x32xf32>
    %197 = vector.multi_reduction <add>, %196, %cst_75 [2] : vector<2x2x2x32xf32> to vector<2x2x32xf32>
    %cst_76 = arith.constant 2.000000e+00 : f32
    %198 = vector.broadcast %cst_76 : f32 to vector<2x2x32xf32>
    %199 = arith.divf %197, %198 : vector<2x2x32xf32>
    %200 = vector.shape_cast %199 : vector<2x2x32xf32> to vector<4x32xf32>
    %201 = arith.truncf %200 : vector<4x32xf32> to vector<4x32xbf16>
    %cst_77 = arith.constant 5.000000e-01 : f32
    %202 = vector.broadcast %cst_77 : f32 to vector<2x1x32xf32>
    %c0_78 = arith.constant 0 : index
    %c0_79 = arith.constant 0 : index
    %c0_80 = arith.constant 0 : index
    %203 = vector.load %arg13[%c0_78, %c0_79, %c0_80] : memref<2x3x32xf32, #tpu.memory_space<vmem>>, vector<2x1x32xf32>
    tpu.vector_store %arg13[%c0_78, %c0_79, %c0_80], %202 {strides = array<i32>} : memref<2x3x32xf32, #tpu.memory_space<vmem>>, vector<2x1x32xf32>,
    %204 = arith.extf %201 : vector<4x32xbf16> to vector<4x32xf32>
    %205 = vector.shape_cast %204 : vector<4x32xf32> to vector<2x2x32xf32>
    %c0_81 = arith.constant 0 : index
    %c1_82 = arith.constant 1 : index
    %c0_83 = arith.constant 0 : index
    %206 = vector.load %arg13[%c0_81, %c1_82, %c0_83] : memref<2x3x32xf32, #tpu.memory_space<vmem>>, vector<2x2x32xf32>
    tpu.vector_store %arg13[%c0_81, %c1_82, %c0_83], %205 {strides = array<i32>} : memref<2x3x32xf32, #tpu.memory_space<vmem>>, vector<2x2x32xf32>,
    %c0_84 = arith.constant 0 : index
    %c0_85 = arith.constant 0 : index
    %c0_86 = arith.constant 0 : index
    %207 = vector.load %arg13[%c0_84, %c0_85, %c0_86] : memref<2x3x32xf32, #tpu.memory_space<vmem>>, vector<2x3x32xf32>
    %208 = arith.truncf %207 : vector<2x3x32xf32> to vector<2x3x32xbf16>
    %209 = vector.shape_cast %208 : vector<2x3x32xbf16> to vector<6x32xbf16>
    %c2 = arith.constant 2 : index
    %c0_87 = arith.constant 0 : index
    %c0_88 = arith.constant 0 : index
    %210 = vector.load %arg4[%c2, %c0_87, %c0_88] : memref<3x32x96xbf16, #tpu.memory_space<vmem>>, vector<1x32x96xbf16>
    %211 = vector.shape_cast %210 : vector<1x32x96xbf16> to vector<32x96xbf16>
    %cst_89 = arith.constant dense<0.000000e+00> : vector<6x96xf32>
    %212 = tpu.matmul %209, %211, %cst_89 {dimension_numbers = #tpu.dot_dimension_numbers<[1], [0], [0], [1], [0, 0, 1, 1], [], []>} : vector<6x32xbf16>, vector<32x96xbf16>, vector<6x96xf32> -> vector<6x96xf32>
    %c2_90 = arith.constant 2 : index
    %c0_91 = arith.constant 0 : index
    %c0_92 = arith.constant 0 : index
    %213 = vector.load %arg5[%c2_90, %c0_91, %c0_92] : memref<3x1x96xf32, #tpu.memory_space<vmem>>, vector<1x1x96xf32>
    %214 = vector.shape_cast %213 : vector<1x1x96xf32> to vector<1x96xf32>
    %215 = vector.broadcast %214 : vector<1x96xf32> to vector<6x96xf32>
    %216 = arith.addf %212, %215 : vector<6x96xf32>
    %217 = arith.truncf %216 : vector<6x96xf32> to vector<6x96xbf16>
    %c2_93 = arith.constant 2 : index
    %c0_94 = arith.constant 0 : index
    %c0_95 = arith.constant 0 : index
    %218 = vector.load %arg6[%c2_93, %c0_94, %c0_95] : memref<3x32x32xbf16, #tpu.memory_space<vmem>>, vector<1x32x32xbf16>
    %219 = vector.shape_cast %218 : vector<1x32x32xbf16> to vector<32x32xbf16>
    %220 = arith.extf %209 : vector<6x32xbf16> to vector<6x32xf32>
    %c2_96 = arith.constant 2 : index
    %c0_97 = arith.constant 0 : index
    %c0_98 = arith.constant 0 : index
    %221 = vector.load %arg7[%c2_96, %c0_97, %c0_98] : memref<3x1x32xf32, #tpu.memory_space<vmem>>, vector<1x1x32xf32>
    %222 = vector.shape_cast %221 : vector<1x1x32xf32> to vector<1x32xf32>
    %223 = vector.broadcast %222 : vector<1x32xf32> to vector<6x32xf32>
    %224 = arith.addf %220, %223 : vector<6x32xf32>
    %225 = vector.extract_strided_slice %217 {offsets = [0, 0], sizes = [6, 16], strides = [1, 1]} : vector<6x96xbf16> to vector<6x16xbf16>
    %226 = vector.shape_cast %225 : vector<6x16xbf16> to vector<2x3x16xbf16>
    %227 = vector.extract_strided_slice %217 {offsets = [0, 32], sizes = [6, 16], strides = [1, 1]} : vector<6x96xbf16> to vector<6x16xbf16>
    %228 = vector.shape_cast %227 : vector<6x16xbf16> to vector<2x3x16xbf16>
    %229 = vector.extract_strided_slice %217 {offsets = [0, 64], sizes = [6, 16], strides = [1, 1]} : vector<6x96xbf16> to vector<6x16xbf16>
    %230 = vector.shape_cast %229 : vector<6x16xbf16> to vector<2x3x16xbf16>
    "tpu.trace_start"() <{level = 10 : i32, message = "bqd,bkd->bqk"}> : () -> ()
    %cst_99 = arith.constant dense<0.000000e+00> : vector<2x3x3xf32>
    %231 = tpu.matmul %226, %228, %cst_99 {dimension_numbers = #tpu.dot_dimension_numbers<[2], [2], [1], [1], [0, 0, 0, 1, 1, 1], [0], [0]>} : vector<2x3x16xbf16>, vector<2x3x16xbf16>, vector<2x3x3xf32> -> vector<2x3x3xf32>
    "tpu.trace_stop"() : () -> ()
    %cst_100 = arith.constant dense<0xFF800000> : vector<2x3xf32>
    %232 = vector.multi_reduction <maximumf>, %231, %cst_100 [2] : vector<2x3x3xf32> to vector<2x3xf32>
    %233 = vector.shape_cast %232 : vector<2x3xf32> to vector<2x3x1xf32>
    %234 = vector.broadcast %233 : vector<2x3x1xf32> to vector<2x3x3xf32>
    %235 = arith.subf %231, %234 : vector<2x3x3xf32>
    %236 = math.exp %235 : vector<2x3x3xf32>
    %cst_101 = arith.constant dense<0.000000e+00> : vector<2x3xf32>
    %237 = vector.multi_reduction <add>, %236, %cst_101 [2] : vector<2x3x3xf32> to vector<2x3xf32>
    %238 = vector.shape_cast %237 : vector<2x3xf32> to vector<2x3x1xf32>
    %239 = tpu.reciprocal %238 {approx = true} : vector<2x3x1xf32> -> vector<2x3x1xf32>
    %240 = vector.broadcast %239 : vector<2x3x1xf32> to vector<2x3x3xf32>
    %241 = arith.mulf %236, %240 : vector<2x3x3xf32>
    %242 = arith.truncf %241 : vector<2x3x3xf32> to vector<2x3x3xbf16>
    "tpu.trace_start"() <{level = 10 : i32, message = "bqk,bkd->bqd"}> : () -> ()
    %cst_102 = arith.constant dense<0.000000e+00> : vector<2x3x16xf32>
    %243 = tpu.matmul %242, %230, %cst_102 {dimension_numbers = #tpu.dot_dimension_numbers<[2], [1], [1], [2], [0, 0, 0, 1, 1, 2], [0], [0]>} : vector<2x3x3xbf16>, vector<2x3x16xbf16>, vector<2x3x16xf32> -> vector<2x3x16xf32>
    "tpu.trace_stop"() : () -> ()
    %244 = vector.shape_cast %243 : vector<2x3x16xf32> to vector<6x16xf32>
    %245 = arith.truncf %244 : vector<6x16xf32> to vector<6x16xbf16>
    %246 = vector.extract_strided_slice %219 {offsets = [0, 0], sizes = [16, 32], strides = [1, 1]} : vector<32x32xbf16> to vector<16x32xbf16>
    %cst_103 = arith.constant dense<0.000000e+00> : vector<6x32xf32>
    %247 = tpu.matmul %245, %246, %cst_103 {dimension_numbers = #tpu.dot_dimension_numbers<[1], [0], [0], [1], [0, 0, 1, 1], [], []>} : vector<6x16xbf16>, vector<16x32xbf16>, vector<6x32xf32> -> vector<6x32xf32>
    %248 = arith.addf %224, %247 : vector<6x32xf32>
    %249 = vector.extract_strided_slice %217 {offsets = [0, 16], sizes = [6, 16], strides = [1, 1]} : vector<6x96xbf16> to vector<6x16xbf16>
    %250 = vector.shape_cast %249 : vector<6x16xbf16> to vector<2x3x16xbf16>
    %251 = vector.extract_strided_slice %217 {offsets = [0, 48], sizes = [6, 16], strides = [1, 1]} : vector<6x96xbf16> to vector<6x16xbf16>
    %252 = vector.shape_cast %251 : vector<6x16xbf16> to vector<2x3x16xbf16>
    %253 = vector.extract_strided_slice %217 {offsets = [0, 80], sizes = [6, 16], strides = [1, 1]} : vector<6x96xbf16> to vector<6x16xbf16>
    %254 = vector.shape_cast %253 : vector<6x16xbf16> to vector<2x3x16xbf16>
    "tpu.trace_start"() <{level = 10 : i32, message = "bqd,bkd->bqk"}> : () -> ()
    %cst_104 = arith.constant dense<0.000000e+00> : vector<2x3x3xf32>
    %255 = tpu.matmul %250, %252, %cst_104 {dimension_numbers = #tpu.dot_dimension_numbers<[2], [2], [1], [1], [0, 0, 0, 1, 1, 1], [0], [0]>} : vector<2x3x16xbf16>, vector<2x3x16xbf16>, vector<2x3x3xf32> -> vector<2x3x3xf32>
    "tpu.trace_stop"() : () -> ()
    %cst_105 = arith.constant dense<0xFF800000> : vector<2x3xf32>
    %256 = vector.multi_reduction <maximumf>, %255, %cst_105 [2] : vector<2x3x3xf32> to vector<2x3xf32>
    %257 = vector.shape_cast %256 : vector<2x3xf32> to vector<2x3x1xf32>
    %258 = vector.broadcast %257 : vector<2x3x1xf32> to vector<2x3x3xf32>
    %259 = arith.subf %255, %258 : vector<2x3x3xf32>
    %260 = math.exp %259 : vector<2x3x3xf32>
    %cst_106 = arith.constant dense<0.000000e+00> : vector<2x3xf32>
    %261 = vector.multi_reduction <add>, %260, %cst_106 [2] : vector<2x3x3xf32> to vector<2x3xf32>
    %262 = vector.shape_cast %261 : vector<2x3xf32> to vector<2x3x1xf32>
    %263 = tpu.reciprocal %262 {approx = true} : vector<2x3x1xf32> -> vector<2x3x1xf32>
    %264 = vector.broadcast %263 : vector<2x3x1xf32> to vector<2x3x3xf32>
    %265 = arith.mulf %260, %264 : vector<2x3x3xf32>
    %266 = arith.truncf %265 : vector<2x3x3xf32> to vector<2x3x3xbf16>
    "tpu.trace_start"() <{level = 10 : i32, message = "bqk,bkd->bqd"}> : () -> ()
    %cst_107 = arith.constant dense<0.000000e+00> : vector<2x3x16xf32>
    %267 = tpu.matmul %266, %254, %cst_107 {dimension_numbers = #tpu.dot_dimension_numbers<[2], [1], [1], [2], [0, 0, 0, 1, 1, 2], [0], [0]>} : vector<2x3x3xbf16>, vector<2x3x16xbf16>, vector<2x3x16xf32> -> vector<2x3x16xf32>
    "tpu.trace_stop"() : () -> ()
    %268 = vector.shape_cast %267 : vector<2x3x16xf32> to vector<6x16xf32>
    %269 = arith.truncf %268 : vector<6x16xf32> to vector<6x16xbf16>
    %270 = vector.extract_strided_slice %219 {offsets = [16, 0], sizes = [16, 32], strides = [1, 1]} : vector<32x32xbf16> to vector<16x32xbf16>
    %cst_108 = arith.constant dense<0.000000e+00> : vector<6x32xf32>
    %271 = tpu.matmul %269, %270, %cst_108 {dimension_numbers = #tpu.dot_dimension_numbers<[1], [0], [0], [1], [0, 0, 1, 1], [], []>} : vector<6x16xbf16>, vector<16x32xbf16>, vector<6x32xf32> -> vector<6x32xf32>
    %272 = arith.addf %248, %271 : vector<6x32xf32>
    %cst_109 = arith.constant dense<0.000000e+00> : vector<6xf32>
    %273 = vector.multi_reduction <add>, %272, %cst_109 [1] : vector<6x32xf32> to vector<6xf32>
    %274 = vector.shape_cast %273 : vector<6xf32> to vector<6x1xf32>
    %cst_110 = arith.constant 3.200000e+01 : f32
    %275 = vector.broadcast %cst_110 : f32 to vector<6x1xf32>
    %276 = arith.divf %274, %275 : vector<6x1xf32>
    %277 = vector.broadcast %276 : vector<6x1xf32> to vector<6x32xf32>
    %278 = arith.subf %272, %277 : vector<6x32xf32>
    %279 = arith.mulf %278, %278 : vector<6x32xf32>
    %cst_111 = arith.constant dense<0.000000e+00> : vector<6xf32>
    %280 = vector.multi_reduction <add>, %279, %cst_111 [1] : vector<6x32xf32> to vector<6xf32>
    %281 = vector.shape_cast %280 : vector<6xf32> to vector<6x1xf32>
    %cst_112 = arith.constant 3.200000e+01 : f32
    %282 = vector.broadcast %cst_112 : f32 to vector<6x1xf32>
    %283 = arith.divf %281, %282 : vector<6x1xf32>
    %284 = vector.broadcast %276 : vector<6x1xf32> to vector<6x32xf32>
    %285 = arith.subf %272, %284 : vector<6x32xf32>
    %cst_113 = arith.constant 9.99999974E-6 : f32
    %286 = vector.broadcast %cst_113 : f32 to vector<6x1xf32>
    %287 = arith.addf %283, %286 : vector<6x1xf32>
    %288 = math.rsqrt %287 : vector<6x1xf32>
    %289 = vector.broadcast %288 : vector<6x1xf32> to vector<6x32xf32>
    %290 = arith.mulf %285, %289 : vector<6x32xf32>
    %c2_114 = arith.constant 2 : index
    %c0_115 = arith.constant 0 : index
    %c0_116 = arith.constant 0 : index
    %291 = vector.load %arg8[%c2_114, %c0_115, %c0_116] : memref<3x1x32xf32, #tpu.memory_space<vmem>>, vector<1x1x32xf32>
    %292 = vector.shape_cast %291 : vector<1x1x32xf32> to vector<1x32xf32>
    %293 = vector.broadcast %292 : vector<1x32xf32> to vector<6x32xf32>
    %294 = arith.mulf %290, %293 : vector<6x32xf32>
    %c2_117 = arith.constant 2 : index
    %c0_118 = arith.constant 0 : index
    %c0_119 = arith.constant 0 : index
    %295 = vector.load %arg9[%c2_117, %c0_118, %c0_119] : memref<3x1x32xf32, #tpu.memory_space<vmem>>, vector<1x1x32xf32>
    %296 = vector.shape_cast %295 : vector<1x1x32xf32> to vector<1x32xf32>
    %297 = vector.broadcast %296 : vector<1x32xf32> to vector<6x32xf32>
    %298 = arith.addf %294, %297 : vector<6x32xf32>
    %299 = arith.truncf %298 : vector<6x32xf32> to vector<6x32xbf16>
    %300 = vector.shape_cast %299 : vector<6x32xbf16> to vector<2x3x32xbf16>
    %301 = vector.extract_strided_slice %300 {offsets = [0, 0, 0], sizes = [2, 1, 32], strides = [1, 1, 1]} : vector<2x3x32xbf16> to vector<2x1x32xbf16>
    %302 = vector.shape_cast %301 : vector<2x1x32xbf16> to vector<2x32xbf16>
    %303 = arith.extf %302 : vector<2x32xbf16> to vector<2x32xf32>
    %c0_120 = arith.constant 0 : index
    %c0_121 = arith.constant 0 : index
    %304 = vector.load %arg10[%c0_120, %c0_121] : memref<1x32xf32, #tpu.memory_space<vmem>>, vector<1x32xf32>
    %305 = vector.broadcast %304 : vector<1x32xf32> to vector<2x32xf32>
    %306 = arith.mulf %303, %305 : vector<2x32xf32>
    %cst_122 = arith.constant dense<0.000000e+00> : vector<2xf32>
    %307 = vector.multi_reduction <add>, %306, %cst_122 [1] : vector<2x32xf32> to vector<2xf32>
    %308 = vector.shape_cast %307 : vector<2xf32> to vector<1x2xf32>
    %c0_123 = arith.constant 0 : index
    %c0_124 = arith.constant 0 : index
    %309 = vector.load %arg11[%c0_123, %c0_124] : memref<1x1xf32, #tpu.memory_space<vmem>>, vector<1x1xf32>
    %310 = vector.broadcast %309 : vector<1x1xf32> to vector<1x2xf32>
    %311 = arith.addf %308, %310 : vector<1x2xf32>
    %312 = arith.negf %311 : vector<1x2xf32>
    %313 = math.exp %312 : vector<1x2xf32>
    %cst_125 = arith.constant 1.000000e+00 : f32
    %314 = vector.broadcast %cst_125 : f32 to vector<1x2xf32>
    %315 = arith.addf %314, %313 : vector<1x2xf32>
    %316 = arith.divf %314, %315 : vector<1x2xf32>
    %c0_126 = arith.constant 0 : index
    %c0_127 = arith.constant 0 : index
    %c0_128 = arith.constant 0 : index
    %317 = vector.load %arg12[%c0_126, %c0_127, %c0_128] : memref<1x1x2xf32, #tpu.memory_space<vmem>>, vector<1x1x2xf32>
    %318 = vector.shape_cast %317 : vector<1x1x2xf32> to vector<1x2xf32>
    %319 = vector.shape_cast %316 : vector<1x2xf32> to vector<1x1x2xf32>
    tpu.vector_store %arg12[%c0_126, %c0_127, %c0_128], %319 {strides = array<i32>} : memref<1x1x2xf32, #tpu.memory_space<vmem>>, vector<1x1x2xf32>,
    return
  }
  func.func @transform_0(%arg0: i32) -> (i32, i32, i32) {
    %c0_i32 = arith.constant 0 : i32
    %c0_i32_0 = arith.constant 0 : i32
    %c0_i32_1 = arith.constant 0 : i32
    return %arg0, %c0_i32, %c0_i32_0 : i32, i32, i32
  }
  func.func @transform_1(%arg0: i32) -> (i32, i32) {
    %c0_i32 = arith.constant 0 : i32
    %c0_i32_0 = arith.constant 0 : i32
    %c0_i32_1 = arith.constant 0 : i32
    return %c0_i32, %c0_i32_0 : i32, i32
  }
  func.func @transform_2(%arg0: i32) -> (i32, i32) {
    %c0_i32 = arith.constant 0 : i32
    %c0_i32_0 = arith.constant 0 : i32
    %c0_i32_1 = arith.constant 0 : i32
    return %c0_i32, %c0_i32_0 : i32, i32
  }
  func.func @transform_3(%arg0: i32) -> (i32, i32, i32) {
    %c0_i32 = arith.constant 0 : i32
    %c0_i32_0 = arith.constant 0 : i32
    %c0_i32_1 = arith.constant 0 : i32
    %c0_i32_2 = arith.constant 0 : i32
    return %c0_i32, %c0_i32_0, %c0_i32_1 : i32, i32, i32
  }
  func.func @transform_4(%arg0: i32) -> (i32, i32, i32) {
    %c0_i32 = arith.constant 0 : i32
    %c0_i32_0 = arith.constant 0 : i32
    %c0_i32_1 = arith.constant 0 : i32
    %c0_i32_2 = arith.constant 0 : i32
    return %c0_i32, %c0_i32_0, %c0_i32_1 : i32, i32, i32
  }
  func.func @transform_5(%arg0: i32) -> (i32, i32, i32) {
    %c0_i32 = arith.constant 0 : i32
    %c0_i32_0 = arith.constant 0 : i32
    %c0_i32_1 = arith.constant 0 : i32
    %c0_i32_2 = arith.constant 0 : i32
    return %c0_i32, %c0_i32_0, %c0_i32_1 : i32, i32, i32
  }
  func.func @transform_6(%arg0: i32) -> (i32, i32, i32) {
    %c0_i32 = arith.constant 0 : i32
    %c0_i32_0 = arith.constant 0 : i32
    %c0_i32_1 = arith.constant 0 : i32
    %c0_i32_2 = arith.constant 0 : i32
    return %c0_i32, %c0_i32_0, %c0_i32_1 : i32, i32, i32
  }
  func.func @transform_7(%arg0: i32) -> (i32, i32, i32) {
    %c0_i32 = arith.constant 0 : i32
    %c0_i32_0 = arith.constant 0 : i32
    %c0_i32_1 = arith.constant 0 : i32
    %c0_i32_2 = arith.constant 0 : i32
    return %c0_i32, %c0_i32_0, %c0_i32_1 : i32, i32, i32
  }
  func.func @transform_8(%arg0: i32) -> (i32, i32, i32) {
    %c0_i32 = arith.constant 0 : i32
    %c0_i32_0 = arith.constant 0 : i32
    %c0_i32_1 = arith.constant 0 : i32
    %c0_i32_2 = arith.constant 0 : i32
    return %c0_i32, %c0_i32_0, %c0_i32_1 : i32, i32, i32
  }
  func.func @transform_9(%arg0: i32) -> (i32, i32) {
    %c0_i32 = arith.constant 0 : i32
    %c0_i32_0 = arith.constant 0 : i32
    %c0_i32_1 = arith.constant 0 : i32
    return %c0_i32, %c0_i32_0 : i32, i32
  }
  func.func @transform_10(%arg0: i32) -> (i32, i32) {
    %c0_i32 = arith.constant 0 : i32
    %c0_i32_0 = arith.constant 0 : i32
    %c0_i32_1 = arith.constant 0 : i32
    return %c0_i32, %c0_i32_0 : i32, i32
  }
  func.func @transform_11(%arg0: i32) -> (i32, i32, i32) {
    %c0_i32 = arith.constant 0 : i32
    %c0_i32_0 = arith.constant 0 : i32
    %c0_i32_1 = arith.constant 0 : i32
    return %arg0, %c0_i32, %c0_i32_0 : i32, i32, i32
  }
}

</mosaic_0001>

<llo_original>
// kernel: _disc_forward.1
$region0: #{_disc_forward.1}
  #allocation0 [shape = 'u32[]', space=smem, size = 0x4, offset = 0x4, fixed_abs, tag = 'smem constant byte address 0x4 - core index']
  #allocation1 [shape = 'u32[144,128]{1,0:T(1,128)}', space=vmem, size = 0x12000, scoped, tag = 'internal scratch']
  #allocation2 [shape = 'f32[2,3,32]{2,1,0:T(4,128)}', space=vmem, size = 0x1000, scoped, tag = 'scratch operand']
  #allocation3 [shape = 'f32[1,1]{1,0:T(1,128)S(1)}', space=vmem, size = 0x200, scoped, tag = 'scoped memory for _disc_forward.1']
  %s0 = inlined_call_operand.vmem [shape: bf16[4,8,16], index: 0, kind: input, shape index: {}]
  %s1 = inlined_call_operand.vmem [shape: bf16[16,32], index: 1, kind: input, shape index: {}]
  %s2 = inlined_call_operand.vmem [shape: f32[1,32], index: 2, kind: input, shape index: {}]
  %s3 = inlined_call_operand.vmem [shape: bf16[3,32,96], index: 3, kind: input, shape index: {}]
  %s4 = inlined_call_operand.hbm [shape: f32[3,1,96], index: 4, kind: input, shape index: {}]
  %s5 = inlined_call_operand.hbm [shape: bf16[3,32,32], index: 5, kind: input, shape index: {}]
  %s6 = inlined_call_operand.hbm [shape: f32[3,1,32], index: 6, kind: input, shape index: {}]
  %s7 = inlined_call_operand.hbm [shape: f32[3,1,32], index: 7, kind: input, shape index: {}]
  %s8 = inlined_call_operand.hbm [shape: f32[3,1,32], index: 8, kind: input, shape index: {}]
  %s9 = inlined_call_operand.hbm [shape: f32[1,32], index: 9, kind: input, shape index: {}]
  %s10 = inlined_call_operand.<no memory space> [shape: f32[1,1], index: 10, kind: input, shape index: {}]
  %s11 = inlined_call_operand.vmem [shape: f32[2,1,2], index: 11, kind: output, shape index: {}]
  %s12 = sld [smem:[#allocation0]]
  $region101: #{_disc_forward.1} parent=0
    _
  %s14 = ssub.s32 1, %s12
  %s15 = scalar_select 0, %s14, %s12
  %v16 = vstv %s10
  %17 = vst [vmem:[#allocation3] sm:$0x1] %v16
  $region1: #{_disc_forward.1} parent=0
    #allocation4 [shape = 'u8[1536]{0}', space=vmem, size = 0x800, scoped, tag = 'input window, operand 4, single buffered']
    #allocation5 [shape = 's32[2]{0}', space=sflag, size = 0x8, scoped, tag = 'scoped memory for _disc_forward.1']
    #allocation6 [shape = 'u8[24576]{0}', space=vmem, size = 0x6000, scoped, tag = 'input window, operand 5, single buffered']
    #allocation7 [shape = 's32[1]{0}', space=sflag, size = 0x4, scoped, tag = 'scoped memory for _disc_forward.1']
    #allocation8 [shape = 'u8[1536]{0}', space=vmem, size = 0x800, scoped, tag = 'input window, operand 6, single buffered']
    #allocation9 [shape = 'u8[1536]{0}', space=vmem, size = 0x800, scoped, tag = 'input window, operand 7, single buffered']
    #allocation10 [shape = 's32[1]{0}', space=sflag, size = 0x4, scoped, tag = 'scoped memory for _disc_forward.1']
    #allocation11 [shape = 'u8[1536]{0}', space=vmem, size = 0x800, scoped, tag = 'input window, operand 8, single buffered']
    #allocation12 [shape = 'u8[512]{0}', space=vmem, size = 0x400, scoped, tag = 'input window, operand 9, single buffered']
    #allocation13 [shape = 's32[1]{0}', space=sflag, size = 0x4, scoped, tag = 'scoped memory for _disc_forward.1']
    %18 = vsyncpa [#allocation5], 0
    %19 = vsyncpa [#allocation7], 0
    %20 = vsyncpa [#allocation10], 0
    %21 = vsyncpa [#allocation13], 0
    loop: start=0, step=1, limit=4
    $region2: #{_disc_forward.1} parent=1 // loop_pre_header
      _
    $region3: #{_disc_forward.1} parent=1 // loop_header
      %s23 = sphi 0, %s27
      %p24 = scmp.ge.s32.totalorder %s23, 4
      %s33 = sphi 0, %s35
      %s36 = sphi 0, %s33
      %s37 = sphi 0, %s36
      %s53 = sphi 0, %s37
      %s57 = sphi 0, %s57
      %s59 = sphi 0, %s57
      %s60 = sphi 0, %s59
      %s74 = sphi 0, %s60
      %s78 = sphi 0, %s78
      %s80 = sphi 0, %s78
      %s81 = sphi 0, %s80
      %s95 = sphi 0, %s81
      %s99 = sphi 0, %s99
      %s101 = sphi 0, %s99
      %s102 = sphi 0, %s101
      %s116 = sphi 0, %s102
      %s120 = sphi 0, %s120
      %s122 = sphi 0, %s120
      %s123 = sphi 0, %s122
      %s137 = sphi 0, %s123
      %s141 = sphi 0, %s141
      %s143 = sphi 0, %s141
      %s144 = sphi 0, %s143
      %s158 = sphi 0, %s144
      %s162 = sphi 0, %s162
      %s164 = sphi 0, %s162
      %s165 = sphi 0, %s164
      %s179 = sphi 0, %s165
      %s183 = sphi 0, %s183
      %s185 = sphi 0, %s183
      %s186 = sphi 0, %s185
      %s200 = sphi 0, %s186
      %s204 = sphi 0, %s204
      %s206 = sphi 0, %s204
      %s207 = sphi 0, %s206
      %s221 = sphi 0, %s207
      %s225 = sphi 0, %s225
      %s227 = sphi 0, %s225
      %s228 = sphi 0, %s227
      %s242 = sphi 0, %s228
      %s246 = sphi 0, %s246
      %s248 = sphi 0, %s246
      %s249 = sphi 0, %s248
      %s263 = sphi 0, %s249
      %s269 = sphi 0, %s271
      %s272 = sphi 0, %s269
      %s273 = sphi 0, %s272
      %s289 = sphi 0, %s273
    $region4: #{_disc_forward.1} parent=1 // loop_header_branch
      %26 = sbr.rel (%p24) target = $region8
    $region5: #{_disc_forward.1} parent=1 // loop_body
      %s28 = ssub.s32 %s23, 1
      %s29 = ssub.s32 %s23, 2
      %s30 = sadd.s32 %s23, 1
      %s31 = ssub.s32 %s23, %s30
      %p32 = scmp.eq.s32.totalorder %s31, 0
      %s34 = sadd.s32 %s33, 1
      %s35 = scalar_select %p32, %s33, %s34
      %p38 = pneg %p32
      %p39 = scmp.eq.s32.totalorder %s23, 1
      %p40 = por %p38, %p39
      %p41 = scmp.ne.s32.totalorder %s33, %s36
      %p42 = scmp.eq.s32.totalorder %s23, 0
      %p43 = por %p41, %p42
      %p44 = scmp.ne.s32.totalorder %s33, %s36
      %p45 = scmp.eq.s32.totalorder %s28, 1
      %p46 = por %p44, %p45
      %p47 = scmp.ne.s32.totalorder %s36, %s37
      %p48 = scmp.eq.s32.totalorder %s28, 0
      %p49 = por %p47, %p48
      %p50 = scmp.ne.s32.totalorder %s36, %s37
      %p51 = scmp.eq.s32.totalorder %s29, 1
      %p52 = por %p50, %p51
      %p54 = scmp.ne.s32.totalorder %s37, %s53
      %p55 = scmp.eq.s32.totalorder %s29, 0
      %p56 = por %p54, %p55
      %s58 = sadd.s32 %s57, 1
      %p61 = scmp.eq.s32.totalorder %s23, 1
      %p62 = scmp.ne.s32.totalorder %s57, %s59
      %p63 = scmp.eq.s32.totalorder %s23, 0
      %p64 = por %p62, %p63
      %p65 = scmp.ne.s32.totalorder %s57, %s59
      %p66 = scmp.eq.s32.totalorder %s28, 1
      %p67 = por %p65, %p66
      %p68 = scmp.ne.s32.totalorder %s59, %s60
      %p69 = scmp.eq.s32.totalorder %s28, 0
      %p70 = por %p68, %p69
      %p71 = scmp.ne.s32.totalorder %s59, %s60
      %p72 = scmp.eq.s32.totalorder %s29, 1
      %p73 = por %p71, %p72
      %p75 = scmp.ne.s32.totalorder %s60, %s74
      %p76 = scmp.eq.s32.totalorder %s29, 0
      %p77 = por %p75, %p76
      %s79 = sadd.s32 %s78, 1
      %p82 = scmp.eq.s32.totalorder %s23, 1
      %p83 = scmp.ne.s32.totalorder %s78, %s80
      %p84 = scmp.eq.s32.totalorder %s23, 0
      %p85 = por %p83, %p84
      %p86 = scmp.ne.s32.totalorder %s78, %s80
      %p87 = scmp.eq.s32.totalorder %s28, 1
      %p88 = por %p86, %p87
      %p89 = scmp.ne.s32.totalorder %s80, %s81
      %p90 = scmp.eq.s32.totalorder %s28, 0
      %p91 = por %p89, %p90
      %p92 = scmp.ne.s32.totalorder %s80, %s81
      %p93 = scmp.eq.s32.totalorder %s29, 1
      %p94 = por %p92, %p93
      %p96 = scmp.ne.s32.totalorder %s81, %s95
      %p97 = scmp.eq.s32.totalorder %s29, 0
      %p98 = por %p96, %p97
      %s100 = sadd.s32 %s99, 1
      %p103 = scmp.eq.s32.totalorder %s23, 1
      %p104 = scmp.ne.s32.totalorder %s99, %s101
      %p105 = scmp.eq.s32.totalorder %s23, 0
      %p106 = por %p104, %p105
      %p107 = scmp.ne.s32.totalorder %s99, %s101
      %p108 = scmp.eq.s32.totalorder %s28, 1
      %p109 = por %p107, %p108
      %p110 = scmp.ne.s32.totalorder %s101, %s102
      %p111 = scmp.eq.s32.totalorder %s28, 0
      %p112 = por %p110, %p111
      %p113 = scmp.ne.s32.totalorder %s101, %s102
      %p114 = scmp.eq.s32.totalorder %s29, 1
      %p115 = por %p113, %p114
      %p117 = scmp.ne.s32.totalorder %s102, %s116
      %p118 = scmp.eq.s32.totalorder %s29, 0
      %p119 = por %p117, %p118
      %s121 = sadd.s32 %s120, 1
      %p124 = scmp.eq.s32.totalorder %s23, 1
      %p125 = scmp.ne.s32.totalorder %s120, %s122
      %p126 = scmp.eq.s32.totalorder %s23, 0
      %p127 = por %p125, %p126
      %p128 = scmp.ne.s32.totalorder %s120, %s122
      %p129 = scmp.eq.s32.totalorder %s28, 1
      %p130 = por %p128, %p129
      %p131 = scmp.ne.s32.totalorder %s122, %s123
      %p132 = scmp.eq.s32.totalorder %s28, 0
      %p133 = por %p131, %p132
      %p134 = scmp.ne.s32.totalorder %s122, %s123
      %p135 = scmp.eq.s32.totalorder %s29, 1
      %p136 = por %p134, %p135
      %p138 = scmp.ne.s32.totalorder %s123, %s137
      %p139 = scmp.eq.s32.totalorder %s29, 0
      %p140 = por %p138, %p139
      %s142 = sadd.s32 %s141, 1
      %p145 = scmp.eq.s32.totalorder %s23, 1
      %p146 = scmp.ne.s32.totalorder %s141, %s143
      %p147 = scmp.eq.s32.totalorder %s23, 0
      %p148 = por %p146, %p147
      %p149 = scmp.ne.s32.totalorder %s141, %s143
      %p150 = scmp.eq.s32.totalorder %s28, 1
      %p151 = por %p149, %p150
      %p152 = scmp.ne.s32.totalorder %s143, %s144
      %p153 = scmp.eq.s32.totalorder %s28, 0
      %p154 = por %p152, %p153
      %p155 = scmp.ne.s32.totalorder %s143, %s144
      %p156 = scmp.eq.s32.totalorder %s29, 1
      %p157 = por %p155, %p156
      %p159 = scmp.ne.s32.totalorder %s144, %s158
      %p160 = scmp.eq.s32.totalorder %s29, 0
      %p161 = por %p159, %p160
      %s163 = sadd.s32 %s162, 1
      %p166 = scmp.eq.s32.totalorder %s23, 1
      %p167 = scmp.ne.s32.totalorder %s162, %s164
      %p168 = scmp.eq.s32.totalorder %s23, 0
      %p169 = por %p167, %p168
      %p170 = scmp.ne.s32.totalorder %s162, %s164
      %p171 = scmp.eq.s32.totalorder %s28, 1
      %p172 = por %p170, %p171
      %p173 = scmp.ne.s32.totalorder %s164, %s165
      %p174 = scmp.eq.s32.totalorder %s28, 0
      %p175 = por %p173, %p174
      %p176 = scmp.ne.s32.totalorder %s164, %s165
      %p177 = scmp.eq.s32.totalorder %s29, 1
      %p178 = por %p176, %p177
      %p180 = scmp.ne.s32.totalorder %s165, %s179
      %p181 = scmp.eq.s32.totalorder %s29, 0
      %p182 = por %p180, %p181
      %s184 = sadd.s32 %s183, 1
      %p187 = scmp.eq.s32.totalorder %s23, 1
      %p188 = scmp.ne.s32.totalorder %s183, %s185
      %p189 = scmp.eq.s32.totalorder %s23, 0
      %p190 = por %p188, %p189
      %p191 = scmp.ne.s32.totalorder %s183, %s185
      %p192 = scmp.eq.s32.totalorder %s28, 1
      %p193 = por %p191, %p192
      %p194 = scmp.ne.s32.totalorder %s185, %s186
      %p195 = scmp.eq.s32.totalorder %s28, 0
      %p196 = por %p194, %p195
      %p197 = scmp.ne.s32.totalorder %s185, %s186
      %p198 = scmp.eq.s32.totalorder %s29, 1
      %p199 = por %p197, %p198
      %p201 = scmp.ne.s32.totalorder %s186, %s200
      %p202 = scmp.eq.s32.totalorder %s29, 0
      %p203 = por %p201, %p202
      %s205 = sadd.s32 %s204, 1
      %p208 = scmp.eq.s32.totalorder %s23, 1
      %p209 = scmp.ne.s32.totalorder %s204, %s206
      %p210 = scmp.eq.s32.totalorder %s23, 0
      %p211 = por %p209, %p210
      %p212 = scmp.ne.s32.totalorder %s204, %s206
      %p213 = scmp.eq.s32.totalorder %s28, 1
      %p214 = por %p212, %p213
      %p215 = scmp.ne.s32.totalorder %s206, %s207
      %p216 = scmp.eq.s32.totalorder %s28, 0
      %p217 = por %p215, %p216
      %p218 = scmp.ne.s32.totalorder %s206, %s207
      %p219 = scmp.eq.s32.totalorder %s29, 1
      %p220 = por %p218, %p219
      %p222 = scmp.ne.s32.totalorder %s207, %s221
      %p223 = scmp.eq.s32.totalorder %s29, 0
      %p224 = por %p222, %p223
      %s226 = sadd.s32 %s225, 1
      %p229 = scmp.eq.s32.totalorder %s23, 1
      %p230 = scmp.ne.s32.totalorder %s225, %s227
      %p231 = scmp.eq.s32.totalorder %s23, 0
      %p232 = por %p230, %p231
      %p233 = scmp.ne.s32.totalorder %s225, %s227
      %p234 = scmp.eq.s32.totalorder %s28, 1
      %p235 = por %p233, %p234
      %p236 = scmp.ne.s32.totalorder %s227, %s228
      %p237 = scmp.eq.s32.totalorder %s28, 0
      %p238 = por %p236, %p237
      %p239 = scmp.ne.s32.totalorder %s227, %s228
      %p240 = scmp.eq.s32.totalorder %s29, 1
      %p241 = por %p239, %p240
      %p243 = scmp.ne.s32.totalorder %s228, %s242
      %p244 = scmp.eq.s32.totalorder %s29, 0
      %p245 = por %p243, %p244
      %s247 = sadd.s32 %s246, 1
      %p250 = scmp.eq.s32.totalorder %s23, 1
      %p251 = scmp.ne.s32.totalorder %s246, %s248
      %p252 = scmp.eq.s32.totalorder %s23, 0
      %p253 = por %p251, %p252
      %p254 = scmp.ne.s32.totalorder %s246, %s248
      %p255 = scmp.eq.s32.totalorder %s28, 1
      %p256 = por %p254, %p255
      %p257 = scmp.ne.s32.totalorder %s248, %s249
      %p258 = scmp.eq.s32.totalorder %s28, 0
      %p259 = por %p257, %p258
      %p260 = scmp.ne.s32.totalorder %s248, %s249
      %p261 = scmp.eq.s32.totalorder %s29, 1
      %p262 = por %p260, %p261
      %p264 = scmp.ne.s32.totalorder %s249, %s263
      %p265 = scmp.eq.s32.totalorder %s29, 0
      %p266 = por %p264, %p265
      %s267 = ssub.s32 %s23, %s30
      %p268 = scmp.eq.s32.totalorder %s267, 0
      %s270 = sadd.s32 %s269, 1
      %s271 = scalar_select %p268, %s269, %s270
      %p274 = pneg %p268
      %p275 = scmp.eq.s32.totalorder %s23, 1
      %p276 = por %p274, %p275
      %p277 = scmp.ne.s32.totalorder %s269, %s272
      %p278 = scmp.eq.s32.totalorder %s23, 0
      %p279 = por %p277, %p278
      %p280 = scmp.ne.s32.totalorder %s269, %s272
      %p281 = scmp.eq.s32.totalorder %s28, 1
      %p282 = por %p280, %p281
      %p283 = scmp.ne.s32.totalorder %s272, %s273
      %p284 = scmp.eq.s32.totalorder %s28, 0
      %p285 = por %p283, %p284
      %p286 = scmp.ne.s32.totalorder %s272, %s273
      %p287 = scmp.eq.s32.totalorder %s29, 1
      %p288 = por %p286, %p287
      %p290 = scmp.ne.s32.totalorder %s273, %s289
      %p291 = scmp.eq.s32.totalorder %s29, 0
      %p292 = por %p290, %p291
      %p293 = scmp.le.s32.totalorder 1, %s23
      %p294 = scmp.lt.s32.totalorder %s23, 3
      %p295 = pnand %p293, %p294
      %p296 = pneg %p295
      // Predicated region
      $region9: #{_disc_forward.1} parent=5 // pred_check
        _
      $region10: #{_disc_forward.1} parent=5 // pred_check_branch
        %298 = sbr.rel (%p295) target = $region12
      $region11: #{_disc_forward.1} parent=5 // pred_region
        %s299 = ssub.s32 %s23, 1
        // Predicated region
        $region13: #{_disc_forward.1} parent=11 // pred_check
          %p300 = pneg %p70
        $region14: #{_disc_forward.1} parent=11 // pred_check_branch
          %302 = sbr.rel (%p300) target = $region16
        $region15: #{_disc_forward.1} parent=11 // pred_region
          _
        $region16: #{_disc_forward.1} parent=11 // pred_fallthru
          _
        // Predicated region
        $region17: #{_disc_forward.1} parent=11 // pred_check
          %p303 = pneg %p91
        $region18: #{_disc_forward.1} parent=11 // pred_check_branch
          %305 = sbr.rel (%p303) target = $region20
        $region19: #{_disc_forward.1} parent=11 // pred_region
          _
        $region20: #{_disc_forward.1} parent=11 // pred_fallthru
          _
        // Predicated region
        $region21: #{_disc_forward.1} parent=11 // pred_check
          %p306 = pneg %p112
        $region22: #{_disc_forward.1} parent=11 // pred_check_branch
          %308 = sbr.rel (%p306) target = $region24
        $region23: #{_disc_forward.1} parent=11 // pred_region
          _
        $region24: #{_disc_forward.1} parent=11 // pred_fallthru
          _
        // Predicated region
        $region25: #{_disc_forward.1} parent=11 // pred_check
          %p309 = pneg %p133
        $region26: #{_disc_forward.1} parent=11 // pred_check_branch
          %311 = sbr.rel (%p309) target = $region28
        $region27: #{_disc_forward.1} parent=11 // pred_region
          %s313 = ssub.s32 48, 48
          %314 = vsyncadd [#allocation5], %s313
          %s315 = sshll.u32 [#allocation4], 4
          %s316 = int_to_ptr.vmem [resolvable:$true] %s315
          %321 = dma.hbm_to_vmem [thread:$0]  %s4, 48, %s316, [#allocation5], 16, 16, 1
        $region28: #{_disc_forward.1} parent=11 // pred_fallthru
          _
        // Predicated region
        $region29: #{_disc_forward.1} parent=11 // pred_check
          %p322 = pneg %p154
        $region30: #{_disc_forward.1} parent=11 // pred_check_branch
          %324 = sbr.rel (%p322) target = $region32
        $region31: #{_disc_forward.1} parent=11 // pred_region
          %s326 = ssub.s32 768, 768
          %327 = vsyncadd [#allocation7], %s326
          %s328 = sshll.u32 [#allocation6], 4
          %s329 = int_to_ptr.vmem [resolvable:$true] %s328
          %334 = dma.hbm_to_vmem [thread:$0]  %s5, 768, %s329, [#allocation7], 64, 64, 4
        $region32: #{_disc_forward.1} parent=11 // pred_fallthru
          _
        // Predicated region
        $region33: #{_disc_forward.1} parent=11 // pred_check
          %p335 = pneg %p175
        $region34: #{_disc_forward.1} parent=11 // pred_check_branch
          %337 = sbr.rel (%p335) target = $region36
        $region35: #{_disc_forward.1} parent=11 // pred_region
          %s339 = ssub.s32 48, 48
          %340 = vsyncadd [#allocation7], %s339
          %s341 = sshll.u32 [#allocation8], 4
          %s342 = int_to_ptr.vmem [resolvable:$true] %s341
          %347 = dma.hbm_to_vmem [thread:$0]  %s6, 48, %s342, [#allocation7], 16, 16, 1
        $region36: #{_disc_forward.1} parent=11 // pred_fallthru
          _
        // Predicated region
        $region37: #{_disc_forward.1} parent=11 // pred_check
          %p348 = pneg %p196
        $region38: #{_disc_forward.1} parent=11 // pred_check_branch
          %350 = sbr.rel (%p348) target = $region40
        $region39: #{_disc_forward.1} parent=11 // pred_region
          %s352 = ssub.s32 48, 48
          %353 = vsyncadd [#allocation10], %s352
          %s354 = sshll.u32 [#allocation9], 4
          %s355 = int_to_ptr.vmem [resolvable:$true] %s354
          %360 = dma.hbm_to_vmem [thread:$0]  %s7, 48, %s355, [#allocation10], 16, 16, 1
        $region40: #{_disc_forward.1} parent=11 // pred_fallthru
          _
        // Predicated region
        $region41: #{_disc_forward.1} parent=11 // pred_check
          %p361 = pneg %p217
        $region42: #{_disc_forward.1} parent=11 // pred_check_branch
          %363 = sbr.rel (%p361) target = $region44
        $region43: #{_disc_forward.1} parent=11 // pred_region
          %s365 = ssub.s32 48, 48
          %366 = vsyncadd [#allocation10], %s365
          %s367 = sshll.u32 [#allocation11], 4
          %s368 = int_to_ptr.vmem [resolvable:$true] %s367
          %373 = dma.hbm_to_vmem [thread:$0]  %s8, 48, %s368, [#allocation10], 16, 16, 1
        $region44: #{_disc_forward.1} parent=11 // pred_fallthru
          _
        // Predicated region
        $region45: #{_disc_forward.1} parent=11 // pred_check
          %p374 = pneg %p238
        $region46: #{_disc_forward.1} parent=11 // pred_check_branch
          %376 = sbr.rel (%p374) target = $region48
        $region47: #{_disc_forward.1} parent=11 // pred_region
          %s378 = ssub.s32 16, 16
          %379 = vsyncadd [#allocation13], %s378
          %s381 = sshll.u32 [#allocation12], 4
          %s382 = int_to_ptr.vmem [resolvable:$true] %s381
          %384 = dma.hbm_to_vmem [thread:$0]  %s9, 16, %s382, [#allocation13]
        $region48: #{_disc_forward.1} parent=11 // pred_fallthru
          _
        // Predicated region
        $region49: #{_disc_forward.1} parent=11 // pred_check
          %p385 = pneg %p259
        $region50: #{_disc_forward.1} parent=11 // pred_check_branch
          %387 = sbr.rel (%p385) target = $region52
        $region51: #{_disc_forward.1} parent=11 // pred_region
          _
        $region52: #{_disc_forward.1} parent=11 // pred_fallthru
          _
      $region12: #{_disc_forward.1} parent=5 // pred_fallthru
        _
      %p388 = scmp.lt.s32.totalorder %s23, 2
      // Predicated region
      $region53: #{_disc_forward.1} parent=5 // pred_check
        %p389 = pneg %p388
      $region54: #{_disc_forward.1} parent=5 // pred_check_branch
        %391 = sbr.rel (%p389) target = $region56
      $region55: #{_disc_forward.1} parent=5 // pred_region
        // Predicated region
        $region57: #{_disc_forward.1} parent=55 // pred_check
          %p392 = pneg %p43
        $region58: #{_disc_forward.1} parent=55 // pred_check_branch
          %394 = sbr.rel (%p392) target = $region60
        $region59: #{_disc_forward.1} parent=55 // pred_region
          %s395 = smul.u32 2, %s23
          %p396 = scmp.lt.s32.totalorder %s395, 3
          %s397 = scalar_select %p396, %s395, 3
          %s398 = smul.addr %s397, 4
          %s399 = scalar_lea.vmem %s0, %s398
          %s400 = smul.u32 2, %s23
        $region60: #{_disc_forward.1} parent=55 // pred_fallthru
          _
      $region56: #{_disc_forward.1} parent=5 // pred_fallthru
        _
      %p401 = scmp.le.s32.totalorder 1, %s23
      %p402 = scmp.lt.s32.totalorder %s23, 3
      %p403 = pnand %p401, %p402
      %p404 = pneg %p403
      // Predicated region
      $region61: #{_disc_forward.1} parent=5 // pred_check
        _
      $region62: #{_disc_forward.1} parent=5 // pred_check_branch
        %406 = sbr.rel (%p403) target = $region64
      $region63: #{_disc_forward.1} parent=5 // pred_region
        %s407 = ssub.s32 %s23, 1
        // Predicated region
        $region65: #{_disc_forward.1} parent=63 // pred_check
          %p408 = pneg %p133
        $region66: #{_disc_forward.1} parent=63 // pred_check_branch
          %410 = sbr.rel (%p408) target = $region68
        $region67: #{_disc_forward.1} parent=63 // pred_region
          %411 = dma.done [#allocation5], 48
        $region68: #{_disc_forward.1} parent=63 // pred_fallthru
          _
        // Predicated region
        $region69: #{_disc_forward.1} parent=63 // pred_check
          %p412 = pneg %p154
        $region70: #{_disc_forward.1} parent=63 // pred_check_branch
          %414 = sbr.rel (%p412) target = $region72
        $region71: #{_disc_forward.1} parent=63 // pred_region
          %415 = dma.done [#allocation7], 768
        $region72: #{_disc_forward.1} parent=63 // pred_fallthru
          _
        // Predicated region
        $region73: #{_disc_forward.1} parent=63 // pred_check
          %p416 = pneg %p175
        $region74: #{_disc_forward.1} parent=63 // pred_check_branch
          %418 = sbr.rel (%p416) target = $region76
        $region75: #{_disc_forward.1} parent=63 // pred_region
          %419 = dma.done [#allocation7], 48
        $region76: #{_disc_forward.1} parent=63 // pred_fallthru
          _
        // Predicated region
        $region77: #{_disc_forward.1} parent=63 // pred_check
          %p420 = pneg %p196
        $region78: #{_disc_forward.1} parent=63 // pred_check_branch
          %422 = sbr.rel (%p420) target = $region80
        $region79: #{_disc_forward.1} parent=63 // pred_region
          %423 = dma.done [#allocation10], 48
        $region80: #{_disc_forward.1} parent=63 // pred_fallthru
          _
        // Predicated region
        $region81: #{_disc_forward.1} parent=63 // pred_check
          %p424 = pneg %p217
        $region82: #{_disc_forward.1} parent=63 // pred_check_branch
          %426 = sbr.rel (%p424) target = $region84
        $region83: #{_disc_forward.1} parent=63 // pred_region
          %427 = dma.done [#allocation10], 48
        $region84: #{_disc_forward.1} parent=63 // pred_fallthru
          _
        // Predicated region
        $region85: #{_disc_forward.1} parent=63 // pred_check
          %p428 = pneg %p238
        $region86: #{_disc_forward.1} parent=63 // pred_check_branch
          %430 = sbr.rel (%p428) target = $region88
        $region87: #{_disc_forward.1} parent=63 // pred_region
          %431 = dma.done [#allocation13], 16
        $region88: #{_disc_forward.1} parent=63 // pred_fallthru
          _
        %s432 = smul.u32 2, %s28
        %p433 = scmp.lt.s32.totalorder %s432, 3
        %s434 = scalar_select %p433, %s432, 3
        %s435 = smul.addr %s434, 4
        %s436 = scalar_lea.vmem %s0, %s435
        %p437 = pneg %p49
        %p438 = pneg %p46
        %p439 = pneg %p70
        %p440 = pneg %p67
        %p441 = pneg %p91
        %p442 = pneg %p88
        %p443 = pneg %p112
        %p444 = pneg %p109
        %p445 = pneg %p133
        %p446 = pneg %p130
        %p447 = pneg %p154
        %p448 = pneg %p151
        %p449 = pneg %p175
        %p450 = pneg %p172
        %p451 = pneg %p196
        %p452 = pneg %p193
        %p453 = pneg %p217
        %p454 = pneg %p214
        %p455 = pneg %p238
        %p456 = pneg %p235
        %p457 = pneg %p259
        %p458 = pneg %p256
        %p459 = pneg %p285
        %p460 = pneg %p282
        %p461 = scmp.lt.s32.totalorder %s28, 1
        %s462 = scalar_select %p461, %s28, 1
        %s463 = scalar_lea.vmem %s11, %s462
        %s464 = smul.u32 2, %s28
        %p465 = scmp.lt.s32.totalorder %s464, 3
        %s466 = scalar_select %p465, %s464, 3
        %s467 = smul.addr %s466, 4
        %s468 = scalar_lea.vmem %s0, %s467
        %s469 = smul.u32 2, %s28
        %p470 = scmp.lt.s32.totalorder %s28, 1
        %s471 = scalar_select %p470, %s28, 1
        %s472 = scalar_lea.vmem %s11, %s471
        %v474 = vld [vmem:[%s468] sm:$0xf]
        %v475 = vld [vmem:[%s468 + $0x4] sm:$0xf]
        %v476 = vld [vmem:[%s1] sm:$0xf]
        %v477 = vld [vmem:[%s1 + $0x4] sm:$0xf]
        %v478 = vld [vmem:[%s2] sm:$0x1]
        %v480 = vlaneseq
        %v481 = vshrl.u32 %v480, 7
        %v482 = vsub.s32 0, %v481
        %v483 = vrot.slane %v478, %v482
        %v487 = vunpack.c.l.b16 %v474
        %v488 = vunpack.c.l.b16 %v475
        %v489 = vpack.c.b16 %v488, %v487
        %v492 = vunpack.c.l.b16 %v476
        %v493 = vunpack.c.l.b16 %v477
        %v494 = vpack.c.b16 %v493, %v492
        %vm496 = vcmask 130048
        %v498 = vsel %vm496, %v489, 0
        %500 = vmatprep.subr.bf16.mxu0 0
        %501 = vmatpush1.bf16.msra.mxu0 %v494
        %502 = vmatprep.subr.bf16.mxu0 0
        %503 = vmatpush1.bf16.msra.mxu0 0
        %504 = vmatprep.subr.bf16.mxu0 0
        %505 = vmatpush1.bf16.msra.mxu0 0
        %506 = vmatprep.subr.bf16.mxu0 0
        %507 = vmatpush1.bf16.msra.mxu0 0
        %508 = vmatprep.subr.bf16.mxu0 0
        %509 = vmatpush1.bf16.msra.mxu0 0
        %510 = vmatprep.subr.bf16.mxu0 0
        %511 = vmatpush1.bf16.msra.mxu0 0
        %512 = vmatprep.subr.bf16.mxu0 0
        %513 = vmatpush1.bf16.msra.mxu0 0
        %514 = vmatprep.subr.bf16.mxu0 0
        %515 = vmatpush1.bf16.msra.mxu0 0
        %516 = vmatprep.subr.bf16.mxu0 0
        %517 = vmatpush1.bf16.msra.mxu0 0
        %518 = vmatprep.subr.bf16.mxu0 0
        %519 = vmatpush1.bf16.msra.mxu0 0
        %520 = vmatprep.subr.bf16.mxu0 0
        %521 = vmatpush1.bf16.msra.mxu0 0
        %522 = vmatprep.subr.bf16.mxu0 0
        %523 = vmatpush1.bf16.msra.mxu0 0
        %524 = vmatprep.subr.bf16.mxu0 0
        %525 = vmatpush1.bf16.msra.mxu0 0
        %526 = vmatprep.subr.bf16.mxu0 0
        %527 = vmatpush1.bf16.msra.mxu0 0
        %528 = vmatprep.subr.bf16.mxu0 0
        %529 = vmatpush1.bf16.msra.mxu0 0
        %530 = vmatprep.subr.bf16.mxu0 0
        %531 = vmatpush1.bf16.msra.mxu0 0
        %532 = vmatprep.mubr.bf16.mxu0 0
        %533 = vmatmul.mubr.bf16.gmra.mrb[0].mxu0 %v498
        %v534 = vpop.f32.mrb[0].mxu0
        %v535 = vadd.f32 %v483, %v534
        %v536 = vpop.f32.mrb[0].mxu0
        %v537 = vpop.f32.mrb[0].mxu0
        %v538 = vadd.f32 %v483, %v537
        %v539 = vpop.f32.mrb[0].mxu0
        %540 = vdwg.mxu0
        %v541 = vpack.c.bf16 %v538, %v535
        %v542 = vld [vmem:[%s3] sm:$0xf]
        %v543 = vld [vmem:[%s3 + $0x4] sm:$0xf]
        %v544 = vld [vmem:[%s3 + $0x8] sm:$0xf]
        %v545 = vld [vmem:[%s3 + $0xc] sm:$0xf]
        %v546 = vld [vmem:[#allocation4] sm:$0x1]
        %v548 = vlaneseq
        %v549 = vshrl.u32 %v548, 7
        %v550 = vsub.s32 0, %v549
        %v551 = vrot.slane %v546, %v550
        %v557 = vunpack.c.l.b16 %v542
        %v558 = vunpack.c.l.b16 %v543
        %v559 = vunpack.c.l.b16 %v544
        %v560 = vunpack.c.l.b16 %v545
        %v561 = vpack.c.b16 %v558, %v557
        %v562 = vpack.c.b16 %v560, %v559
        %vm565 = vcmask 261120
        %v567 = vsel %vm565, %v541, 0
        %569 = vmatprep.subr.bf16.mxu0 0
        %570 = vmatpush1.bf16.msra.mxu0 %v561
        %571 = vmatprep.subr.bf16.mxu0 0
        %572 = vmatpush1.bf16.msra.mxu0 %v562
        %573 = vmatprep.subr.bf16.mxu0 0
        %574 = vmatpush1.bf16.msra.mxu0 0
        %575 = vmatprep.subr.bf16.mxu0 0
        %576 = vmatpush1.bf16.msra.mxu0 0
        %577 = vmatprep.subr.bf16.mxu0 0
        %578 = vmatpush1.bf16.msra.mxu0 0
        %579 = vmatprep.subr.bf16.mxu0 0
        %580 = vmatpush1.bf16.msra.mxu0 0
        %581 = vmatprep.subr.bf16.mxu0 0
        %582 = vmatpush1.bf16.msra.mxu0 0
        %583 = vmatprep.subr.bf16.mxu0 0
        %584 = vmatpush1.bf16.msra.mxu0 0
        %585 = vmatprep.subr.bf16.mxu0 0
        %586 = vmatpush1.bf16.msra.mxu0 0
        %587 = vmatprep.subr.bf16.mxu0 0
        %588 = vmatpush1.bf16.msra.mxu0 0
        %589 = vmatprep.subr.bf16.mxu0 0
        %590 = vmatpush1.bf16.msra.mxu0 0
        %591 = vmatprep.subr.bf16.mxu0 0
        %592 = vmatpush1.bf16.msra.mxu0 0
        %593 = vmatprep.subr.bf16.mxu0 0
        %594 = vmatpush1.bf16.msra.mxu0 0
        %595 = vmatprep.subr.bf16.mxu0 0
        %596 = vmatpush1.bf16.msra.mxu0 0
        %597 = vmatprep.subr.bf16.mxu0 0
        %598 = vmatpush1.bf16.msra.mxu0 0
        %599 = vmatprep.subr.bf16.mxu0 0
        %600 = vmatpush1.bf16.msra.mxu0 0
        %601 = vmatprep.mubr.bf16.mxu0 0
        %602 = vmatmul.mubr.bf16.gmra.mrb[0].mxu0 %v567
        %v603 = vpop.f32.mrb[0].mxu0
        %v604 = vadd.f32 %v551, %v603
        %v605 = vpop.f32.mrb[0].mxu0
        %v606 = vpop.f32.mrb[0].mxu0
        %v607 = vadd.f32 %v551, %v606
        %v608 = vpop.f32.mrb[0].mxu0
        %609 = vdwg.mxu0
        %v610 = vpack.c.bf16 %v607, %v604
        %v611 = vld [vmem:[#allocation6] sm:$0xf]
        %v612 = vld [vmem:[#allocation6 + $0x4] sm:$0xf]
        %v613 = vld [vmem:[#allocation6 + $0x8] sm:$0xf]
        %v614 = vld [vmem:[#allocation6 + $0xc] sm:$0xf]
        %v615 = vunpack.c.l.bf16 %v541
        %v616 = vunpack.c.h.bf16 %v541
        %v617 = vld [vmem:[#allocation8] sm:$0x1]
        %v619 = vlaneseq
        %v620 = vshrl.u32 %v619, 7
        %v621 = vsub.s32 0, %v620
        %v622 = vrot.slane %v617, %v621
        %v624 = vadd.f32 %v615, %v622
        %v625 = vadd.f32 %v616, %v622
        %v627 = vunpack.c.l.b16 %v610
        %v628 = vunpack.c.h.b16 %v610
        %v629 = vpack.c.b16 %v627, %v627
        %v630 = vpack.c.b16 %v628, %v628
        %631 = vrot.lane.b32.xlu0 %v629, 96
        %v632 = vpop.permute.xlu0 %631
        %v634 = vsel %vm496, %v629, 0
        %v637 = vsel %vm496, %v632, 0
        %639 = vmatprep.subr.bf16.mxu0 0
        %640 = vmatpush1.bf16.xpose.msra.mxu0 %v637
        %641 = vmatprep.subr.bf16.mxu0 0
        %642 = vmatpush1.bf16.xpose.msra.mxu0 0
        %643 = vmatprep.subr.bf16.mxu0 0
        %644 = vmatpush1.bf16.xpose.msra.mxu0 0
        %645 = vmatprep.subr.bf16.mxu0 0
        %646 = vmatpush1.bf16.xpose.msra.mxu0 0
        %647 = vmatprep.subr.bf16.mxu0 0
        %648 = vmatpush1.bf16.xpose.msra.mxu0 0
        %649 = vmatprep.subr.bf16.mxu0 0
        %650 = vmatpush1.bf16.xpose.msra.mxu0 0
        %651 = vmatprep.subr.bf16.mxu0 0
        %652 = vmatpush1.bf16.xpose.msra.mxu0 0
        %653 = vmatprep.subr.bf16.mxu0 0
        %654 = vmatpush1.bf16.xpose.msra.mxu0 0
        %655 = vmatprep.subr.bf16.mxu0 0
        %656 = vmatpush1.bf16.xpose.msra.mxu0 0
        %657 = vmatprep.subr.bf16.mxu0 0
        %658 = vmatpush1.bf16.xpose.msra.mxu0 0
        %659 = vmatprep.subr.bf16.mxu0 0
        %660 = vmatpush1.bf16.xpose.msra.mxu0 0
        %661 = vmatprep.subr.bf16.mxu0 0
        %662 = vmatpush1.bf16.xpose.msra.mxu0 0
        %663 = vmatprep.subr.bf16.mxu0 0
        %664 = vmatpush1.bf16.xpose.msra.mxu0 0
        %665 = vmatprep.subr.bf16.mxu0 0
        %666 = vmatpush1.bf16.xpose.msra.mxu0 0
        %667 = vmatprep.subr.bf16.mxu0 0
        %668 = vmatpush1.bf16.xpose.msra.mxu0 0
        %669 = vmatprep.subr.bf16.mxu0 0
        %670 = vmatpush1.bf16.xpose.msra.mxu0 0
        %671 = vmatprep.mubr.bf16.mxu0 0
        %672 = vmatmul.mubr.bf16.gmra.mrb[0].mxu0 %v634
        %v673 = vpop.f32.mrb[0].mxu0
        %v674 = vadd.f32 0.0, %v673
        %v675 = vpop.f32.mrb[0].mxu0
        %v676 = vpop.f32.mrb[0].mxu0
        %v677 = vpop.f32.mrb[0].mxu0
        %678 = vdwg.mxu0
        %679 = vrot.lane.b32.xlu0 %v630, 96
        %v680 = vpop.permute.xlu0 %679
        %v682 = vsel %vm496, %v630, 0
        %v685 = vsel %vm496, %v680, 0
        %687 = vmatprep.subr.bf16.mxu0 0
        %688 = vmatpush1.bf16.xpose.msra.mxu0 %v685
        %689 = vmatprep.subr.bf16.mxu0 0
        %690 = vmatpush1.bf16.xpose.msra.mxu0 0
        %691 = vmatprep.subr.bf16.mxu0 0
        %692 = vmatpush1.bf16.xpose.msra.mxu0 0
        %693 = vmatprep.subr.bf16.mxu0 0
        %694 = vmatpush1.bf16.xpose.msra.mxu0 0
        %695 = vmatprep.subr.bf16.mxu0 0
        %696 = vmatpush1.bf16.xpose.msra.mxu0 0
        %697 = vmatprep.subr.bf16.mxu0 0
        %698 = vmatpush1.bf16.xpose.msra.mxu0 0
        %699 = vmatprep.subr.bf16.mxu0 0
        %700 = vmatpush1.bf16.xpose.msra.mxu0 0
        %701 = vmatprep.subr.bf16.mxu0 0
        %702 = vmatpush1.bf16.xpose.msra.mxu0 0
        %703 = vmatprep.subr.bf16.mxu0 0
        %704 = vmatpush1.bf16.xpose.msra.mxu0 0
        %705 = vmatprep.subr.bf16.mxu0 0
        %706 = vmatpush1.bf16.xpose.msra.mxu0 0
        %707 = vmatprep.subr.bf16.mxu0 0
        %708 = vmatpush1.bf16.xpose.msra.mxu0 0
        %709 = vmatprep.subr.bf16.mxu0 0
        %710 = vmatpush1.bf16.xpose.msra.mxu0 0
        %711 = vmatprep.subr.bf16.mxu0 0
        %712 = vmatpush1.bf16.xpose.msra.mxu0 0
        %713 = vmatprep.subr.bf16.mxu0 0
        %714 = vmatpush1.bf16.xpose.msra.mxu0 0
        %715 = vmatprep.subr.bf16.mxu0 0
        %716 = vmatpush1.bf16.xpose.msra.mxu0 0
        %717 = vmatprep.subr.bf16.mxu0 0
        %718 = vmatpush1.bf16.xpose.msra.mxu0 0
        %719 = vmatprep.mubr.bf16.mxu0 0
        %720 = vmatmul.mubr.bf16.gmra.mrb[0].mxu0 %v682
        %v721 = vpop.f32.mrb[0].mxu0
        %v722 = vadd.f32 0.0, %v721
        %v723 = vpop.f32.mrb[0].mxu0
        %v724 = vpop.f32.mrb[0].mxu0
        %v725 = vpop.f32.mrb[0].mxu0
        %726 = vdwg.mxu0
        %vm727 = vcmask 64512
        %v728 = vsel %vm727, %v674, -inf
        %729 = vmax.xlane.f32.xlu0 %v728
        %v730 = vpop.xlane.xlu0 %729
        %v731 = vsel %vm727, %v722, -inf
        %732 = vmax.xlane.f32.xlu0 %v731
        %v733 = vpop.xlane.xlu0 %732
        %v734 = vsub.f32 %v674, %v730
        %v735 = vsub.f32 %v722, %v733
        %v736 = vmul.f32 %v734, 1.442695
        %v737 = vpow.pop %v736
        %v738 = vmul.f32 %v735, 1.442695
        %v739 = vpow.pop %v738
        %v740 = vsel %vm727, %v737, 0.0
        %741 = vadd.xlane.f32.xlu0 %v740
        %v742 = vpop.xlane.xlu0 %741
        %v743 = vsel %vm727, %v739, 0.0
        %744 = vadd.xlane.f32.xlu0 %v743
        %v745 = vpop.xlane.xlu0 %744
        %v746 = vrcp.pop %v742
        %v747 = vrcp.pop %v745
        %v748 = vmul.f32 %v737, %v746
        %v749 = vmul.f32 %v739, %v747
        %v750 = vpack.c.bf16 %v748, %v748
        %v751 = vpack.c.bf16 %v749, %v749
        %752 = vrot.lane.b32.xlu0 %v629, 64
        %v753 = vpop.permute.xlu0 %752
        %v755 = vsel %vm727, %v750, 0
        %vm757 = vcmask 1043456
        %v759 = vsel %vm757, %v753, 0
        %761 = vmatprep.subr.bf16.mxu0 0
        %762 = vmatpush1.bf16.msra.mxu0 %v759
        %763 = vmatprep.subr.bf16.mxu0 0
        %764 = vmatpush1.bf16.msra.mxu0 0
        %765 = vmatprep.subr.bf16.mxu0 0
        %766 = vmatpush1.bf16.msra.mxu0 0
        %767 = vmatprep.subr.bf16.mxu0 0
        %768 = vmatpush1.bf16.msra.mxu0 0
        %769 = vmatprep.subr.bf16.mxu0 0
        %770 = vmatpush1.bf16.msra.mxu0 0
        %771 = vmatprep.subr.bf16.mxu0 0
        %772 = vmatpush1.bf16.msra.mxu0 0
        %773 = vmatprep.subr.bf16.mxu0 0
        %774 = vmatpush1.bf16.msra.mxu0 0
        %775 = vmatprep.subr.bf16.mxu0 0
        %776 = vmatpush1.bf16.msra.mxu0 0
        %777 = vmatprep.subr.bf16.mxu0 0
        %778 = vmatpush1.bf16.msra.mxu0 0
        %779 = vmatprep.subr.bf16.mxu0 0
        %780 = vmatpush1.bf16.msra.mxu0 0
        %781 = vmatprep.subr.bf16.mxu0 0
        %782 = vmatpush1.bf16.msra.mxu0 0
        %783 = vmatprep.subr.bf16.mxu0 0
        %784 = vmatpush1.bf16.msra.mxu0 0
        %785 = vmatprep.subr.bf16.mxu0 0
        %786 = vmatpush1.bf16.msra.mxu0 0
        %787 = vmatprep.subr.bf16.mxu0 0
        %788 = vmatpush1.bf16.msra.mxu0 0
        %789 = vmatprep.subr.bf16.mxu0 0
        %790 = vmatpush1.bf16.msra.mxu0 0
        %791 = vmatprep.subr.bf16.mxu0 0
        %792 = vmatpush1.bf16.msra.mxu0 0
        %793 = vmatprep.mubr.bf16.mxu0 0
        %794 = vmatmul.mubr.bf16.gmra.mrb[0].mxu0 %v755
        %v795 = vpop.f32.mrb[0].mxu0
        %v796 = vadd.f32 0.0, %v795
        %v797 = vpop.f32.mrb[0].mxu0
        %v798 = vpop.f32.mrb[0].mxu0
        %v799 = vpop.f32.mrb[0].mxu0
        %800 = vdwg.mxu0
        %801 = vrot.lane.b32.xlu0 %v630, 64
        %v802 = vpop.permute.xlu0 %801
        %v804 = vsel %vm727, %v751, 0
        %v807 = vsel %vm757, %v802, 0
        %809 = vmatprep.subr.bf16.mxu0 0
        %810 = vmatpush1.bf16.msra.mxu0 %v807
        %811 = vmatprep.subr.bf16.mxu0 0
        %812 = vmatpush1.bf16.msra.mxu0 0
        %813 = vmatprep.subr.bf16.mxu0 0
        %814 = vmatpush1.bf16.msra.mxu0 0
        %815 = vmatprep.subr.bf16.mxu0 0
        %816 = vmatpush1.bf16.msra.mxu0 0
        %817 = vmatprep.subr.bf16.mxu0 0
        %818 = vmatpush1.bf16.msra.mxu0 0
        %819 = vmatprep.subr.bf16.mxu0 0
        %820 = vmatpush1.bf16.msra.mxu0 0
        %821 = vmatprep.subr.bf16.mxu0 0
        %822 = vmatpush1.bf16.msra.mxu0 0
        %823 = vmatprep.subr.bf16.mxu0 0
        %824 = vmatpush1.bf16.msra.mxu0 0
        %825 = vmatprep.subr.bf16.mxu0 0
        %826 = vmatpush1.bf16.msra.mxu0 0
        %827 = vmatprep.subr.bf16.mxu0 0
        %828 = vmatpush1.bf16.msra.mxu0 0
        %829 = vmatprep.subr.bf16.mxu0 0
        %830 = vmatpush1.bf16.msra.mxu0 0
        %831 = vmatprep.subr.bf16.mxu0 0
        %832 = vmatpush1.bf16.msra.mxu0 0
        %833 = vmatprep.subr.bf16.mxu0 0
        %834 = vmatpush1.bf16.msra.mxu0 0
        %835 = vmatprep.subr.bf16.mxu0 0
        %836 = vmatpush1.bf16.msra.mxu0 0
        %837 = vmatprep.subr.bf16.mxu0 0
        %838 = vmatpush1.bf16.msra.mxu0 0
        %839 = vmatprep.subr.bf16.mxu0 0
        %840 = vmatpush1.bf16.msra.mxu0 0
        %841 = vmatprep.mubr.bf16.mxu0 0
        %842 = vmatmul.mubr.bf16.gmra.mrb[0].mxu0 %v804
        %v843 = vpop.f32.mrb[0].mxu0
        %v844 = vadd.f32 0.0, %v843
        %v845 = vpop.f32.mrb[0].mxu0
        %v846 = vpop.f32.mrb[0].mxu0
        %v847 = vpop.f32.mrb[0].mxu0
        %848 = vdwg.mxu0
        %v849 = vpack.c.bf16 %v844, %v796
        %v852 = vunpack.c.l.b16 %v611
        %v853 = vunpack.c.l.b16 %v612
        %v854 = vpack.c.b16 %v853, %v852
        %v857 = vsel %vm496, %v849, 0
        %859 = vmatprep.subr.bf16.mxu0 0
        %860 = vmatpush1.bf16.msra.mxu0 %v854
        %861 = vmatprep.subr.bf16.mxu0 0
        %862 = vmatpush1.bf16.msra.mxu0 0
        %863 = vmatprep.subr.bf16.mxu0 0
        %864 = vmatpush1.bf16.msra.mxu0 0
        %865 = vmatprep.subr.bf16.mxu0 0
        %866 = vmatpush1.bf16.msra.mxu0 0
        %867 = vmatprep.subr.bf16.mxu0 0
        %868 = vmatpush1.bf16.msra.mxu0 0
        %869 = vmatprep.subr.bf16.mxu0 0
        %870 = vmatpush1.bf16.msra.mxu0 0
        %871 = vmatprep.subr.bf16.mxu0 0
        %872 = vmatpush1.bf16.msra.mxu0 0
        %873 = vmatprep.subr.bf16.mxu0 0
        %874 = vmatpush1.bf16.msra.mxu0 0
        %875 = vmatprep.subr.bf16.mxu0 0
        %876 = vmatpush1.bf16.msra.mxu0 0
        %877 = vmatprep.subr.bf16.mxu0 0
        %878 = vmatpush1.bf16.msra.mxu0 0
        %879 = vmatprep.subr.bf16.mxu0 0
        %880 = vmatpush1.bf16.msra.mxu0 0
        %881 = vmatprep.subr.bf16.mxu0 0
        %882 = vmatpush1.bf16.msra.mxu0 0
        %883 = vmatprep.subr.bf16.mxu0 0
        %884 = vmatpush1.bf16.msra.mxu0 0
        %885 = vmatprep.subr.bf16.mxu0 0
        %886 = vmatpush1.bf16.msra.mxu0 0
        %887 = vmatprep.subr.bf16.mxu0 0
        %888 = vmatpush1.bf16.msra.mxu0 0
        %889 = vmatprep.subr.bf16.mxu0 0
        %890 = vmatpush1.bf16.msra.mxu0 0
        %891 = vmatprep.mubr.bf16.mxu0 0
        %892 = vmatmul.mubr.bf16.gmra.mrb[0].mxu0 %v857
        %v893 = vpop.f32.mrb[0].mxu0
        %v894 = vadd.f32 0.0, %v893
        %v895 = vpop.f32.mrb[0].mxu0
        %v896 = vpop.f32.mrb[0].mxu0
        %v897 = vadd.f32 0.0, %v896
        %v898 = vpop.f32.mrb[0].mxu0
        %899 = vdwg.mxu0
        %v900 = vadd.f32 %v624, %v894
        %v901 = vadd.f32 %v625, %v897
        %902 = vrot.lane.b32.xlu0 %v629, 112
        %v903 = vpop.permute.xlu0 %902
        %904 = vrot.lane.b32.xlu0 %v629, 80
        %v905 = vpop.permute.xlu0 %904
        %v907 = vsel %vm496, %v903, 0
        %v910 = vsel %vm496, %v905, 0
        %912 = vmatprep.subr.bf16.mxu0 0
        %913 = vmatpush1.bf16.xpose.msra.mxu0 %v910
        %914 = vmatprep.subr.bf16.mxu0 0
        %915 = vmatpush1.bf16.xpose.msra.mxu0 0
        %916 = vmatprep.subr.bf16.mxu0 0
        %917 = vmatpush1.bf16.xpose.msra.mxu0 0
        %918 = vmatprep.subr.bf16.mxu0 0
        %919 = vmatpush1.bf16.xpose.msra.mxu0 0
        %920 = vmatprep.subr.bf16.mxu0 0
        %921 = vmatpush1.bf16.xpose.msra.mxu0 0
        %922 = vmatprep.subr.bf16.mxu0 0
        %923 = vmatpush1.bf16.xpose.msra.mxu0 0
        %924 = vmatprep.subr.bf16.mxu0 0
        %925 = vmatpush1.bf16.xpose.msra.mxu0 0
        %926 = vmatprep.subr.bf16.mxu0 0
        %927 = vmatpush1.bf16.xpose.msra.mxu0 0
        %928 = vmatprep.subr.bf16.mxu0 0
        %929 = vmatpush1.bf16.xpose.msra.mxu0 0
        %930 = vmatprep.subr.bf16.mxu0 0
        %931 = vmatpush1.bf16.xpose.msra.mxu0 0
        %932 = vmatprep.subr.bf16.mxu0 0
        %933 = vmatpush1.bf16.xpose.msra.mxu0 0
        %934 = vmatprep.subr.bf16.mxu0 0
        %935 = vmatpush1.bf16.xpose.msra.mxu0 0
        %936 = vmatprep.subr.bf16.mxu0 0
        %937 = vmatpush1.bf16.xpose.msra.mxu0 0
        %938 = vmatprep.subr.bf16.mxu0 0
        %939 = vmatpush1.bf16.xpose.msra.mxu0 0
        %940 = vmatprep.subr.bf16.mxu0 0
        %941 = vmatpush1.bf16.xpose.msra.mxu0 0
        %942 = vmatprep.subr.bf16.mxu0 0
        %943 = vmatpush1.bf16.xpose.msra.mxu0 0
        %944 = vmatprep.mubr.bf16.mxu0 0
        %945 = vmatmul.mubr.bf16.gmra.mrb[0].mxu0 %v907
        %v946 = vpop.f32.mrb[0].mxu0
        %v947 = vadd.f32 0.0, %v946
        %v948 = vpop.f32.mrb[0].mxu0
        %v949 = vpop.f32.mrb[0].mxu0
        %v950 = vpop.f32.mrb[0].mxu0
        %951 = vdwg.mxu0
        %952 = vrot.lane.b32.xlu0 %v630, 112
        %v953 = vpop.permute.xlu0 %952
        %954 = vrot.lane.b32.xlu0 %v630, 80
        %v955 = vpop.permute.xlu0 %954
        %v957 = vsel %vm496, %v953, 0
        %v960 = vsel %vm496, %v955, 0
        %962 = vmatprep.subr.bf16.mxu0 0
        %963 = vmatpush1.bf16.xpose.msra.mxu0 %v960
        %964 = vmatprep.subr.bf16.mxu0 0
        %965 = vmatpush1.bf16.xpose.msra.mxu0 0
        %966 = vmatprep.subr.bf16.mxu0 0
        %967 = vmatpush1.bf16.xpose.msra.mxu0 0
        %968 = vmatprep.subr.bf16.mxu0 0
        %969 = vmatpush1.bf16.xpose.msra.mxu0 0
        %970 = vmatprep.subr.bf16.mxu0 0
        %971 = vmatpush1.bf16.xpose.msra.mxu0 0
        %972 = vmatprep.subr.bf16.mxu0 0
        %973 = vmatpush1.bf16.xpose.msra.mxu0 0
        %974 = vmatprep.subr.bf16.mxu0 0
        %975 = vmatpush1.bf16.xpose.msra.mxu0 0
        %976 = vmatprep.subr.bf16.mxu0 0
        %977 = vmatpush1.bf16.xpose.msra.mxu0 0
        %978 = vmatprep.subr.bf16.mxu0 0
        %979 = vmatpush1.bf16.xpose.msra.mxu0 0
        %980 = vmatprep.subr.bf16.mxu0 0
        %981 = vmatpush1.bf16.xpose.msra.mxu0 0
        %982 = vmatprep.subr.bf16.mxu0 0
        %983 = vmatpush1.bf16.xpose.msra.mxu0 0
        %984 = vmatprep.subr.bf16.mxu0 0
        %985 = vmatpush1.bf16.xpose.msra.mxu0 0
        %986 = vmatprep.subr.bf16.mxu0 0
        %987 = vmatpush1.bf16.xpose.msra.mxu0 0
        %988 = vmatprep.subr.bf16.mxu0 0
        %989 = vmatpush1.bf16.xpose.msra.mxu0 0
        %990 = vmatprep.subr.bf16.mxu0 0
        %991 = vmatpush1.bf16.xpose.msra.mxu0 0
        %992 = vmatprep.subr.bf16.mxu0 0
        %993 = vmatpush1.bf16.xpose.msra.mxu0 0
        %994 = vmatprep.mubr.bf16.mxu0 0
        %995 = vmatmul.mubr.bf16.gmra.mrb[0].mxu0 %v957
        %v996 = vpop.f32.mrb[0].mxu0
        %v997 = vadd.f32 0.0, %v996
        %v998 = vpop.f32.mrb[0].mxu0
        %v999 = vpop.f32.mrb[0].mxu0
        %v1000 = vpop.f32.mrb[0].mxu0
        %1001 = vdwg.mxu0
        %v1002 = vsel %vm727, %v947, -inf
        %1003 = vmax.xlane.f32.xlu0 %v1002
        %v1004 = vpop.xlane.xlu0 %1003
        %v1005 = vsel %vm727, %v997, -inf
        %1006 = vmax.xlane.f32.xlu0 %v1005
        %v1007 = vpop.xlane.xlu0 %1006
        %v1008 = vsub.f32 %v947, %v1004
        %v1009 = vsub.f32 %v997, %v1007
        %v1010 = vmul.f32 %v1008, 1.442695
        %v1011 = vpow.pop %v1010
        %v1012 = vmul.f32 %v1009, 1.442695
        %v1013 = vpow.pop %v1012
        %v1014 = vsel %vm727, %v1011, 0.0
        %1015 = vadd.xlane.f32.xlu0 %v1014
        %v1016 = vpop.xlane.xlu0 %1015
        %v1017 = vsel %vm727, %v1013, 0.0
        %1018 = vadd.xlane.f32.xlu0 %v1017
        %v1019 = vpop.xlane.xlu0 %1018
        %v1020 = vrcp.pop %v1016
        %v1021 = vrcp.pop %v1019
        %v1022 = vmul.f32 %v1011, %v1020
        %v1023 = vmul.f32 %v1013, %v1021
        %v1024 = vpack.c.bf16 %v1022, %v1022
        %v1025 = vpack.c.bf16 %v1023, %v1023
        %1026 = vrot.lane.b32.xlu0 %v629, 48
        %v1027 = vpop.permute.xlu0 %1026
        %v1029 = vsel %vm727, %v1024, 0
        %v1032 = vsel %vm757, %v1027, 0
        %1034 = vmatprep.subr.bf16.mxu0 0
        %1035 = vmatpush1.bf16.msra.mxu0 %v1032
        %1036 = vmatprep.subr.bf16.mxu0 0
        %1037 = vmatpush1.bf16.msra.mxu0 0
        %1038 = vmatprep.subr.bf16.mxu0 0
        %1039 = vmatpush1.bf16.msra.mxu0 0
        %1040 = vmatprep.subr.bf16.mxu0 0
        %1041 = vmatpush1.bf16.msra.mxu0 0
        %1042 = vmatprep.subr.bf16.mxu0 0
        %1043 = vmatpush1.bf16.msra.mxu0 0
        %1044 = vmatprep.subr.bf16.mxu0 0
        %1045 = vmatpush1.bf16.msra.mxu0 0
        %1046 = vmatprep.subr.bf16.mxu0 0
        %1047 = vmatpush1.bf16.msra.mxu0 0
        %1048 = vmatprep.subr.bf16.mxu0 0
        %1049 = vmatpush1.bf16.msra.mxu0 0
        %1050 = vmatprep.subr.bf16.mxu0 0
        %1051 = vmatpush1.bf16.msra.mxu0 0
        %1052 = vmatprep.subr.bf16.mxu0 0
        %1053 = vmatpush1.bf16.msra.mxu0 0
        %1054 = vmatprep.subr.bf16.mxu0 0
        %1055 = vmatpush1.bf16.msra.mxu0 0
        %1056 = vmatprep.subr.bf16.mxu0 0
        %1057 = vmatpush1.bf16.msra.mxu0 0
        %1058 = vmatprep.subr.bf16.mxu0 0
        %1059 = vmatpush1.bf16.msra.mxu0 0
        %1060 = vmatprep.subr.bf16.mxu0 0
        %1061 = vmatpush1.bf16.msra.mxu0 0
        %1062 = vmatprep.subr.bf16.mxu0 0
        %1063 = vmatpush1.bf16.msra.mxu0 0
        %1064 = vmatprep.subr.bf16.mxu0 0
        %1065 = vmatpush1.bf16.msra.mxu0 0
        %1066 = vmatprep.mubr.bf16.mxu0 0
        %1067 = vmatmul.mubr.bf16.gmra.mrb[0].mxu0 %v1029
        %v1068 = vpop.f32.mrb[0].mxu0
        %v1069 = vadd.f32 0.0, %v1068
        %v1070 = vpop.f32.mrb[0].mxu0
        %v1071 = vpop.f32.mrb[0].mxu0
        %v1072 = vpop.f32.mrb[0].mxu0
        %1073 = vdwg.mxu0
        %1074 = vrot.lane.b32.xlu0 %v630, 48
        %v1075 = vpop.permute.xlu0 %1074
        %v1077 = vsel %vm727, %v1025, 0
        %v1080 = vsel %vm757, %v1075, 0
        %1082 = vmatprep.subr.bf16.mxu0 0
        %1083 = vmatpush1.bf16.msra.mxu0 %v1080
        %1084 = vmatprep.subr.bf16.mxu0 0
        %1085 = vmatpush1.bf16.msra.mxu0 0
        %1086 = vmatprep.subr.bf16.mxu0 0
        %1087 = vmatpush1.bf16.msra.mxu0 0
        %1088 = vmatprep.subr.bf16.mxu0 0
        %1089 = vmatpush1.bf16.msra.mxu0 0
        %1090 = vmatprep.subr.bf16.mxu0 0
        %1091 = vmatpush1.bf16.msra.mxu0 0
        %1092 = vmatprep.subr.bf16.mxu0 0
        %1093 = vmatpush1.bf16.msra.mxu0 0
        %1094 = vmatprep.subr.bf16.mxu0 0
        %1095 = vmatpush1.bf16.msra.mxu0 0
        %1096 = vmatprep.subr.bf16.mxu0 0
        %1097 = vmatpush1.bf16.msra.mxu0 0
        %1098 = vmatprep.subr.bf16.mxu0 0
        %1099 = vmatpush1.bf16.msra.mxu0 0
        %1100 = vmatprep.subr.bf16.mxu0 0
        %1101 = vmatpush1.bf16.msra.mxu0 0
        %1102 = vmatprep.subr.bf16.mxu0 0
        %1103 = vmatpush1.bf16.msra.mxu0 0
        %1104 = vmatprep.subr.bf16.mxu0 0
        %1105 = vmatpush1.bf16.msra.mxu0 0
        %1106 = vmatprep.subr.bf16.mxu0 0
        %1107 = vmatpush1.bf16.msra.mxu0 0
        %1108 = vmatprep.subr.bf16.mxu0 0
        %1109 = vmatpush1.bf16.msra.mxu0 0
        %1110 = vmatprep.subr.bf16.mxu0 0
        %1111 = vmatpush1.bf16.msra.mxu0 0
        %1112 = vmatprep.subr.bf16.mxu0 0
        %1113 = vmatpush1.bf16.msra.mxu0 0
        %1114 = vmatprep.mubr.bf16.mxu0 0
        %1115 = vmatmul.mubr.bf16.gmra.mrb[0].mxu0 %v1077
        %v1116 = vpop.f32.mrb[0].mxu0
        %v1117 = vadd.f32 0.0, %v1116
        %v1118 = vpop.f32.mrb[0].mxu0
        %v1119 = vpop.f32.mrb[0].mxu0
        %v1120 = vpop.f32.mrb[0].mxu0
        %1121 = vdwg.mxu0
        %v1122 = vpack.c.bf16 %v1117, %v1069
        %v1125 = vunpack.c.l.b16 %v613
        %v1126 = vunpack.c.l.b16 %v614
        %v1127 = vpack.c.b16 %v1126, %v1125
        %v1130 = vsel %vm496, %v1122, 0
        %1132 = vmatprep.subr.bf16.mxu0 0
        %1133 = vmatpush1.bf16.msra.mxu0 %v1127
        %1134 = vmatprep.subr.bf16.mxu0 0
        %1135 = vmatpush1.bf16.msra.mxu0 0
        %1136 = vmatprep.subr.bf16.mxu0 0
        %1137 = vmatpush1.bf16.msra.mxu0 0
        %1138 = vmatprep.subr.bf16.mxu0 0
        %1139 = vmatpush1.bf16.msra.mxu0 0
        %1140 = vmatprep.subr.bf16.mxu0 0
        %1141 = vmatpush1.bf16.msra.mxu0 0
        %1142 = vmatprep.subr.bf16.mxu0 0
        %1143 = vmatpush1.bf16.msra.mxu0 0
        %1144 = vmatprep.subr.bf16.mxu0 0
        %1145 = vmatpush1.bf16.msra.mxu0 0
        %1146 = vmatprep.subr.bf16.mxu0 0
        %1147 = vmatpush1.bf16.msra.mxu0 0
        %1148 = vmatprep.subr.bf16.mxu0 0
        %1149 = vmatpush1.bf16.msra.mxu0 0
        %1150 = vmatprep.subr.bf16.mxu0 0
        %1151 = vmatpush1.bf16.msra.mxu0 0
        %1152 = vmatprep.subr.bf16.mxu0 0
        %1153 = vmatpush1.bf16.msra.mxu0 0
        %1154 = vmatprep.subr.bf16.mxu0 0
        %1155 = vmatpush1.bf16.msra.mxu0 0
        %1156 = vmatprep.subr.bf16.mxu0 0
        %1157 = vmatpush1.bf16.msra.mxu0 0
        %1158 = vmatprep.subr.bf16.mxu0 0
        %1159 = vmatpush1.bf16.msra.mxu0 0
        %1160 = vmatprep.subr.bf16.mxu0 0
        %1161 = vmatpush1.bf16.msra.mxu0 0
        %1162 = vmatprep.subr.bf16.mxu0 0
        %1163 = vmatpush1.bf16.msra.mxu0 0
        %1164 = vmatprep.mubr.bf16.mxu0 0
        %1165 = vmatmul.mubr.bf16.gmra.mrb[0].mxu0 %v1130
        %v1166 = vpop.f32.mrb[0].mxu0
        %v1167 = vadd.f32 0.0, %v1166
        %v1168 = vpop.f32.mrb[0].mxu0
        %v1169 = vpop.f32.mrb[0].mxu0
        %v1170 = vadd.f32 0.0, %v1169
        %v1171 = vpop.f32.mrb[0].mxu0
        %1172 = vdwg.mxu0
        %v1173 = vadd.f32 %v900, %v1167
        %v1174 = vadd.f32 %v901, %v1170
        %v1175 = vsel %vm565, %v1173, 0.0
        %1176 = vadd.xlane.f32.xlu0 %v1175
        %v1177 = vpop.xlane.xlu0 %1176
        %v1178 = vsel %vm565, %v1174, 0.0
        %1179 = vadd.xlane.f32.xlu0 %v1178
        %v1180 = vpop.xlane.xlu0 %1179
        %v1181 = vrcp.pop 32.0
        %v1182 = vmul.f32 %v1177, %v1181
        %v1183 = vmul.f32 %v1180, %v1181
        %v1184 = vsub.f32 %v1173, %v1182
        %v1185 = vsub.f32 %v1174, %v1183
        %v1186 = vmul.f32 %v1184, %v1184
        %v1187 = vmul.f32 %v1185, %v1185
        %v1188 = vsel %vm565, %v1186, 0.0
        %1189 = vadd.xlane.f32.xlu0 %v1188
        %v1190 = vpop.xlane.xlu0 %1189
        %v1191 = vsel %vm565, %v1187, 0.0
        %1192 = vadd.xlane.f32.xlu0 %v1191
        %v1193 = vpop.xlane.xlu0 %1192
        %v1194 = vmul.f32 %v1190, %v1181
        %v1195 = vmul.f32 %v1193, %v1181
        %v1196 = vadd.f32 %v1194, 1e-05
        %v1197 = vadd.f32 %v1195, 1e-05
        %v1198 = vrsqrt.pop %v1196
        %v1199 = vrsqrt.pop %v1197
        %v1200 = vmul.f32 %v1184, %v1198
        %v1201 = vmul.f32 %v1185, %v1199
        %v1202 = vld [vmem:[#allocation9] sm:$0x1]
        %v1204 = vlaneseq
        %v1205 = vshrl.u32 %v1204, 7
        %v1206 = vsub.s32 0, %v1205
        %v1207 = vrot.slane %v1202, %v1206
        %v1209 = vmul.f32 %v1200, %v1207
        %v1210 = vmul.f32 %v1201, %v1207
        %v1211 = vld [vmem:[#allocation11] sm:$0x1]
        %v1213 = vlaneseq
        %v1214 = vshrl.u32 %v1213, 7
        %v1215 = vsub.s32 0, %v1214
        %v1216 = vrot.slane %v1211, %v1215
        %v1218 = vadd.f32 %v1209, %v1216
        %v1219 = vadd.f32 %v1210, %v1216
        %v1220 = vpack.c.bf16 %v1219, %v1218
        %v1221 = vunpack.c.l.bf16 %v1220
        %v1222 = vunpack.c.h.bf16 %v1220
        %v1225 = vcombine.high %v1221, %v1221
        %v1227 = vunpack.c.l.s4 1983009808
        %v1228 = vunpack.c.0.s8 %v1227
        %v1229 = vlaneseq
        %v1230 = vshrl.u32 %v1229, 7
        %v1231 = vsub.s32 %v1228, %v1230
        %v1232 = vrot.slane %v1221, %v1231
        %v1234 = vunpack.c.l.s4 1983009808
        %v1235 = vunpack.c.0.s8 %v1234
        %v1236 = vlaneseq
        %v1237 = vshrl.u32 %v1236, 7
        %v1238 = vsub.s32 %v1235, %v1237
        %v1239 = vrot.slane %v1225, %v1238
        %v1240 = vcombine.high %v1232, %v1232
        %v1241 = vcombine.high %v1239, %v1239
        %v1242 = vcombine.high %v1222, %v1222
        %v1244 = vunpack.c.l.s4 1983009808
        %v1245 = vunpack.c.0.s8 %v1244
        %v1246 = vlaneseq
        %v1247 = vshrl.u32 %v1246, 7
        %v1248 = vsub.s32 %v1245, %v1247
        %v1249 = vrot.slane %v1222, %v1248
        %v1251 = vunpack.c.l.s4 1983009808
        %v1252 = vunpack.c.0.s8 %v1251
        %v1253 = vlaneseq
        %v1254 = vshrl.u32 %v1253, 7
        %v1255 = vsub.s32 %v1252, %v1254
        %v1256 = vrot.slane %v1242, %v1255
        %v1257 = vcombine.high %v1249, %v1249
        %v1258 = vcombine.high %v1256, %v1256
        %vm1267 = vcmask 254976
        %v1268 = vsel %vm1267, %v1232, 0.0
        %v1269 = vrot.slane %v1268, 4
        %v1270 = vadd.f32 %v1268, %v1269
        %v1271 = vrot.slane %v1270, 2
        %v1272 = vadd.f32 %v1270, %v1271
        %v1273 = vrot.slane %v1272, 1
        %v1274 = vadd.f32 %v1272, %v1273
        %v1275 = vsel %vm1267, %v1240, 0.0
        %v1276 = vrot.slane %v1275, 4
        %v1277 = vadd.f32 %v1275, %v1276
        %v1278 = vrot.slane %v1277, 2
        %v1279 = vadd.f32 %v1277, %v1278
        %v1280 = vrot.slane %v1279, 1
        %v1281 = vadd.f32 %v1279, %v1280
        %v1282 = vsel %vm1267, %v1239, 0.0
        %v1283 = vrot.slane %v1282, 4
        %v1284 = vadd.f32 %v1282, %v1283
        %v1285 = vrot.slane %v1284, 2
        %v1286 = vadd.f32 %v1284, %v1285
        %v1287 = vrot.slane %v1286, 1
        %v1288 = vadd.f32 %v1286, %v1287
        %v1289 = vsel %vm1267, %v1241, 0.0
        %v1290 = vrot.slane %v1289, 4
        %v1291 = vadd.f32 %v1289, %v1290
        %v1292 = vrot.slane %v1291, 2
        %v1293 = vadd.f32 %v1291, %v1292
        %v1294 = vrot.slane %v1293, 1
        %v1295 = vadd.f32 %v1293, %v1294
        %v1296 = vsel %vm1267, %v1249, 0.0
        %v1297 = vrot.slane %v1296, 4
        %v1298 = vadd.f32 %v1296, %v1297
        %v1299 = vrot.slane %v1298, 2
        %v1300 = vadd.f32 %v1298, %v1299
        %v1301 = vrot.slane %v1300, 1
        %v1302 = vadd.f32 %v1300, %v1301
        %v1303 = vsel %vm1267, %v1257, 0.0
        %v1304 = vrot.slane %v1303, 4
        %v1305 = vadd.f32 %v1303, %v1304
        %v1306 = vrot.slane %v1305, 2
        %v1307 = vadd.f32 %v1305, %v1306
        %v1308 = vrot.slane %v1307, 1
        %v1309 = vadd.f32 %v1307, %v1308
        %v1310 = vsel %vm1267, %v1256, 0.0
        %v1311 = vrot.slane %v1310, 4
        %v1312 = vadd.f32 %v1310, %v1311
        %v1313 = vrot.slane %v1312, 2
        %v1314 = vadd.f32 %v1312, %v1313
        %v1315 = vrot.slane %v1314, 1
        %v1316 = vadd.f32 %v1314, %v1315
        %v1317 = vsel %vm1267, %v1258, 0.0
        %v1318 = vrot.slane %v1317, 4
        %v1319 = vadd.f32 %v1317, %v1318
        %v1320 = vrot.slane %v1319, 2
        %v1321 = vadd.f32 %v1319, %v1320
        %v1322 = vrot.slane %v1321, 1
        %v1323 = vadd.f32 %v1321, %v1322
        %v1324 = vrcp.pop 2.0
        %v1325 = vmul.f32 %v1274, %v1324
        %v1326 = vmul.f32 %v1281, %v1324
        %v1327 = vmul.f32 %v1288, %v1324
        %v1328 = vmul.f32 %v1295, %v1324
        %v1329 = vmul.f32 %v1302, %v1324
        %v1330 = vmul.f32 %v1309, %v1324
        %v1331 = vmul.f32 %v1316, %v1324
        %v1332 = vmul.f32 %v1323, %v1324
        %v1333 = vpack.c.bf16 %v1325, %v1325
        %v1334 = vpack.c.bf16 %v1326, %v1326
        %v1335 = vpack.c.bf16 %v1327, %v1327
        %v1336 = vpack.c.bf16 %v1328, %v1328
        %v1337 = vpack.c.bf16 %v1329, %v1329
        %v1338 = vpack.c.bf16 %v1330, %v1330
        %v1339 = vpack.c.bf16 %v1331, %v1331
        %v1340 = vpack.c.bf16 %v1332, %v1332
        %s1341 = scalar_lea.vmem %s3, 16
        %v1342 = vld [vmem:[%s1341] sm:$0xf]
        %v1343 = vld [vmem:[%s1341 + $0x4] sm:$0xf]
        %v1344 = vld [vmem:[%s1341 + $0x8] sm:$0xf]
        %v1345 = vld [vmem:[%s1341 + $0xc] sm:$0xf]
        %s1346 = scalar_lea.vmem [#allocation4], 1
        %v1347 = vld [vmem:[%s1346] sm:$0x1]
        %v1349 = vlaneseq
        %v1350 = vshrl.u32 %v1349, 7
        %v1351 = vsub.s32 0, %v1350
        %v1352 = vrot.slane %v1347, %v1351
        %v1362 = vunpack.c.l.b16 %v1333
        %v1363 = vunpack.c.l.b16 %v1334
        %v1364 = vunpack.c.l.b16 %v1335
        %v1365 = vunpack.c.l.b16 %v1336
        %v1366 = vunpack.c.l.b16 %v1337
        %v1367 = vunpack.c.l.b16 %v1338
        %v1368 = vunpack.c.l.b16 %v1339
        %v1369 = vunpack.c.l.b16 %v1340
        %vm1370 = vcmask 1041409
        %v1371 = vsel %vm1370, %v1363, %v1362
        %vm1372 = vcmask 1042434
        %v1373 = vsel %vm1372, %v1364, %v1371
        %vm1374 = vcmask 1043459
        %v1375 = vsel %vm1374, %v1365, %v1373
        %vm1376 = vcmask 1044484
        %v1377 = vsel %vm1376, %v1366, %v1375
        %vm1378 = vcmask 1045509
        %v1379 = vsel %vm1378, %v1367, %v1377
        %vm1380 = vcmask 1046534
        %v1381 = vsel %vm1380, %v1368, %v1379
        %vm1382 = vcmask 1047559
        %v1383 = vsel %vm1382, %v1369, %v1381
        %v1384 = vpack.c.b16 %v1383, %v1383
        %v1389 = vunpack.c.l.b16 %v1342
        %v1390 = vunpack.c.l.b16 %v1343
        %v1391 = vunpack.c.l.b16 %v1344
        %v1392 = vunpack.c.l.b16 %v1345
        %v1393 = vpack.c.b16 %v1390, %v1389
        %v1394 = vpack.c.b16 %v1392, %v1391
        %v1398 = vsel %vm565, %v1384, 0
        %1400 = vmatprep.subr.bf16.mxu0 0
        %1401 = vmatpush1.bf16.msra.mxu0 %v1393
        %1402 = vmatprep.subr.bf16.mxu0 0
        %1403 = vmatpush1.bf16.msra.mxu0 %v1394
        %1404 = vmatprep.subr.bf16.mxu0 0
        %1405 = vmatpush1.bf16.msra.mxu0 0
        %1406 = vmatprep.subr.bf16.mxu0 0
        %1407 = vmatpush1.bf16.msra.mxu0 0
        %1408 = vmatprep.subr.bf16.mxu0 0
        %1409 = vmatpush1.bf16.msra.mxu0 0
        %1410 = vmatprep.subr.bf16.mxu0 0
        %1411 = vmatpush1.bf16.msra.mxu0 0
        %1412 = vmatprep.subr.bf16.mxu0 0
        %1413 = vmatpush1.bf16.msra.mxu0 0
        %1414 = vmatprep.subr.bf16.mxu0 0
        %1415 = vmatpush1.bf16.msra.mxu0 0
        %1416 = vmatprep.subr.bf16.mxu0 0
        %1417 = vmatpush1.bf16.msra.mxu0 0
        %1418 = vmatprep.subr.bf16.mxu0 0
        %1419 = vmatpush1.bf16.msra.mxu0 0
        %1420 = vmatprep.subr.bf16.mxu0 0
        %1421 = vmatpush1.bf16.msra.mxu0 0
        %1422 = vmatprep.subr.bf16.mxu0 0
        %1423 = vmatpush1.bf16.msra.mxu0 0
        %1424 = vmatprep.subr.bf16.mxu0 0
        %1425 = vmatpush1.bf16.msra.mxu0 0
        %1426 = vmatprep.subr.bf16.mxu0 0
        %1427 = vmatpush1.bf16.msra.mxu0 0
        %1428 = vmatprep.subr.bf16.mxu0 0
        %1429 = vmatpush1.bf16.msra.mxu0 0
        %1430 = vmatprep.subr.bf16.mxu0 0
        %1431 = vmatpush1.bf16.msra.mxu0 0
        %1432 = vmatprep.mubr.bf16.mxu0 0
        %1433 = vmatmul.mubr.bf16.gmra.mrb[0].mxu0 %v1398
        %v1434 = vpop.f32.mrb[0].mxu0
        %v1435 = vadd.f32 %v1352, %v1434
        %v1436 = vpop.f32.mrb[0].mxu0
        %v1437 = vpop.f32.mrb[0].mxu0
        %v1438 = vpop.f32.mrb[0].mxu0
        %1439 = vdwg.mxu0
        %v1440 = vpack.c.bf16 %v1435, %v1435
        %s1441 = scalar_lea.vmem [#allocation6], 16
        %v1442 = vld [vmem:[%s1441] sm:$0xf]
        %v1443 = vld [vmem:[%s1441 + $0x4] sm:$0xf]
        %v1444 = vld [vmem:[%s1441 + $0x8] sm:$0xf]
        %v1445 = vld [vmem:[%s1441 + $0xc] sm:$0xf]
        %v1446 = vunpack.c.l.bf16 %v1333
        %v1447 = vunpack.c.l.bf16 %v1334
        %v1448 = vunpack.c.l.bf16 %v1335
        %v1449 = vunpack.c.l.bf16 %v1336
        %v1450 = vunpack.c.l.bf16 %v1337
        %v1451 = vunpack.c.l.bf16 %v1338
        %v1452 = vunpack.c.l.bf16 %v1339
        %v1453 = vunpack.c.l.bf16 %v1340
        %s1454 = scalar_lea.vmem [#allocation8], 1
        %v1455 = vld [vmem:[%s1454] sm:$0x1]
        %v1457 = vlaneseq
        %v1458 = vshrl.u32 %v1457, 7
        %v1459 = vsub.s32 0, %v1458
        %v1460 = vrot.slane %v1455, %v1459
        %v1462 = vadd.f32 %v1446, %v1460
        %v1463 = vadd.f32 %v1447, %v1460
        %v1464 = vadd.f32 %v1448, %v1460
        %v1465 = vadd.f32 %v1449, %v1460
        %v1466 = vadd.f32 %v1450, %v1460
        %v1467 = vadd.f32 %v1451, %v1460
        %v1468 = vadd.f32 %v1452, %v1460
        %v1469 = vadd.f32 %v1453, %v1460
        %v1472 = vunpack.c.l.s4 1983009808
        %v1473 = vunpack.c.0.s8 %v1472
        %v1474 = vlaneseq
        %v1475 = vshrl.u32 %v1474, 7
        %v1476 = vsub.s32 %v1473, %v1475
        %v1477 = vrot.slane %v1440, %v1476
        %v1478 = vcombine.high %v1477, %v1477
        %v1480 = vunpack.c.l.s4 1983009808
        %v1481 = vunpack.c.0.s8 %v1480
        %v1482 = vlaneseq
        %v1483 = vshrl.u32 %v1482, 7
        %v1484 = vsub.s32 %v1481, %v1483
        %v1485 = vrot.slane %v1477, %v1484
        %1486 = vrot.lane.b32.xlu0 %v1485, 96
        %v1487 = vpop.permute.xlu0 %1486
        %v1489 = vsel %vm496, %v1477, 0
        %v1492 = vsel %vm496, %v1487, 0
        %1494 = vmatprep.subr.bf16.mxu0 0
        %1495 = vmatpush1.bf16.xpose.msra.mxu0 %v1492
        %1496 = vmatprep.subr.bf16.mxu0 0
        %1497 = vmatpush1.bf16.xpose.msra.mxu0 0
        %1498 = vmatprep.subr.bf16.mxu0 0
        %1499 = vmatpush1.bf16.xpose.msra.mxu0 0
        %1500 = vmatprep.subr.bf16.mxu0 0
        %1501 = vmatpush1.bf16.xpose.msra.mxu0 0
        %1502 = vmatprep.subr.bf16.mxu0 0
        %1503 = vmatpush1.bf16.xpose.msra.mxu0 0
        %1504 = vmatprep.subr.bf16.mxu0 0
        %1505 = vmatpush1.bf16.xpose.msra.mxu0 0
        %1506 = vmatprep.subr.bf16.mxu0 0
        %1507 = vmatpush1.bf16.xpose.msra.mxu0 0
        %1508 = vmatprep.subr.bf16.mxu0 0
        %1509 = vmatpush1.bf16.xpose.msra.mxu0 0
        %1510 = vmatprep.subr.bf16.mxu0 0
        %1511 = vmatpush1.bf16.xpose.msra.mxu0 0
        %1512 = vmatprep.subr.bf16.mxu0 0
        %1513 = vmatpush1.bf16.xpose.msra.mxu0 0
        %1514 = vmatprep.subr.bf16.mxu0 0
        %1515 = vmatpush1.bf16.xpose.msra.mxu0 0
        %1516 = vmatprep.subr.bf16.mxu0 0
        %1517 = vmatpush1.bf16.xpose.msra.mxu0 0
        %1518 = vmatprep.subr.bf16.mxu0 0
        %1519 = vmatpush1.bf16.xpose.msra.mxu0 0
        %1520 = vmatprep.subr.bf16.mxu0 0
        %1521 = vmatpush1.bf16.xpose.msra.mxu0 0
        %1522 = vmatprep.subr.bf16.mxu0 0
        %1523 = vmatpush1.bf16.xpose.msra.mxu0 0
        %1524 = vmatprep.subr.bf16.mxu0 0
        %1525 = vmatpush1.bf16.xpose.msra.mxu0 0
        %1526 = vmatprep.mubr.bf16.mxu0 0
        %1527 = vmatmul.mubr.bf16.gmra.mrb[0].mxu0 %v1489
        %v1528 = vpop.f32.mrb[0].mxu0
        %v1529 = vadd.f32 0.0, %v1528
        %v1530 = vpop.f32.mrb[0].mxu0
        %v1531 = vpop.f32.mrb[0].mxu0
        %v1532 = vpop.f32.mrb[0].mxu0
        %1533 = vdwg.mxu0
        %v1535 = vunpack.c.l.s4 1983009808
        %v1536 = vunpack.c.0.s8 %v1535
        %v1537 = vlaneseq
        %v1538 = vshrl.u32 %v1537, 7
        %v1539 = vsub.s32 %v1536, %v1538
        %v1540 = vrot.slane %v1478, %v1539
        %1541 = vrot.lane.b32.xlu0 %v1540, 96
        %v1542 = vpop.permute.xlu0 %1541
        %v1544 = vsel %vm496, %v1478, 0
        %v1547 = vsel %vm496, %v1542, 0
        %1549 = vmatprep.subr.bf16.mxu0 0
        %1550 = vmatpush1.bf16.xpose.msra.mxu0 %v1547
        %1551 = vmatprep.subr.bf16.mxu0 0
        %1552 = vmatpush1.bf16.xpose.msra.mxu0 0
        %1553 = vmatprep.subr.bf16.mxu0 0
        %1554 = vmatpush1.bf16.xpose.msra.mxu0 0
        %1555 = vmatprep.subr.bf16.mxu0 0
        %1556 = vmatpush1.bf16.xpose.msra.mxu0 0
        %1557 = vmatprep.subr.bf16.mxu0 0
        %1558 = vmatpush1.bf16.xpose.msra.mxu0 0
        %1559 = vmatprep.subr.bf16.mxu0 0
        %1560 = vmatpush1.bf16.xpose.msra.mxu0 0
        %1561 = vmatprep.subr.bf16.mxu0 0
        %1562 = vmatpush1.bf16.xpose.msra.mxu0 0
        %1563 = vmatprep.subr.bf16.mxu0 0
        %1564 = vmatpush1.bf16.xpose.msra.mxu0 0
        %1565 = vmatprep.subr.bf16.mxu0 0
        %1566 = vmatpush1.bf16.xpose.msra.mxu0 0
        %1567 = vmatprep.subr.bf16.mxu0 0
        %1568 = vmatpush1.bf16.xpose.msra.mxu0 0
        %1569 = vmatprep.subr.bf16.mxu0 0
        %1570 = vmatpush1.bf16.xpose.msra.mxu0 0
        %1571 = vmatprep.subr.bf16.mxu0 0
        %1572 = vmatpush1.bf16.xpose.msra.mxu0 0
        %1573 = vmatprep.subr.bf16.mxu0 0
        %1574 = vmatpush1.bf16.xpose.msra.mxu0 0
        %1575 = vmatprep.subr.bf16.mxu0 0
        %1576 = vmatpush1.bf16.xpose.msra.mxu0 0
        %1577 = vmatprep.subr.bf16.mxu0 0
        %1578 = vmatpush1.bf16.xpose.msra.mxu0 0
        %1579 = vmatprep.subr.bf16.mxu0 0
        %1580 = vmatpush1.bf16.xpose.msra.mxu0 0
        %1581 = vmatprep.mubr.bf16.mxu0 0
        %1582 = vmatmul.mubr.bf16.gmra.mrb[0].mxu0 %v1544
        %v1583 = vpop.f32.mrb[0].mxu0
        %v1584 = vadd.f32 0.0, %v1583
        %v1585 = vpop.f32.mrb[0].mxu0
        %v1586 = vpop.f32.mrb[0].mxu0
        %v1587 = vpop.f32.mrb[0].mxu0
        %1588 = vdwg.mxu0
        %vm1589 = vcmask 27648
        %v1590 = vsel %vm1589, %v1529, -inf
        %1591 = vmax.xlane.f32.xlu0 %v1590
        %v1592 = vpop.xlane.xlu0 %1591
        %v1593 = vsel %vm1589, %v1584, -inf
        %1594 = vmax.xlane.f32.xlu0 %v1593
        %v1595 = vpop.xlane.xlu0 %1594
        %v1596 = vsub.f32 %v1529, %v1592
        %v1597 = vsub.f32 %v1584, %v1595
        %v1598 = vmul.f32 %v1596, 1.442695
        %v1599 = vpow.pop %v1598
        %v1600 = vmul.f32 %v1597, 1.442695
        %v1601 = vpow.pop %v1600
        %v1602 = vsel %vm1589, %v1599, 0.0
        %1603 = vadd.xlane.f32.xlu0 %v1602
        %v1604 = vpop.xlane.xlu0 %1603
        %v1605 = vsel %vm1589, %v1601, 0.0
        %1606 = vadd.xlane.f32.xlu0 %v1605
        %v1607 = vpop.xlane.xlu0 %1606
        %v1608 = vrcp.pop %v1604
        %v1609 = vrcp.pop %v1607
        %v1610 = vmul.f32 %v1599, %v1608
        %v1611 = vmul.f32 %v1601, %v1609
        %v1612 = vpack.c.bf16 %v1610, %v1610
        %v1613 = vpack.c.bf16 %v1611, %v1611
        %1614 = vrot.lane.b32.xlu0 %v1485, 64
        %v1615 = vpop.permute.xlu0 %1614
        %vm1616 = vcmask 31744
        %v1618 = vsel %vm1616, %v1612, 0
        %vm1620 = vcmask 1041408
        %v1622 = vsel %vm1620, %v1615, 0
        %1624 = vmatprep.subr.bf16.mxu0 0
        %1625 = vmatpush1.bf16.msra.mxu0 %v1622
        %1626 = vmatprep.subr.bf16.mxu0 0
        %1627 = vmatpush1.bf16.msra.mxu0 0
        %1628 = vmatprep.subr.bf16.mxu0 0
        %1629 = vmatpush1.bf16.msra.mxu0 0
        %1630 = vmatprep.subr.bf16.mxu0 0
        %1631 = vmatpush1.bf16.msra.mxu0 0
        %1632 = vmatprep.subr.bf16.mxu0 0
        %1633 = vmatpush1.bf16.msra.mxu0 0
        %1634 = vmatprep.subr.bf16.mxu0 0
        %1635 = vmatpush1.bf16.msra.mxu0 0
        %1636 = vmatprep.subr.bf16.mxu0 0
        %1637 = vmatpush1.bf16.msra.mxu0 0
        %1638 = vmatprep.subr.bf16.mxu0 0
        %1639 = vmatpush1.bf16.msra.mxu0 0
        %1640 = vmatprep.subr.bf16.mxu0 0
        %1641 = vmatpush1.bf16.msra.mxu0 0
        %1642 = vmatprep.subr.bf16.mxu0 0
        %1643 = vmatpush1.bf16.msra.mxu0 0
        %1644 = vmatprep.subr.bf16.mxu0 0
        %1645 = vmatpush1.bf16.msra.mxu0 0
        %1646 = vmatprep.subr.bf16.mxu0 0
        %1647 = vmatpush1.bf16.msra.mxu0 0
        %1648 = vmatprep.subr.bf16.mxu0 0
        %1649 = vmatpush1.bf16.msra.mxu0 0
        %1650 = vmatprep.subr.bf16.mxu0 0
        %1651 = vmatpush1.bf16.msra.mxu0 0
        %1652 = vmatprep.subr.bf16.mxu0 0
        %1653 = vmatpush1.bf16.msra.mxu0 0
        %1654 = vmatprep.subr.bf16.mxu0 0
        %1655 = vmatpush1.bf16.msra.mxu0 0
        %1656 = vmatprep.mubr.bf16.mxu0 0
        %1657 = vmatmul.mubr.bf16.gmra.mrb[0].mxu0 %v1618
        %v1658 = vpop.f32.mrb[0].mxu0
        %v1659 = vadd.f32 0.0, %v1658
        %v1660 = vpop.f32.mrb[0].mxu0
        %v1661 = vpop.f32.mrb[0].mxu0
        %v1662 = vpop.f32.mrb[0].mxu0
        %1663 = vdwg.mxu0
        %1664 = vrot.lane.b32.xlu0 %v1540, 64
        %v1665 = vpop.permute.xlu0 %1664
        %v1667 = vsel %vm1616, %v1613, 0
        %v1670 = vsel %vm1620, %v1665, 0
        %1672 = vmatprep.subr.bf16.mxu0 0
        %1673 = vmatpush1.bf16.msra.mxu0 %v1670
        %1674 = vmatprep.subr.bf16.mxu0 0
        %1675 = vmatpush1.bf16.msra.mxu0 0
        %1676 = vmatprep.subr.bf16.mxu0 0
        %1677 = vmatpush1.bf16.msra.mxu0 0
        %1678 = vmatprep.subr.bf16.mxu0 0
        %1679 = vmatpush1.bf16.msra.mxu0 0
        %1680 = vmatprep.subr.bf16.mxu0 0
        %1681 = vmatpush1.bf16.msra.mxu0 0
        %1682 = vmatprep.subr.bf16.mxu0 0
        %1683 = vmatpush1.bf16.msra.mxu0 0
        %1684 = vmatprep.subr.bf16.mxu0 0
        %1685 = vmatpush1.bf16.msra.mxu0 0
        %1686 = vmatprep.subr.bf16.mxu0 0
        %1687 = vmatpush1.bf16.msra.mxu0 0
        %1688 = vmatprep.subr.bf16.mxu0 0
        %1689 = vmatpush1.bf16.msra.mxu0 0
        %1690 = vmatprep.subr.bf16.mxu0 0
        %1691 = vmatpush1.bf16.msra.mxu0 0
        %1692 = vmatprep.subr.bf16.mxu0 0
        %1693 = vmatpush1.bf16.msra.mxu0 0
        %1694 = vmatprep.subr.bf16.mxu0 0
        %1695 = vmatpush1.bf16.msra.mxu0 0
        %1696 = vmatprep.subr.bf16.mxu0 0
        %1697 = vmatpush1.bf16.msra.mxu0 0
        %1698 = vmatprep.subr.bf16.mxu0 0
        %1699 = vmatpush1.bf16.msra.mxu0 0
        %1700 = vmatprep.subr.bf16.mxu0 0
        %1701 = vmatpush1.bf16.msra.mxu0 0
        %1702 = vmatprep.subr.bf16.mxu0 0
        %1703 = vmatpush1.bf16.msra.mxu0 0
        %1704 = vmatprep.mubr.bf16.mxu0 0
        %1705 = vmatmul.mubr.bf16.gmra.mrb[0].mxu0 %v1667
        %v1706 = vpop.f32.mrb[0].mxu0
        %v1707 = vadd.f32 0.0, %v1706
        %v1708 = vpop.f32.mrb[0].mxu0
        %v1709 = vpop.f32.mrb[0].mxu0
        %v1710 = vpop.f32.mrb[0].mxu0
        %1711 = vdwg.mxu0
        %v1714 = vcombine.low %v1659, %v1707
        %v1716 = vpack.c.bf16 %v1714, %v1714
        %v1719 = vunpack.c.l.b16 %v1442
        %v1720 = vunpack.c.l.b16 %v1443
        %v1721 = vpack.c.b16 %v1720, %v1719
        %v1724 = vsel %vm496, %v1716, 0
        %1726 = vmatprep.subr.bf16.mxu0 0
        %1727 = vmatpush1.bf16.msra.mxu0 %v1721
        %1728 = vmatprep.subr.bf16.mxu0 0
        %1729 = vmatpush1.bf16.msra.mxu0 0
        %1730 = vmatprep.subr.bf16.mxu0 0
        %1731 = vmatpush1.bf16.msra.mxu0 0
        %1732 = vmatprep.subr.bf16.mxu0 0
        %1733 = vmatpush1.bf16.msra.mxu0 0
        %1734 = vmatprep.subr.bf16.mxu0 0
        %1735 = vmatpush1.bf16.msra.mxu0 0
        %1736 = vmatprep.subr.bf16.mxu0 0
        %1737 = vmatpush1.bf16.msra.mxu0 0
        %1738 = vmatprep.subr.bf16.mxu0 0
        %1739 = vmatpush1.bf16.msra.mxu0 0
        %1740 = vmatprep.subr.bf16.mxu0 0
        %1741 = vmatpush1.bf16.msra.mxu0 0
        %1742 = vmatprep.subr.bf16.mxu0 0
        %1743 = vmatpush1.bf16.msra.mxu0 0
        %1744 = vmatprep.subr.bf16.mxu0 0
        %1745 = vmatpush1.bf16.msra.mxu0 0
        %1746 = vmatprep.subr.bf16.mxu0 0
        %1747 = vmatpush1.bf16.msra.mxu0 0
        %1748 = vmatprep.subr.bf16.mxu0 0
        %1749 = vmatpush1.bf16.msra.mxu0 0
        %1750 = vmatprep.subr.bf16.mxu0 0
        %1751 = vmatpush1.bf16.msra.mxu0 0
        %1752 = vmatprep.subr.bf16.mxu0 0
        %1753 = vmatpush1.bf16.msra.mxu0 0
        %1754 = vmatprep.subr.bf16.mxu0 0
        %1755 = vmatpush1.bf16.msra.mxu0 0
        %1756 = vmatprep.subr.bf16.mxu0 0
        %1757 = vmatpush1.bf16.msra.mxu0 0
        %1758 = vmatprep.mubr.bf16.mxu0 0
        %1759 = vmatmul.mubr.bf16.gmra.mrb[0].mxu0 %v1724
        %v1760 = vpop.f32.mrb[0].mxu0
        %v1761 = vadd.f32 0.0, %v1760
        %v1762 = vpop.f32.mrb[0].mxu0
        %v1763 = vpop.f32.mrb[0].mxu0
        %v1764 = vpop.f32.mrb[0].mxu0
        %1765 = vdwg.mxu0
        %v1767 = vrot.slane %v1761, 1
        %v1768 = vrot.slane %v1761, 2
        %v1769 = vrot.slane %v1761, 3
        %v1770 = vrot.slane %v1761, 4
        %v1771 = vrot.slane %v1761, 5
        %v1772 = vrot.slane %v1761, 6
        %v1773 = vrot.slane %v1761, 7
        %v1782 = vadd.f32 %v1462, %v1761
        %v1783 = vadd.f32 %v1463, %v1767
        %v1784 = vadd.f32 %v1464, %v1768
        %v1785 = vadd.f32 %v1465, %v1769
        %v1786 = vadd.f32 %v1466, %v1770
        %v1787 = vadd.f32 %v1467, %v1771
        %v1788 = vadd.f32 %v1468, %v1772
        %v1789 = vadd.f32 %v1469, %v1773
        %1790 = vrot.lane.b32.xlu0 %v1485, 112
        %v1791 = vpop.permute.xlu0 %1790
        %1792 = vrot.lane.b32.xlu0 %v1485, 80
        %v1793 = vpop.permute.xlu0 %1792
        %v1795 = vsel %vm496, %v1791, 0
        %v1798 = vsel %vm496, %v1793, 0
        %1800 = vmatprep.subr.bf16.mxu0 0
        %1801 = vmatpush1.bf16.xpose.msra.mxu0 %v1798
        %1802 = vmatprep.subr.bf16.mxu0 0
        %1803 = vmatpush1.bf16.xpose.msra.mxu0 0
        %1804 = vmatprep.subr.bf16.mxu0 0
        %1805 = vmatpush1.bf16.xpose.msra.mxu0 0
        %1806 = vmatprep.subr.bf16.mxu0 0
        %1807 = vmatpush1.bf16.xpose.msra.mxu0 0
        %1808 = vmatprep.subr.bf16.mxu0 0
        %1809 = vmatpush1.bf16.xpose.msra.mxu0 0
        %1810 = vmatprep.subr.bf16.mxu0 0
        %1811 = vmatpush1.bf16.xpose.msra.mxu0 0
        %1812 = vmatprep.subr.bf16.mxu0 0
        %1813 = vmatpush1.bf16.xpose.msra.mxu0 0
        %1814 = vmatprep.subr.bf16.mxu0 0
        %1815 = vmatpush1.bf16.xpose.msra.mxu0 0
        %1816 = vmatprep.subr.bf16.mxu0 0
        %1817 = vmatpush1.bf16.xpose.msra.mxu0 0
        %1818 = vmatprep.subr.bf16.mxu0 0
        %1819 = vmatpush1.bf16.xpose.msra.mxu0 0
        %1820 = vmatprep.subr.bf16.mxu0 0
        %1821 = vmatpush1.bf16.xpose.msra.mxu0 0
        %1822 = vmatprep.subr.bf16.mxu0 0
        %1823 = vmatpush1.bf16.xpose.msra.mxu0 0
        %1824 = vmatprep.subr.bf16.mxu0 0
        %1825 = vmatpush1.bf16.xpose.msra.mxu0 0
        %1826 = vmatprep.subr.bf16.mxu0 0
        %1827 = vmatpush1.bf16.xpose.msra.mxu0 0
        %1828 = vmatprep.subr.bf16.mxu0 0
        %1829 = vmatpush1.bf16.xpose.msra.mxu0 0
        %1830 = vmatprep.subr.bf16.mxu0 0
        %1831 = vmatpush1.bf16.xpose.msra.mxu0 0
        %1832 = vmatprep.mubr.bf16.mxu0 0
        %1833 = vmatmul.mubr.bf16.gmra.mrb[0].mxu0 %v1795
        %v1834 = vpop.f32.mrb[0].mxu0
        %v1835 = vadd.f32 0.0, %v1834
        %v1836 = vpop.f32.mrb[0].mxu0
        %v1837 = vpop.f32.mrb[0].mxu0
        %v1838 = vpop.f32.mrb[0].mxu0
        %1839 = vdwg.mxu0
        %1840 = vrot.lane.b32.xlu0 %v1540, 112
        %v1841 = vpop.permute.xlu0 %1840
        %1842 = vrot.lane.b32.xlu0 %v1540, 80
        %v1843 = vpop.permute.xlu0 %1842
        %v1845 = vsel %vm496, %v1841, 0
        %v1848 = vsel %vm496, %v1843, 0
        %1850 = vmatprep.subr.bf16.mxu0 0
        %1851 = vmatpush1.bf16.xpose.msra.mxu0 %v1848
        %1852 = vmatprep.subr.bf16.mxu0 0
        %1853 = vmatpush1.bf16.xpose.msra.mxu0 0
        %1854 = vmatprep.subr.bf16.mxu0 0
        %1855 = vmatpush1.bf16.xpose.msra.mxu0 0
        %1856 = vmatprep.subr.bf16.mxu0 0
        %1857 = vmatpush1.bf16.xpose.msra.mxu0 0
        %1858 = vmatprep.subr.bf16.mxu0 0
        %1859 = vmatpush1.bf16.xpose.msra.mxu0 0
        %1860 = vmatprep.subr.bf16.mxu0 0
        %1861 = vmatpush1.bf16.xpose.msra.mxu0 0
        %1862 = vmatprep.subr.bf16.mxu0 0
        %1863 = vmatpush1.bf16.xpose.msra.mxu0 0
        %1864 = vmatprep.subr.bf16.mxu0 0
        %1865 = vmatpush1.bf16.xpose.msra.mxu0 0
        %1866 = vmatprep.subr.bf16.mxu0 0
        %1867 = vmatpush1.bf16.xpose.msra.mxu0 0
        %1868 = vmatprep.subr.bf16.mxu0 0
        %1869 = vmatpush1.bf16.xpose.msra.mxu0 0
        %1870 = vmatprep.subr.bf16.mxu0 0
        %1871 = vmatpush1.bf16.xpose.msra.mxu0 0
        %1872 = vmatprep.subr.bf16.mxu0 0
        %1873 = vmatpush1.bf16.xpose.msra.mxu0 0
        %1874 = vmatprep.subr.bf16.mxu0 0
        %1875 = vmatpush1.bf16.xpose.msra.mxu0 0
        %1876 = vmatprep.subr.bf16.mxu0 0
        %1877 = vmatpush1.bf16.xpose.msra.mxu0 0
        %1878 = vmatprep.subr.bf16.mxu0 0
        %1879 = vmatpush1.bf16.xpose.msra.mxu0 0
        %1880 = vmatprep.subr.bf16.mxu0 0
        %1881 = vmatpush1.bf16.xpose.msra.mxu0 0
        %1882 = vmatprep.mubr.bf16.mxu0 0
        %1883 = vmatmul.mubr.bf16.gmra.mrb[0].mxu0 %v1845
        %v1884 = vpop.f32.mrb[0].mxu0
        %v1885 = vadd.f32 0.0, %v1884
        %v1886 = vpop.f32.mrb[0].mxu0
        %v1887 = vpop.f32.mrb[0].mxu0
        %v1888 = vpop.f32.mrb[0].mxu0
        %1889 = vdwg.mxu0
        %v1890 = vsel %vm1589, %v1835, -inf
        %1891 = vmax.xlane.f32.xlu0 %v1890
        %v1892 = vpop.xlane.xlu0 %1891
        %v1893 = vsel %vm1589, %v1885, -inf
        %1894 = vmax.xlane.f32.xlu0 %v1893
        %v1895 = vpop.xlane.xlu0 %1894
        %v1896 = vsub.f32 %v1835, %v1892
        %v1897 = vsub.f32 %v1885, %v1895
        %v1898 = vmul.f32 %v1896, 1.442695
        %v1899 = vpow.pop %v1898
        %v1900 = vmul.f32 %v1897, 1.442695
        %v1901 = vpow.pop %v1900
        %v1902 = vsel %vm1589, %v1899, 0.0
        %1903 = vadd.xlane.f32.xlu0 %v1902
        %v1904 = vpop.xlane.xlu0 %1903
        %v1905 = vsel %vm1589, %v1901, 0.0
        %1906 = vadd.xlane.f32.xlu0 %v1905
        %v1907 = vpop.xlane.xlu0 %1906
        %v1908 = vrcp.pop %v1904
        %v1909 = vrcp.pop %v1907
        %v1910 = vmul.f32 %v1899, %v1908
        %v1911 = vmul.f32 %v1901, %v1909
        %v1912 = vpack.c.bf16 %v1910, %v1910
        %v1913 = vpack.c.bf16 %v1911, %v1911
        %1914 = vrot.lane.b32.xlu0 %v1485, 48
        %v1915 = vpop.permute.xlu0 %1914
        %v1917 = vsel %vm1616, %v1912, 0
        %v1920 = vsel %vm1620, %v1915, 0
        %1922 = vmatprep.subr.bf16.mxu0 0
        %1923 = vmatpush1.bf16.msra.mxu0 %v1920
        %1924 = vmatprep.subr.bf16.mxu0 0
        %1925 = vmatpush1.bf16.msra.mxu0 0
        %1926 = vmatprep.subr.bf16.mxu0 0
        %1927 = vmatpush1.bf16.msra.mxu0 0
        %1928 = vmatprep.subr.bf16.mxu0 0
        %1929 = vmatpush1.bf16.msra.mxu0 0
        %1930 = vmatprep.subr.bf16.mxu0 0
        %1931 = vmatpush1.bf16.msra.mxu0 0
        %1932 = vmatprep.subr.bf16.mxu0 0
        %1933 = vmatpush1.bf16.msra.mxu0 0
        %1934 = vmatprep.subr.bf16.mxu0 0
        %1935 = vmatpush1.bf16.msra.mxu0 0
        %1936 = vmatprep.subr.bf16.mxu0 0
        %1937 = vmatpush1.bf16.msra.mxu0 0
        %1938 = vmatprep.subr.bf16.mxu0 0
        %1939 = vmatpush1.bf16.msra.mxu0 0
        %1940 = vmatprep.subr.bf16.mxu0 0
        %1941 = vmatpush1.bf16.msra.mxu0 0
        %1942 = vmatprep.subr.bf16.mxu0 0
        %1943 = vmatpush1.bf16.msra.mxu0 0
        %1944 = vmatprep.subr.bf16.mxu0 0
        %1945 = vmatpush1.bf16.msra.mxu0 0
        %1946 = vmatprep.subr.bf16.mxu0 0
        %1947 = vmatpush1.bf16.msra.mxu0 0
        %1948 = vmatprep.subr.bf16.mxu0 0
        %1949 = vmatpush1.bf16.msra.mxu0 0
        %1950 = vmatprep.subr.bf16.mxu0 0
        %1951 = vmatpush1.bf16.msra.mxu0 0
        %1952 = vmatprep.subr.bf16.mxu0 0
        %1953 = vmatpush1.bf16.msra.mxu0 0
        %1954 = vmatprep.mubr.bf16.mxu0 0
        %1955 = vmatmul.mubr.bf16.gmra.mrb[0].mxu0 %v1917
        %v1956 = vpop.f32.mrb[0].mxu0
        %v1957 = vadd.f32 0.0, %v1956
        %v1958 = vpop.f32.mrb[0].mxu0
        %v1959 = vpop.f32.mrb[0].mxu0
        %v1960 = vpop.f32.mrb[0].mxu0
        %1961 = vdwg.mxu0
        %1962 = vrot.lane.b32.xlu0 %v1540, 48
        %v1963 = vpop.permute.xlu0 %1962
        %v1965 = vsel %vm1616, %v1913, 0
        %v1968 = vsel %vm1620, %v1963, 0
        %1970 = vmatprep.subr.bf16.mxu0 0
        %1971 = vmatpush1.bf16.msra.mxu0 %v1968
        %1972 = vmatprep.subr.bf16.mxu0 0
        %1973 = vmatpush1.bf16.msra.mxu0 0
        %1974 = vmatprep.subr.bf16.mxu0 0
        %1975 = vmatpush1.bf16.msra.mxu0 0
        %1976 = vmatprep.subr.bf16.mxu0 0
        %1977 = vmatpush1.bf16.msra.mxu0 0
        %1978 = vmatprep.subr.bf16.mxu0 0
        %1979 = vmatpush1.bf16.msra.mxu0 0
        %1980 = vmatprep.subr.bf16.mxu0 0
        %1981 = vmatpush1.bf16.msra.mxu0 0
        %1982 = vmatprep.subr.bf16.mxu0 0
        %1983 = vmatpush1.bf16.msra.mxu0 0
        %1984 = vmatprep.subr.bf16.mxu0 0
        %1985 = vmatpush1.bf16.msra.mxu0 0
        %1986 = vmatprep.subr.bf16.mxu0 0
        %1987 = vmatpush1.bf16.msra.mxu0 0
        %1988 = vmatprep.subr.bf16.mxu0 0
        %1989 = vmatpush1.bf16.msra.mxu0 0
        %1990 = vmatprep.subr.bf16.mxu0 0
        %1991 = vmatpush1.bf16.msra.mxu0 0
        %1992 = vmatprep.subr.bf16.mxu0 0
        %1993 = vmatpush1.bf16.msra.mxu0 0
        %1994 = vmatprep.subr.bf16.mxu0 0
        %1995 = vmatpush1.bf16.msra.mxu0 0
        %1996 = vmatprep.subr.bf16.mxu0 0
        %1997 = vmatpush1.bf16.msra.mxu0 0
        %1998 = vmatprep.subr.bf16.mxu0 0
        %1999 = vmatpush1.bf16.msra.mxu0 0
        %2000 = vmatprep.subr.bf16.mxu0 0
        %2001 = vmatpush1.bf16.msra.mxu0 0
        %2002 = vmatprep.mubr.bf16.mxu0 0
        %2003 = vmatmul.mubr.bf16.gmra.mrb[0].mxu0 %v1965
        %v2004 = vpop.f32.mrb[0].mxu0
        %v2005 = vadd.f32 0.0, %v2004
        %v2006 = vpop.f32.mrb[0].mxu0
        %v2007 = vpop.f32.mrb[0].mxu0
        %v2008 = vpop.f32.mrb[0].mxu0
        %2009 = vdwg.mxu0
        %v2012 = vcombine.low %v1957, %v2005
        %v2014 = vpack.c.bf16 %v2012, %v2012
        %v2017 = vunpack.c.l.b16 %v1444
        %v2018 = vunpack.c.l.b16 %v1445
        %v2019 = vpack.c.b16 %v2018, %v2017
        %v2022 = vsel %vm496, %v2014, 0
        %2024 = vmatprep.subr.bf16.mxu0 0
        %2025 = vmatpush1.bf16.msra.mxu0 %v2019
        %2026 = vmatprep.subr.bf16.mxu0 0
        %2027 = vmatpush1.bf16.msra.mxu0 0
        %2028 = vmatprep.subr.bf16.mxu0 0
        %2029 = vmatpush1.bf16.msra.mxu0 0
        %2030 = vmatprep.subr.bf16.mxu0 0
        %2031 = vmatpush1.bf16.msra.mxu0 0
        %2032 = vmatprep.subr.bf16.mxu0 0
        %2033 = vmatpush1.bf16.msra.mxu0 0
        %2034 = vmatprep.subr.bf16.mxu0 0
        %2035 = vmatpush1.bf16.msra.mxu0 0
        %2036 = vmatprep.subr.bf16.mxu0 0
        %2037 = vmatpush1.bf16.msra.mxu0 0
        %2038 = vmatprep.subr.bf16.mxu0 0
        %2039 = vmatpush1.bf16.msra.mxu0 0
        %2040 = vmatprep.subr.bf16.mxu0 0
        %2041 = vmatpush1.bf16.msra.mxu0 0
        %2042 = vmatprep.subr.bf16.mxu0 0
        %2043 = vmatpush1.bf16.msra.mxu0 0
        %2044 = vmatprep.subr.bf16.mxu0 0
        %2045 = vmatpush1.bf16.msra.mxu0 0
        %2046 = vmatprep.subr.bf16.mxu0 0
        %2047 = vmatpush1.bf16.msra.mxu0 0
        %2048 = vmatprep.subr.bf16.mxu0 0
        %2049 = vmatpush1.bf16.msra.mxu0 0
        %2050 = vmatprep.subr.bf16.mxu0 0
        %2051 = vmatpush1.bf16.msra.mxu0 0
        %2052 = vmatprep.subr.bf16.mxu0 0
        %2053 = vmatpush1.bf16.msra.mxu0 0
        %2054 = vmatprep.subr.bf16.mxu0 0
        %2055 = vmatpush1.bf16.msra.mxu0 0
        %2056 = vmatprep.mubr.bf16.mxu0 0
        %2057 = vmatmul.mubr.bf16.gmra.mrb[0].mxu0 %v2022
        %v2058 = vpop.f32.mrb[0].mxu0
        %v2059 = vadd.f32 0.0, %v2058
        %v2060 = vpop.f32.mrb[0].mxu0
        %v2061 = vpop.f32.mrb[0].mxu0
        %v2062 = vpop.f32.mrb[0].mxu0
        %2063 = vdwg.mxu0
        %v2065 = vrot.slane %v2059, 1
        %v2066 = vrot.slane %v2059, 2
        %v2067 = vrot.slane %v2059, 3
        %v2068 = vrot.slane %v2059, 4
        %v2069 = vrot.slane %v2059, 5
        %v2070 = vrot.slane %v2059, 6
        %v2071 = vrot.slane %v2059, 7
        %v2080 = vadd.f32 %v1782, %v2059
        %v2081 = vadd.f32 %v1783, %v2065
        %v2082 = vadd.f32 %v1784, %v2066
        %v2083 = vadd.f32 %v1785, %v2067
        %v2084 = vadd.f32 %v1786, %v2068
        %v2085 = vadd.f32 %v1787, %v2069
        %v2086 = vadd.f32 %v1788, %v2070
        %v2087 = vadd.f32 %v1789, %v2071
        %v2096 = vrot.slane %v2081, 7
        %v2097 = vsel %vm1370, %v2096, %v2080
        %v2098 = vrot.slane %v2082, 6
        %v2099 = vsel %vm1372, %v2098, %v2097
        %v2100 = vrot.slane %v2083, 5
        %v2101 = vsel %vm1374, %v2100, %v2099
        %v2102 = vrot.slane %v2084, 4
        %v2103 = vsel %vm1376, %v2102, %v2101
        %v2104 = vrot.slane %v2085, 3
        %v2105 = vsel %vm1378, %v2104, %v2103
        %v2106 = vrot.slane %v2086, 2
        %v2107 = vsel %vm1380, %v2106, %v2105
        %v2108 = vrot.slane %v2087, 1
        %v2109 = vsel %vm1382, %v2108, %v2107
        %v2111 = vsel %vm565, %v2109, 0.0
        %2112 = vadd.xlane.f32.xlu0 %v2111
        %v2113 = vpop.xlane.xlu0 %2112
        %v2114 = vmul.f32 %v2113, %v1181
        %v2116 = vrot.slane %v2114, 1
        %v2117 = vrot.slane %v2114, 2
        %v2118 = vrot.slane %v2114, 3
        %v2119 = vrot.slane %v2114, 4
        %v2120 = vrot.slane %v2114, 5
        %v2121 = vrot.slane %v2114, 6
        %v2122 = vrot.slane %v2114, 7
        %v2131 = vsub.f32 %v2080, %v2114
        %v2132 = vsub.f32 %v2081, %v2116
        %v2133 = vsub.f32 %v2082, %v2117
        %v2134 = vsub.f32 %v2083, %v2118
        %v2135 = vsub.f32 %v2084, %v2119
        %v2136 = vsub.f32 %v2085, %v2120
        %v2137 = vsub.f32 %v2086, %v2121
        %v2138 = vsub.f32 %v2087, %v2122
        %v2139 = vmul.f32 %v2131, %v2131
        %v2140 = vmul.f32 %v2132, %v2132
        %v2141 = vmul.f32 %v2133, %v2133
        %v2142 = vmul.f32 %v2134, %v2134
        %v2143 = vmul.f32 %v2135, %v2135
        %v2144 = vmul.f32 %v2136, %v2136
        %v2145 = vmul.f32 %v2137, %v2137
        %v2146 = vmul.f32 %v2138, %v2138
        %v2155 = vrot.slane %v2140, 7
        %v2156 = vsel %vm1370, %v2155, %v2139
        %v2157 = vrot.slane %v2141, 6
        %v2158 = vsel %vm1372, %v2157, %v2156
        %v2159 = vrot.slane %v2142, 5
        %v2160 = vsel %vm1374, %v2159, %v2158
        %v2161 = vrot.slane %v2143, 4
        %v2162 = vsel %vm1376, %v2161, %v2160
        %v2163 = vrot.slane %v2144, 3
        %v2164 = vsel %vm1378, %v2163, %v2162
        %v2165 = vrot.slane %v2145, 2
        %v2166 = vsel %vm1380, %v2165, %v2164
        %v2167 = vrot.slane %v2146, 1
        %v2168 = vsel %vm1382, %v2167, %v2166
        %v2170 = vsel %vm565, %v2168, 0.0
        %2171 = vadd.xlane.f32.xlu0 %v2170
        %v2172 = vpop.xlane.xlu0 %2171
        %v2173 = vmul.f32 %v2172, %v1181
        %v2174 = vadd.f32 %v2173, 1e-05
        %v2175 = vrsqrt.pop %v2174
        %v2177 = vrot.slane %v2175, 1
        %v2178 = vrot.slane %v2175, 2
        %v2179 = vrot.slane %v2175, 3
        %v2180 = vrot.slane %v2175, 4
        %v2181 = vrot.slane %v2175, 5
        %v2182 = vrot.slane %v2175, 6
        %v2183 = vrot.slane %v2175, 7
        %v2192 = vmul.f32 %v2131, %v2175
        %v2193 = vmul.f32 %v2132, %v2177
        %v2194 = vmul.f32 %v2133, %v2178
        %v2195 = vmul.f32 %v2134, %v2179
        %v2196 = vmul.f32 %v2135, %v2180
        %v2197 = vmul.f32 %v2136, %v2181
        %v2198 = vmul.f32 %v2137, %v2182
        %v2199 = vmul.f32 %v2138, %v2183
        %s2200 = scalar_lea.vmem [#allocation9], 1
        %v2201 = vld [vmem:[%s2200] sm:$0x1]
        %v2203 = vlaneseq
        %v2204 = vshrl.u32 %v2203, 7
        %v2205 = vsub.s32 0, %v2204
        %v2206 = vrot.slane %v2201, %v2205
        %v2208 = vmul.f32 %v2192, %v2206
        %v2209 = vmul.f32 %v2193, %v2206
        %v2210 = vmul.f32 %v2194, %v2206
        %v2211 = vmul.f32 %v2195, %v2206
        %v2212 = vmul.f32 %v2196, %v2206
        %v2213 = vmul.f32 %v2197, %v2206
        %v2214 = vmul.f32 %v2198, %v2206
        %v2215 = vmul.f32 %v2199, %v2206
        %s2216 = scalar_lea.vmem [#allocation11], 1
        %v2217 = vld [vmem:[%s2216] sm:$0x1]
        %v2219 = vlaneseq
        %v2220 = vshrl.u32 %v2219, 7
        %v2221 = vsub.s32 0, %v2220
        %v2222 = vrot.slane %v2217, %v2221
        %v2224 = vadd.f32 %v2208, %v2222
        %v2225 = vadd.f32 %v2209, %v2222
        %v2226 = vadd.f32 %v2210, %v2222
        %v2227 = vadd.f32 %v2211, %v2222
        %v2228 = vadd.f32 %v2212, %v2222
        %v2229 = vadd.f32 %v2213, %v2222
        %v2230 = vadd.f32 %v2214, %v2222
        %v2231 = vadd.f32 %v2215, %v2222
        %v2232 = vpack.c.bf16 %v2224, %v2224
        %v2233 = vpack.c.bf16 %v2225, %v2225
        %v2234 = vpack.c.bf16 %v2226, %v2226
        %v2235 = vpack.c.bf16 %v2227, %v2227
        %v2236 = vpack.c.bf16 %v2228, %v2228
        %v2237 = vpack.c.bf16 %v2229, %v2229
        %v2238 = vpack.c.bf16 %v2230, %v2230
        %v2239 = vpack.c.bf16 %v2231, %v2231
        %v2240 = vunpack.c.l.bf16 %v2232
        %v2241 = vunpack.c.l.bf16 %v2233
        %v2242 = vunpack.c.l.bf16 %v2234
        %v2243 = vunpack.c.l.bf16 %v2235
        %v2244 = vunpack.c.l.bf16 %v2236
        %v2245 = vunpack.c.l.bf16 %v2237
        %v2246 = vunpack.c.l.bf16 %v2238
        %v2247 = vunpack.c.l.bf16 %v2239
        %v2256 = vrot.slane %v2241, 7
        %v2257 = vsel %vm1370, %v2256, %v2240
        %v2258 = vrot.slane %v2243, 7
        %v2259 = vsel %vm1370, %v2258, %v2242
        %v2260 = vrot.slane %v2245, 7
        %v2261 = vsel %vm1370, %v2260, %v2244
        %v2262 = vrot.slane %v2247, 7
        %v2263 = vsel %vm1370, %v2262, %v2246
        %v2268 = vsel %vm1267, %v2257, 0.0
        %v2269 = vrot.slane %v2268, 4
        %v2270 = vadd.f32 %v2268, %v2269
        %v2271 = vrot.slane %v2270, 2
        %v2272 = vadd.f32 %v2270, %v2271
        %v2273 = vrot.slane %v2272, 1
        %v2274 = vadd.f32 %v2272, %v2273
        %v2275 = vsel %vm1267, %v2259, 0.0
        %v2276 = vrot.slane %v2275, 4
        %v2277 = vadd.f32 %v2275, %v2276
        %v2278 = vrot.slane %v2277, 2
        %v2279 = vadd.f32 %v2277, %v2278
        %v2280 = vrot.slane %v2279, 1
        %v2281 = vadd.f32 %v2279, %v2280
        %v2282 = vsel %vm1267, %v2261, 0.0
        %v2283 = vrot.slane %v2282, 4
        %v2284 = vadd.f32 %v2282, %v2283
        %v2285 = vrot.slane %v2284, 2
        %v2286 = vadd.f32 %v2284, %v2285
        %v2287 = vrot.slane %v2286, 1
        %v2288 = vadd.f32 %v2286, %v2287
        %v2289 = vsel %vm1267, %v2263, 0.0
        %v2290 = vrot.slane %v2289, 4
        %v2291 = vadd.f32 %v2289, %v2290
        %v2292 = vrot.slane %v2291, 2
        %v2293 = vadd.f32 %v2291, %v2292
        %v2294 = vrot.slane %v2293, 1
        %v2295 = vadd.f32 %v2293, %v2294
        %v2296 = vmul.f32 %v2274, %v1324
        %v2297 = vmul.f32 %v2281, %v1324
        %v2298 = vmul.f32 %v2288, %v1324
        %v2299 = vmul.f32 %v2295, %v1324
        %v2300 = vpack.c.bf16 %v2296, %v2296
        %v2301 = vpack.c.bf16 %v2297, %v2297
        %v2302 = vpack.c.bf16 %v2298, %v2298
        %v2303 = vpack.c.bf16 %v2299, %v2299
        %vm2304 = vcmask 253952
        %2305 = vst.msk [vmem:[#allocation2] sm:$0x1] %vm2304, 0.5
        %2306 = vst.msk [vmem:[#allocation2 + $0x4] sm:$0x1] %vm2304, 0.5
        %v2307 = vunpack.c.l.bf16 %v2300
        %v2308 = vunpack.c.l.bf16 %v2301
        %v2309 = vunpack.c.l.bf16 %v2302
        %v2310 = vunpack.c.l.bf16 %v2303
        %v2315 = vrot.slane %v2308, 7
        %v2316 = vsel %vm1370, %v2315, %v2307
        %v2317 = vrot.slane %v2310, 7
        %v2318 = vsel %vm1370, %v2317, %v2309
        %2321 = vst.msk [vmem:[#allocation2 + $0x1] sm:$0x3] %vm1267, %v2316
        %2322 = vst.msk [vmem:[#allocation2 + $0x5] sm:$0x3] %vm1267, %v2318
        %v2323 = vld [vmem:[#allocation2] sm:$0x7]
        %v2324 = vld [vmem:[#allocation2 + $0x4] sm:$0x7]
        %v2325 = vpack.c.bf16 %v2323, %v2323
        %v2326 = vpack.c.bf16 %v2324, %v2324
        %v2330 = vunpack.c.l.s4 1966171168
        %v2331 = vunpack.c.0.s8 %v2330
        %v2332 = vlaneseq
        %v2333 = vshrl.u32 %v2332, 7
        %v2334 = vsub.s32 %v2331, %v2333
        %v2335 = vrot.slane %v2325, %v2334
        %v2336 = vcombine.high %v2335, %v2335
        %v2338 = vunpack.c.l.s4 1966171168
        %v2339 = vunpack.c.0.s8 %v2338
        %v2340 = vlaneseq
        %v2341 = vshrl.u32 %v2340, 7
        %v2342 = vsub.s32 %v2339, %v2341
        %v2343 = vrot.slane %v2335, %v2342
        %v2345 = vunpack.c.l.s4 1966171168
        %v2346 = vunpack.c.0.s8 %v2345
        %v2347 = vlaneseq
        %v2348 = vshrl.u32 %v2347, 7
        %v2349 = vsub.s32 %v2346, %v2348
        %v2350 = vrot.slane %v2336, %v2349
        %v2352 = vunpack.c.l.s4 1966171168
        %v2353 = vunpack.c.0.s8 %v2352
        %v2354 = vlaneseq
        %v2355 = vshrl.u32 %v2354, 7
        %v2356 = vsub.s32 %v2353, %v2355
        %v2357 = vrot.slane %v2326, %v2356
        %v2358 = vcombine.high %v2357, %v2357
        %v2360 = vunpack.c.l.s4 1966171168
        %v2361 = vunpack.c.0.s8 %v2360
        %v2362 = vlaneseq
        %v2363 = vshrl.u32 %v2362, 7
        %v2364 = vsub.s32 %v2361, %v2363
        %v2365 = vrot.slane %v2357, %v2364
        %v2367 = vunpack.c.l.s4 1966171168
        %v2368 = vunpack.c.0.s8 %v2367
        %v2369 = vlaneseq
        %v2370 = vshrl.u32 %v2369, 7
        %v2371 = vsub.s32 %v2368, %v2370
        %v2372 = vrot.slane %v2358, %v2371
        %v2373 = vunpack.i.l.s16 %v2343
        %v2374 = vunpack.i.h.s16 %v2343
        %v2375 = vunpack.i.l.s16 %v2350
        %v2376 = vunpack.i.l.s16 %v2365
        %v2377 = vunpack.i.h.s16 %v2365
        %v2378 = vunpack.i.l.s16 %v2372
        %s2379 = scalar_lea.vmem %s3, 32
        %v2380 = vld [vmem:[%s2379] sm:$0xf]
        %v2381 = vld [vmem:[%s2379 + $0x4] sm:$0xf]
        %v2382 = vld [vmem:[%s2379 + $0x8] sm:$0xf]
        %v2383 = vld [vmem:[%s2379 + $0xc] sm:$0xf]
        %s2384 = scalar_lea.vmem [#allocation4], 2
        %v2385 = vld [vmem:[%s2384] sm:$0x1]
        %v2387 = vlaneseq
        %v2388 = vshrl.u32 %v2387, 7
        %v2389 = vsub.s32 0, %v2388
        %v2390 = vrot.slane %v2385, %v2389
        %v2392 = vpack.i.b16 %v2374, %v2373
        %v2393 = vpack.i.b16 %v2376, %v2375
        %v2394 = vpack.i.b16 %v2378, %v2377
        %v2395 = vcombine.low %v2392, %v2393
        %v2397 = vunpack.c.l.s4 1966171168
        %v2398 = vunpack.c.0.s8 %v2397
        %v2399 = vlaneseq
        %v2400 = vshrl.u32 %v2399, 7
        %v2401 = vsub.s32 %v2398, %v2400
        %v2402 = vrot.slane %v2395, %v2401
        %v2404 = vunpack.c.l.s4 1966171168
        %v2405 = vunpack.c.0.s8 %v2404
        %v2406 = vlaneseq
        %v2407 = vshrl.u32 %v2406, 7
        %v2408 = vsub.s32 %v2405, %v2407
        %v2409 = vrot.slane %v2394, %v2408
        %v2410 = vcombine.low %v2402, %v2409
        %v2412 = vunpack.c.l.s4 1966171168
        %v2413 = vunpack.c.0.s8 %v2412
        %v2414 = vlaneseq
        %v2415 = vshrl.u32 %v2414, 7
        %v2416 = vsub.s32 %v2413, %v2415
        %v2417 = vrot.slane %v2410, %v2416
        %v2422 = vunpack.c.l.b16 %v2380
        %v2423 = vunpack.c.l.b16 %v2381
        %v2424 = vunpack.c.l.b16 %v2382
        %v2425 = vunpack.c.l.b16 %v2383
        %v2426 = vpack.c.b16 %v2423, %v2422
        %v2427 = vpack.c.b16 %v2425, %v2424
        %v2431 = vsel %vm565, %v2417, 0
        %2433 = vmatprep.subr.bf16.mxu0 0
        %2434 = vmatpush1.bf16.msra.mxu0 %v2426
        %2435 = vmatprep.subr.bf16.mxu0 0
        %2436 = vmatpush1.bf16.msra.mxu0 %v2427
        %2437 = vmatprep.subr.bf16.mxu0 0
        %2438 = vmatpush1.bf16.msra.mxu0 0
        %2439 = vmatprep.subr.bf16.mxu0 0
        %2440 = vmatpush1.bf16.msra.mxu0 0
        %2441 = vmatprep.subr.bf16.mxu0 0
        %2442 = vmatpush1.bf16.msra.mxu0 0
        %2443 = vmatprep.subr.bf16.mxu0 0
        %2444 = vmatpush1.bf16.msra.mxu0 0
        %2445 = vmatprep.subr.bf16.mxu0 0
        %2446 = vmatpush1.bf16.msra.mxu0 0
        %2447 = vmatprep.subr.bf16.mxu0 0
        %2448 = vmatpush1.bf16.msra.mxu0 0
        %2449 = vmatprep.subr.bf16.mxu0 0
        %2450 = vmatpush1.bf16.msra.mxu0 0
        %2451 = vmatprep.subr.bf16.mxu0 0
        %2452 = vmatpush1.bf16.msra.mxu0 0
        %2453 = vmatprep.subr.bf16.mxu0 0
        %2454 = vmatpush1.bf16.msra.mxu0 0
        %2455 = vmatprep.subr.bf16.mxu0 0
        %2456 = vmatpush1.bf16.msra.mxu0 0
        %2457 = vmatprep.subr.bf16.mxu0 0
        %2458 = vmatpush1.bf16.msra.mxu0 0
        %2459 = vmatprep.subr.bf16.mxu0 0
        %2460 = vmatpush1.bf16.msra.mxu0 0
        %2461 = vmatprep.subr.bf16.mxu0 0
        %2462 = vmatpush1.bf16.msra.mxu0 0
        %2463 = vmatprep.subr.bf16.mxu0 0
        %2464 = vmatpush1.bf16.msra.mxu0 0
        %2465 = vmatprep.mubr.bf16.mxu0 0
        %2466 = vmatmul.mubr.bf16.gmra.mrb[0].mxu0 %v2431
        %v2467 = vpop.f32.mrb[0].mxu0
        %v2468 = vadd.f32 %v2390, %v2467
        %v2469 = vpop.f32.mrb[0].mxu0
        %v2470 = vpop.f32.mrb[0].mxu0
        %v2471 = vpop.f32.mrb[0].mxu0
        %2472 = vdwg.mxu0
        %v2473 = vpack.c.bf16 %v2468, %v2468
        %s2474 = scalar_lea.vmem [#allocation6], 32
        %v2475 = vld [vmem:[%s2474] sm:$0xf]
        %v2476 = vld [vmem:[%s2474 + $0x4] sm:$0xf]
        %v2477 = vld [vmem:[%s2474 + $0x8] sm:$0xf]
        %v2478 = vld [vmem:[%s2474 + $0xc] sm:$0xf]
        %v2479 = vcombine.low %v2392, %v2394
        %v2481 = vunpack.c.l.s4 1935823168
        %v2482 = vunpack.c.0.s8 %v2481
        %v2483 = vlaneseq
        %v2484 = vshrl.u32 %v2483, 7
        %v2485 = vsub.s32 %v2482, %v2484
        %v2486 = vrot.slane %v2479, %v2485
        %v2488 = vunpack.c.l.s4 1935823168
        %v2489 = vunpack.c.0.s8 %v2488
        %v2490 = vlaneseq
        %v2491 = vshrl.u32 %v2490, 7
        %v2492 = vsub.s32 %v2489, %v2491
        %v2493 = vrot.slane %v2393, %v2492
        %v2494 = vcombine.low %v2486, %v2493
        %v2496 = vunpack.c.l.s4 1935823168
        %v2497 = vunpack.c.0.s8 %v2496
        %v2498 = vlaneseq
        %v2499 = vshrl.u32 %v2498, 7
        %v2500 = vsub.s32 %v2497, %v2499
        %v2501 = vrot.slane %v2494, %v2500
        %v2503 = vunpack.c.l.bf16 %v2501
        %s2504 = scalar_lea.vmem [#allocation8], 2
        %v2505 = vld [vmem:[%s2504] sm:$0x1]
        %v2507 = vlaneseq
        %v2508 = vshrl.u32 %v2507, 7
        %v2509 = vsub.s32 0, %v2508
        %v2510 = vrot.slane %v2505, %v2509
        %v2512 = vadd.f32 %v2503, %v2510
        %v2515 = vunpack.c.l.s4 1966171168
        %v2516 = vunpack.c.0.s8 %v2515
        %v2517 = vlaneseq
        %v2518 = vshrl.u32 %v2517, 7
        %v2519 = vsub.s32 %v2516, %v2518
        %v2520 = vrot.slane %v2473, %v2519
        %v2521 = vcombine.high %v2520, %v2520
        %v2523 = vunpack.c.l.s4 1966171168
        %v2524 = vunpack.c.0.s8 %v2523
        %v2525 = vlaneseq
        %v2526 = vshrl.u32 %v2525, 7
        %v2527 = vsub.s32 %v2524, %v2526
        %v2528 = vrot.slane %v2520, %v2527
        %v2530 = vunpack.c.l.s4 1966171168
        %v2531 = vunpack.c.0.s8 %v2530
        %v2532 = vlaneseq
        %v2533 = vshrl.u32 %v2532, 7
        %v2534 = vsub.s32 %v2531, %v2533
        %v2535 = vrot.slane %v2521, %v2534
        %v2536 = vcombine.high %v2528, %v2528
        %v2537 = vunpack.i.l.s16 %v2528
        %v2538 = vunpack.i.h.s16 %v2528
        %v2539 = vunpack.i.l.s16 %v2535
        %v2540 = vunpack.i.h.s16 %v2535
        %v2541 = vunpack.i.l.s16 %v2536
        %v2542 = vunpack.i.h.s16 %v2536
        %v2543 = vpack.i.b16 %v2538, %v2537
        %v2545 = vcombine.low %v2543, %v2539
        %v2547 = vunpack.c.l.s4 1966171168
        %v2548 = vunpack.c.0.s8 %v2547
        %v2549 = vlaneseq
        %v2550 = vshrl.u32 %v2549, 7
        %v2551 = vsub.s32 %v2548, %v2550
        %v2552 = vrot.slane %v2545, %v2551
        %v2554 = vunpack.c.l.s4 1966171168
        %v2555 = vunpack.c.0.s8 %v2554
        %v2556 = vlaneseq
        %v2557 = vshrl.u32 %v2556, 7
        %v2558 = vsub.s32 %v2555, %v2557
        %v2559 = vrot.slane %v2552, %v2558
        %2560 = vrot.lane.b32.xlu0 %v2559, 96
        %v2561 = vpop.permute.xlu0 %2560
        %v2563 = vsel %vm496, %v2559, 0
        %v2566 = vsel %vm496, %v2561, 0
        %2568 = vmatprep.subr.bf16.mxu0 0
        %2569 = vmatpush1.bf16.xpose.msra.mxu0 %v2566
        %2570 = vmatprep.subr.bf16.mxu0 0
        %2571 = vmatpush1.bf16.xpose.msra.mxu0 0
        %2572 = vmatprep.subr.bf16.mxu0 0
        %2573 = vmatpush1.bf16.xpose.msra.mxu0 0
        %2574 = vmatprep.subr.bf16.mxu0 0
        %2575 = vmatpush1.bf16.xpose.msra.mxu0 0
        %2576 = vmatprep.subr.bf16.mxu0 0
        %2577 = vmatpush1.bf16.xpose.msra.mxu0 0
        %2578 = vmatprep.subr.bf16.mxu0 0
        %2579 = vmatpush1.bf16.xpose.msra.mxu0 0
        %2580 = vmatprep.subr.bf16.mxu0 0
        %2581 = vmatpush1.bf16.xpose.msra.mxu0 0
        %2582 = vmatprep.subr.bf16.mxu0 0
        %2583 = vmatpush1.bf16.xpose.msra.mxu0 0
        %2584 = vmatprep.subr.bf16.mxu0 0
        %2585 = vmatpush1.bf16.xpose.msra.mxu0 0
        %2586 = vmatprep.subr.bf16.mxu0 0
        %2587 = vmatpush1.bf16.xpose.msra.mxu0 0
        %2588 = vmatprep.subr.bf16.mxu0 0
        %2589 = vmatpush1.bf16.xpose.msra.mxu0 0
        %2590 = vmatprep.subr.bf16.mxu0 0
        %2591 = vmatpush1.bf16.xpose.msra.mxu0 0
        %2592 = vmatprep.subr.bf16.mxu0 0
        %2593 = vmatpush1.bf16.xpose.msra.mxu0 0
        %2594 = vmatprep.subr.bf16.mxu0 0
        %2595 = vmatpush1.bf16.xpose.msra.mxu0 0
        %2596 = vmatprep.subr.bf16.mxu0 0
        %2597 = vmatpush1.bf16.xpose.msra.mxu0 0
        %2598 = vmatprep.subr.bf16.mxu0 0
        %2599 = vmatpush1.bf16.xpose.msra.mxu0 0
        %2600 = vmatprep.mubr.bf16.mxu0 0
        %2601 = vmatmul.mubr.bf16.gmra.mrb[0].mxu0 %v2563
        %v2602 = vpop.f32.mrb[0].mxu0
        %v2603 = vadd.f32 0.0, %v2602
        %v2604 = vpop.f32.mrb[0].mxu0
        %v2605 = vpop.f32.mrb[0].mxu0
        %v2606 = vpop.f32.mrb[0].mxu0
        %2607 = vdwg.mxu0
        %v2608 = vpack.i.b16 %v2541, %v2540
        %v2610 = vcombine.low %v2608, %v2542
        %v2612 = vunpack.c.l.s4 1966171168
        %v2613 = vunpack.c.0.s8 %v2612
        %v2614 = vlaneseq
        %v2615 = vshrl.u32 %v2614, 7
        %v2616 = vsub.s32 %v2613, %v2615
        %v2617 = vrot.slane %v2610, %v2616
        %v2619 = vunpack.c.l.s4 1966171168
        %v2620 = vunpack.c.0.s8 %v2619
        %v2621 = vlaneseq
        %v2622 = vshrl.u32 %v2621, 7
        %v2623 = vsub.s32 %v2620, %v2622
        %v2624 = vrot.slane %v2617, %v2623
        %2625 = vrot.lane.b32.xlu0 %v2624, 96
        %v2626 = vpop.permute.xlu0 %2625
        %v2628 = vsel %vm496, %v2624, 0
        %v2631 = vsel %vm496, %v2626, 0
        %2633 = vmatprep.subr.bf16.mxu0 0
        %2634 = vmatpush1.bf16.xpose.msra.mxu0 %v2631
        %2635 = vmatprep.subr.bf16.mxu0 0
        %2636 = vmatpush1.bf16.xpose.msra.mxu0 0
        %2637 = vmatprep.subr.bf16.mxu0 0
        %2638 = vmatpush1.bf16.xpose.msra.mxu0 0
        %2639 = vmatprep.subr.bf16.mxu0 0
        %2640 = vmatpush1.bf16.xpose.msra.mxu0 0
        %2641 = vmatprep.subr.bf16.mxu0 0
        %2642 = vmatpush1.bf16.xpose.msra.mxu0 0
        %2643 = vmatprep.subr.bf16.mxu0 0
        %2644 = vmatpush1.bf16.xpose.msra.mxu0 0
        %2645 = vmatprep.subr.bf16.mxu0 0
        %2646 = vmatpush1.bf16.xpose.msra.mxu0 0
        %2647 = vmatprep.subr.bf16.mxu0 0
        %2648 = vmatpush1.bf16.xpose.msra.mxu0 0
        %2649 = vmatprep.subr.bf16.mxu0 0
        %2650 = vmatpush1.bf16.xpose.msra.mxu0 0
        %2651 = vmatprep.subr.bf16.mxu0 0
        %2652 = vmatpush1.bf16.xpose.msra.mxu0 0
        %2653 = vmatprep.subr.bf16.mxu0 0
        %2654 = vmatpush1.bf16.xpose.msra.mxu0 0
        %2655 = vmatprep.subr.bf16.mxu0 0
        %2656 = vmatpush1.bf16.xpose.msra.mxu0 0
        %2657 = vmatprep.subr.bf16.mxu0 0
        %2658 = vmatpush1.bf16.xpose.msra.mxu0 0
        %2659 = vmatprep.subr.bf16.mxu0 0
        %2660 = vmatpush1.bf16.xpose.msra.mxu0 0
        %2661 = vmatprep.subr.bf16.mxu0 0
        %2662 = vmatpush1.bf16.xpose.msra.mxu0 0
        %2663 = vmatprep.subr.bf16.mxu0 0
        %2664 = vmatpush1.bf16.xpose.msra.mxu0 0
        %2665 = vmatprep.mubr.bf16.mxu0 0
        %2666 = vmatmul.mubr.bf16.gmra.mrb[0].mxu0 %v2628
        %v2667 = vpop.f32.mrb[0].mxu0
        %v2668 = vadd.f32 0.0, %v2667
        %v2669 = vpop.f32.mrb[0].mxu0
        %v2670 = vpop.f32.mrb[0].mxu0
        %v2671 = vpop.f32.mrb[0].mxu0
        %2672 = vdwg.mxu0
        %vm2673 = vcmask 18432
        %v2674 = vsel %vm2673, %v2603, -inf
        %2675 = vmax.xlane.f32.xlu0 %v2674
        %v2676 = vpop.xlane.xlu0 %2675
        %v2677 = vsel %vm2673, %v2668, -inf
        %2678 = vmax.xlane.f32.xlu0 %v2677
        %v2679 = vpop.xlane.xlu0 %2678
        %v2680 = vsub.f32 %v2603, %v2676
        %v2681 = vsub.f32 %v2668, %v2679
        %v2682 = vmul.f32 %v2680, 1.442695
        %v2683 = vpow.pop %v2682
        %v2684 = vmul.f32 %v2681, 1.442695
        %v2685 = vpow.pop %v2684
        %v2686 = vsel %vm2673, %v2683, 0.0
        %2687 = vadd.xlane.f32.xlu0 %v2686
        %v2688 = vpop.xlane.xlu0 %2687
        %v2689 = vsel %vm2673, %v2685, 0.0
        %2690 = vadd.xlane.f32.xlu0 %v2689
        %v2691 = vpop.xlane.xlu0 %2690
        %v2692 = vrcp.pop %v2688
        %v2693 = vrcp.pop %v2691
        %v2694 = vmul.f32 %v2683, %v2692
        %v2695 = vmul.f32 %v2685, %v2693
        %v2696 = vpack.c.bf16 %v2694, %v2694
        %v2697 = vpack.c.bf16 %v2695, %v2695
        %2698 = vrot.lane.b32.xlu0 %v2559, 64
        %v2699 = vpop.permute.xlu0 %2698
        %vm2700 = vcmask 23552
        %v2702 = vsel %vm2700, %v2696, 0
        %vm2704 = vcmask 1040384
        %v2705 = vsel %vm2704, 4294967295, 65535
        %v2706 = vsel %vm1620, %v2705, 0
        %v2708 = vand.u32 %v2699, %v2706
        %2710 = vmatprep.subr.bf16.mxu0 0
        %2711 = vmatpush1.bf16.msra.mxu0 %v2708
        %2712 = vmatprep.subr.bf16.mxu0 0
        %2713 = vmatpush1.bf16.msra.mxu0 0
        %2714 = vmatprep.subr.bf16.mxu0 0
        %2715 = vmatpush1.bf16.msra.mxu0 0
        %2716 = vmatprep.subr.bf16.mxu0 0
        %2717 = vmatpush1.bf16.msra.mxu0 0
        %2718 = vmatprep.subr.bf16.mxu0 0
        %2719 = vmatpush1.bf16.msra.mxu0 0
        %2720 = vmatprep.subr.bf16.mxu0 0
        %2721 = vmatpush1.bf16.msra.mxu0 0
        %2722 = vmatprep.subr.bf16.mxu0 0
        %2723 = vmatpush1.bf16.msra.mxu0 0
        %2724 = vmatprep.subr.bf16.mxu0 0
        %2725 = vmatpush1.bf16.msra.mxu0 0
        %2726 = vmatprep.subr.bf16.mxu0 0
        %2727 = vmatpush1.bf16.msra.mxu0 0
        %2728 = vmatprep.subr.bf16.mxu0 0
        %2729 = vmatpush1.bf16.msra.mxu0 0
        %2730 = vmatprep.subr.bf16.mxu0 0
        %2731 = vmatpush1.bf16.msra.mxu0 0
        %2732 = vmatprep.subr.bf16.mxu0 0
        %2733 = vmatpush1.bf16.msra.mxu0 0
        %2734 = vmatprep.subr.bf16.mxu0 0
        %2735 = vmatpush1.bf16.msra.mxu0 0
        %2736 = vmatprep.subr.bf16.mxu0 0
        %2737 = vmatpush1.bf16.msra.mxu0 0
        %2738 = vmatprep.subr.bf16.mxu0 0
        %2739 = vmatpush1.bf16.msra.mxu0 0
        %2740 = vmatprep.subr.bf16.mxu0 0
        %2741 = vmatpush1.bf16.msra.mxu0 0
        %2742 = vmatprep.mubr.bf16.mxu0 0
        %2743 = vmatmul.mubr.bf16.gmra.mrb[0].mxu0 %v2702
        %v2744 = vpop.f32.mrb[0].mxu0
        %v2745 = vadd.f32 0.0, %v2744
        %v2746 = vpop.f32.mrb[0].mxu0
        %v2747 = vpop.f32.mrb[0].mxu0
        %v2748 = vpop.f32.mrb[0].mxu0
        %2749 = vdwg.mxu0
        %2750 = vrot.lane.b32.xlu0 %v2624, 64
        %v2751 = vpop.permute.xlu0 %2750
        %v2753 = vsel %vm2700, %v2697, 0
        %v2756 = vand.u32 %v2751, %v2706
        %2758 = vmatprep.subr.bf16.mxu0 0
        %2759 = vmatpush1.bf16.msra.mxu0 %v2756
        %2760 = vmatprep.subr.bf16.mxu0 0
        %2761 = vmatpush1.bf16.msra.mxu0 0
        %2762 = vmatprep.subr.bf16.mxu0 0
        %2763 = vmatpush1.bf16.msra.mxu0 0
        %2764 = vmatprep.subr.bf16.mxu0 0
        %2765 = vmatpush1.bf16.msra.mxu0 0
        %2766 = vmatprep.subr.bf16.mxu0 0
        %2767 = vmatpush1.bf16.msra.mxu0 0
        %2768 = vmatprep.subr.bf16.mxu0 0
        %2769 = vmatpush1.bf16.msra.mxu0 0
        %2770 = vmatprep.subr.bf16.mxu0 0
        %2771 = vmatpush1.bf16.msra.mxu0 0
        %2772 = vmatprep.subr.bf16.mxu0 0
        %2773 = vmatpush1.bf16.msra.mxu0 0
        %2774 = vmatprep.subr.bf16.mxu0 0
        %2775 = vmatpush1.bf16.msra.mxu0 0
        %2776 = vmatprep.subr.bf16.mxu0 0
        %2777 = vmatpush1.bf16.msra.mxu0 0
        %2778 = vmatprep.subr.bf16.mxu0 0
        %2779 = vmatpush1.bf16.msra.mxu0 0
        %2780 = vmatprep.subr.bf16.mxu0 0
        %2781 = vmatpush1.bf16.msra.mxu0 0
        %2782 = vmatprep.subr.bf16.mxu0 0
        %2783 = vmatpush1.bf16.msra.mxu0 0
        %2784 = vmatprep.subr.bf16.mxu0 0
        %2785 = vmatpush1.bf16.msra.mxu0 0
        %2786 = vmatprep.subr.bf16.mxu0 0
        %2787 = vmatpush1.bf16.msra.mxu0 0
        %2788 = vmatprep.subr.bf16.mxu0 0
        %2789 = vmatpush1.bf16.msra.mxu0 0
        %2790 = vmatprep.mubr.bf16.mxu0 0
        %2791 = vmatmul.mubr.bf16.gmra.mrb[0].mxu0 %v2753
        %v2792 = vpop.f32.mrb[0].mxu0
        %v2793 = vadd.f32 0.0, %v2792
        %v2794 = vpop.f32.mrb[0].mxu0
        %v2795 = vpop.f32.mrb[0].mxu0
        %v2796 = vpop.f32.mrb[0].mxu0
        %2797 = vdwg.mxu0
        %v2801 = vunpack.c.l.s4 1966171168
        %v2802 = vunpack.c.0.s8 %v2801
        %v2803 = vlaneseq
        %v2804 = vshrl.u32 %v2803, 7
        %v2805 = vsub.s32 %v2802, %v2804
        %v2806 = vrot.slane %v2745, %v2805
        %v2807 = vcombine.high %v2806, %v2806
        %v2809 = vunpack.c.l.s4 1966171168
        %v2810 = vunpack.c.0.s8 %v2809
        %v2811 = vlaneseq
        %v2812 = vshrl.u32 %v2811, 7
        %v2813 = vsub.s32 %v2810, %v2812
        %v2814 = vrot.slane %v2806, %v2813
        %v2816 = vunpack.c.l.s4 1966171168
        %v2817 = vunpack.c.0.s8 %v2816
        %v2818 = vlaneseq
        %v2819 = vshrl.u32 %v2818, 7
        %v2820 = vsub.s32 %v2817, %v2819
        %v2821 = vrot.slane %v2807, %v2820
        %v2822 = vcombine.high %v2814, %v2814
        %v2824 = vunpack.c.l.s4 1966171168
        %v2825 = vunpack.c.0.s8 %v2824
        %v2826 = vlaneseq
        %v2827 = vshrl.u32 %v2826, 7
        %v2828 = vsub.s32 %v2825, %v2827
        %v2829 = vrot.slane %v2793, %v2828
        %v2830 = vcombine.high %v2829, %v2829
        %v2832 = vunpack.c.l.s4 1966171168
        %v2833 = vunpack.c.0.s8 %v2832
        %v2834 = vlaneseq
        %v2835 = vshrl.u32 %v2834, 7
        %v2836 = vsub.s32 %v2833, %v2835
        %v2837 = vrot.slane %v2829, %v2836
        %v2839 = vunpack.c.l.s4 1966171168
        %v2840 = vunpack.c.0.s8 %v2839
        %v2841 = vlaneseq
        %v2842 = vshrl.u32 %v2841, 7
        %v2843 = vsub.s32 %v2840, %v2842
        %v2844 = vrot.slane %v2830, %v2843
        %v2845 = vcombine.high %v2837, %v2837
        %v2846 = vcombine.low %v2814, %v2821
        %v2847 = vcombine.low %v2822, %v2837
        %v2848 = vcombine.low %v2844, %v2845
        %v2850 = vunpack.c.l.s4 1966171168
        %v2851 = vunpack.c.0.s8 %v2850
        %v2852 = vlaneseq
        %v2853 = vshrl.u32 %v2852, 7
        %v2854 = vsub.s32 %v2851, %v2853
        %v2855 = vrot.slane %v2846, %v2854
        %v2857 = vunpack.c.l.s4 1966171168
        %v2858 = vunpack.c.0.s8 %v2857
        %v2859 = vlaneseq
        %v2860 = vshrl.u32 %v2859, 7
        %v2861 = vsub.s32 %v2858, %v2860
        %v2862 = vrot.slane %v2847, %v2861
        %v2864 = vunpack.c.l.s4 1966171168
        %v2865 = vunpack.c.0.s8 %v2864
        %v2866 = vlaneseq
        %v2867 = vshrl.u32 %v2866, 7
        %v2868 = vsub.s32 %v2865, %v2867
        %v2869 = vrot.slane %v2848, %v2868
        %v2870 = vcombine.low %v2855, %v2862
        %v2872 = vunpack.c.l.s4 1966171168
        %v2873 = vunpack.c.0.s8 %v2872
        %v2874 = vlaneseq
        %v2875 = vshrl.u32 %v2874, 7
        %v2876 = vsub.s32 %v2873, %v2875
        %v2877 = vrot.slane %v2870, %v2876
        %v2879 = vunpack.c.l.s4 1966171168
        %v2880 = vunpack.c.0.s8 %v2879
        %v2881 = vlaneseq
        %v2882 = vshrl.u32 %v2881, 7
        %v2883 = vsub.s32 %v2880, %v2882
        %v2884 = vrot.slane %v2869, %v2883
        %v2885 = vcombine.low %v2877, %v2884
        %v2887 = vpack.c.bf16 %v2885, %v2885
        %v2890 = vunpack.c.l.b16 %v2475
        %v2891 = vunpack.c.l.b16 %v2476
        %v2892 = vpack.c.b16 %v2891, %v2890
        %v2895 = vsel %vm496, %v2887, 0
        %2897 = vmatprep.subr.bf16.mxu0 0
        %2898 = vmatpush1.bf16.msra.mxu0 %v2892
        %2899 = vmatprep.subr.bf16.mxu0 0
        %2900 = vmatpush1.bf16.msra.mxu0 0
        %2901 = vmatprep.subr.bf16.mxu0 0
        %2902 = vmatpush1.bf16.msra.mxu0 0
        %2903 = vmatprep.subr.bf16.mxu0 0
        %2904 = vmatpush1.bf16.msra.mxu0 0
        %2905 = vmatprep.subr.bf16.mxu0 0
        %2906 = vmatpush1.bf16.msra.mxu0 0
        %2907 = vmatprep.subr.bf16.mxu0 0
        %2908 = vmatpush1.bf16.msra.mxu0 0
        %2909 = vmatprep.subr.bf16.mxu0 0
        %2910 = vmatpush1.bf16.msra.mxu0 0
        %2911 = vmatprep.subr.bf16.mxu0 0
        %2912 = vmatpush1.bf16.msra.mxu0 0
        %2913 = vmatprep.subr.bf16.mxu0 0
        %2914 = vmatpush1.bf16.msra.mxu0 0
        %2915 = vmatprep.subr.bf16.mxu0 0
        %2916 = vmatpush1.bf16.msra.mxu0 0
        %2917 = vmatprep.subr.bf16.mxu0 0
        %2918 = vmatpush1.bf16.msra.mxu0 0
        %2919 = vmatprep.subr.bf16.mxu0 0
        %2920 = vmatpush1.bf16.msra.mxu0 0
        %2921 = vmatprep.subr.bf16.mxu0 0
        %2922 = vmatpush1.bf16.msra.mxu0 0
        %2923 = vmatprep.subr.bf16.mxu0 0
        %2924 = vmatpush1.bf16.msra.mxu0 0
        %2925 = vmatprep.subr.bf16.mxu0 0
        %2926 = vmatpush1.bf16.msra.mxu0 0
        %2927 = vmatprep.subr.bf16.mxu0 0
        %2928 = vmatpush1.bf16.msra.mxu0 0
        %2929 = vmatprep.mubr.bf16.mxu0 0
        %2930 = vmatmul.mubr.bf16.gmra.mrb[0].mxu0 %v2895
        %v2931 = vpop.f32.mrb[0].mxu0
        %v2932 = vadd.f32 0.0, %v2931
        %v2933 = vpop.f32.mrb[0].mxu0
        %v2934 = vpop.f32.mrb[0].mxu0
        %v2935 = vpop.f32.mrb[0].mxu0
        %2936 = vdwg.mxu0
        %v2937 = vadd.f32 %v2512, %v2932
        %2938 = vrot.lane.b32.xlu0 %v2559, 112
        %v2939 = vpop.permute.xlu0 %2938
        %2940 = vrot.lane.b32.xlu0 %v2559, 80
        %v2941 = vpop.permute.xlu0 %2940
        %v2943 = vsel %vm496, %v2939, 0
        %v2946 = vsel %vm496, %v2941, 0
        %2948 = vmatprep.subr.bf16.mxu0 0
        %2949 = vmatpush1.bf16.xpose.msra.mxu0 %v2946
        %2950 = vmatprep.subr.bf16.mxu0 0
        %2951 = vmatpush1.bf16.xpose.msra.mxu0 0
        %2952 = vmatprep.subr.bf16.mxu0 0
        %2953 = vmatpush1.bf16.xpose.msra.mxu0 0
        %2954 = vmatprep.subr.bf16.mxu0 0
        %2955 = vmatpush1.bf16.xpose.msra.mxu0 0
        %2956 = vmatprep.subr.bf16.mxu0 0
        %2957 = vmatpush1.bf16.xpose.msra.mxu0 0
        %2958 = vmatprep.subr.bf16.mxu0 0
        %2959 = vmatpush1.bf16.xpose.msra.mxu0 0
        %2960 = vmatprep.subr.bf16.mxu0 0
        %2961 = vmatpush1.bf16.xpose.msra.mxu0 0
        %2962 = vmatprep.subr.bf16.mxu0 0
        %2963 = vmatpush1.bf16.xpose.msra.mxu0 0
        %2964 = vmatprep.subr.bf16.mxu0 0
        %2965 = vmatpush1.bf16.xpose.msra.mxu0 0
        %2966 = vmatprep.subr.bf16.mxu0 0
        %2967 = vmatpush1.bf16.xpose.msra.mxu0 0
        %2968 = vmatprep.subr.bf16.mxu0 0
        %2969 = vmatpush1.bf16.xpose.msra.mxu0 0
        %2970 = vmatprep.subr.bf16.mxu0 0
        %2971 = vmatpush1.bf16.xpose.msra.mxu0 0
        %2972 = vmatprep.subr.bf16.mxu0 0
        %2973 = vmatpush1.bf16.xpose.msra.mxu0 0
        %2974 = vmatprep.subr.bf16.mxu0 0
        %2975 = vmatpush1.bf16.xpose.msra.mxu0 0
        %2976 = vmatprep.subr.bf16.mxu0 0
        %2977 = vmatpush1.bf16.xpose.msra.mxu0 0
        %2978 = vmatprep.subr.bf16.mxu0 0
        %2979 = vmatpush1.bf16.xpose.msra.mxu0 0
        %2980 = vmatprep.mubr.bf16.mxu0 0
        %2981 = vmatmul.mubr.bf16.gmra.mrb[0].mxu0 %v2943
        %v2982 = vpop.f32.mrb[0].mxu0
        %v2983 = vadd.f32 0.0, %v2982
        %v2984 = vpop.f32.mrb[0].mxu0
        %v2985 = vpop.f32.mrb[0].mxu0
        %v2986 = vpop.f32.mrb[0].mxu0
        %2987 = vdwg.mxu0
        %2988 = vrot.lane.b32.xlu0 %v2624, 112
        %v2989 = vpop.permute.xlu0 %2988
        %2990 = vrot.lane.b32.xlu0 %v2624, 80
        %v2991 = vpop.permute.xlu0 %2990
        %v2993 = vsel %vm496, %v2989, 0
        %v2996 = vsel %vm496, %v2991, 0
        %2998 = vmatprep.subr.bf16.mxu0 0
        %2999 = vmatpush1.bf16.xpose.msra.mxu0 %v2996
        %3000 = vmatprep.subr.bf16.mxu0 0
        %3001 = vmatpush1.bf16.xpose.msra.mxu0 0
        %3002 = vmatprep.subr.bf16.mxu0 0
        %3003 = vmatpush1.bf16.xpose.msra.mxu0 0
        %3004 = vmatprep.subr.bf16.mxu0 0
        %3005 = vmatpush1.bf16.xpose.msra.mxu0 0
        %3006 = vmatprep.subr.bf16.mxu0 0
        %3007 = vmatpush1.bf16.xpose.msra.mxu0 0
        %3008 = vmatprep.subr.bf16.mxu0 0
        %3009 = vmatpush1.bf16.xpose.msra.mxu0 0
        %3010 = vmatprep.subr.bf16.mxu0 0
        %3011 = vmatpush1.bf16.xpose.msra.mxu0 0
        %3012 = vmatprep.subr.bf16.mxu0 0
        %3013 = vmatpush1.bf16.xpose.msra.mxu0 0
        %3014 = vmatprep.subr.bf16.mxu0 0
        %3015 = vmatpush1.bf16.xpose.msra.mxu0 0
        %3016 = vmatprep.subr.bf16.mxu0 0
        %3017 = vmatpush1.bf16.xpose.msra.mxu0 0
        %3018 = vmatprep.subr.bf16.mxu0 0
        %3019 = vmatpush1.bf16.xpose.msra.mxu0 0
        %3020 = vmatprep.subr.bf16.mxu0 0
        %3021 = vmatpush1.bf16.xpose.msra.mxu0 0
        %3022 = vmatprep.subr.bf16.mxu0 0
        %3023 = vmatpush1.bf16.xpose.msra.mxu0 0
        %3024 = vmatprep.subr.bf16.mxu0 0
        %3025 = vmatpush1.bf16.xpose.msra.mxu0 0
        %3026 = vmatprep.subr.bf16.mxu0 0
        %3027 = vmatpush1.bf16.xpose.msra.mxu0 0
        %3028 = vmatprep.subr.bf16.mxu0 0
        %3029 = vmatpush1.bf16.xpose.msra.mxu0 0
        %3030 = vmatprep.mubr.bf16.mxu0 0
        %3031 = vmatmul.mubr.bf16.gmra.mrb[0].mxu0 %v2993
        %v3032 = vpop.f32.mrb[0].mxu0
        %v3033 = vadd.f32 0.0, %v3032
        %v3034 = vpop.f32.mrb[0].mxu0
        %v3035 = vpop.f32.mrb[0].mxu0
        %v3036 = vpop.f32.mrb[0].mxu0
        %3037 = vdwg.mxu0
        %v3038 = vsel %vm2673, %v2983, -inf
        %3039 = vmax.xlane.f32.xlu0 %v3038
        %v3040 = vpop.xlane.xlu0 %3039
        %v3041 = vsel %vm2673, %v3033, -inf
        %3042 = vmax.xlane.f32.xlu0 %v3041
        %v3043 = vpop.xlane.xlu0 %3042
        %v3044 = vsub.f32 %v2983, %v3040
        %v3045 = vsub.f32 %v3033, %v3043
        %v3046 = vmul.f32 %v3044, 1.442695
        %v3047 = vpow.pop %v3046
        %v3048 = vmul.f32 %v3045, 1.442695
        %v3049 = vpow.pop %v3048
        %v3050 = vsel %vm2673, %v3047, 0.0
        %3051 = vadd.xlane.f32.xlu0 %v3050
        %v3052 = vpop.xlane.xlu0 %3051
        %v3053 = vsel %vm2673, %v3049, 0.0
        %3054 = vadd.xlane.f32.xlu0 %v3053
        %v3055 = vpop.xlane.xlu0 %3054
        %v3056 = vrcp.pop %v3052
        %v3057 = vrcp.pop %v3055
        %v3058 = vmul.f32 %v3047, %v3056
        %v3059 = vmul.f32 %v3049, %v3057
        %v3060 = vpack.c.bf16 %v3058, %v3058
        %v3061 = vpack.c.bf16 %v3059, %v3059
        %3062 = vrot.lane.b32.xlu0 %v2559, 48
        %v3063 = vpop.permute.xlu0 %3062
        %v3065 = vsel %vm2700, %v3060, 0
        %v3068 = vand.u32 %v3063, %v2706
        %3070 = vmatprep.subr.bf16.mxu0 0
        %3071 = vmatpush1.bf16.msra.mxu0 %v3068
        %3072 = vmatprep.subr.bf16.mxu0 0
        %3073 = vmatpush1.bf16.msra.mxu0 0
        %3074 = vmatprep.subr.bf16.mxu0 0
        %3075 = vmatpush1.bf16.msra.mxu0 0
        %3076 = vmatprep.subr.bf16.mxu0 0
        %3077 = vmatpush1.bf16.msra.mxu0 0
        %3078 = vmatprep.subr.bf16.mxu0 0
        %3079 = vmatpush1.bf16.msra.mxu0 0
        %3080 = vmatprep.subr.bf16.mxu0 0
        %3081 = vmatpush1.bf16.msra.mxu0 0
        %3082 = vmatprep.subr.bf16.mxu0 0
        %3083 = vmatpush1.bf16.msra.mxu0 0
        %3084 = vmatprep.subr.bf16.mxu0 0
        %3085 = vmatpush1.bf16.msra.mxu0 0
        %3086 = vmatprep.subr.bf16.mxu0 0
        %3087 = vmatpush1.bf16.msra.mxu0 0
        %3088 = vmatprep.subr.bf16.mxu0 0
        %3089 = vmatpush1.bf16.msra.mxu0 0
        %3090 = vmatprep.subr.bf16.mxu0 0
        %3091 = vmatpush1.bf16.msra.mxu0 0
        %3092 = vmatprep.subr.bf16.mxu0 0
        %3093 = vmatpush1.bf16.msra.mxu0 0
        %3094 = vmatprep.subr.bf16.mxu0 0
        %3095 = vmatpush1.bf16.msra.mxu0 0
        %3096 = vmatprep.subr.bf16.mxu0 0
        %3097 = vmatpush1.bf16.msra.mxu0 0
        %3098 = vmatprep.subr.bf16.mxu0 0
        %3099 = vmatpush1.bf16.msra.mxu0 0
        %3100 = vmatprep.subr.bf16.mxu0 0
        %3101 = vmatpush1.bf16.msra.mxu0 0
        %3102 = vmatprep.mubr.bf16.mxu0 0
        %3103 = vmatmul.mubr.bf16.gmra.mrb[0].mxu0 %v3065
        %v3104 = vpop.f32.mrb[0].mxu0
        %v3105 = vadd.f32 0.0, %v3104
        %v3106 = vpop.f32.mrb[0].mxu0
        %v3107 = vpop.f32.mrb[0].mxu0
        %v3108 = vpop.f32.mrb[0].mxu0
        %3109 = vdwg.mxu0
        %3110 = vrot.lane.b32.xlu0 %v2624, 48
        %v3111 = vpop.permute.xlu0 %3110
        %v3113 = vsel %vm2700, %v3061, 0
        %v3116 = vand.u32 %v3111, %v2706
        %3118 = vmatprep.subr.bf16.mxu0 0
        %3119 = vmatpush1.bf16.msra.mxu0 %v3116
        %3120 = vmatprep.subr.bf16.mxu0 0
        %3121 = vmatpush1.bf16.msra.mxu0 0
        %3122 = vmatprep.subr.bf16.mxu0 0
        %3123 = vmatpush1.bf16.msra.mxu0 0
        %3124 = vmatprep.subr.bf16.mxu0 0
        %3125 = vmatpush1.bf16.msra.mxu0 0
        %3126 = vmatprep.subr.bf16.mxu0 0
        %3127 = vmatpush1.bf16.msra.mxu0 0
        %3128 = vmatprep.subr.bf16.mxu0 0
        %3129 = vmatpush1.bf16.msra.mxu0 0
        %3130 = vmatprep.subr.bf16.mxu0 0
        %3131 = vmatpush1.bf16.msra.mxu0 0
        %3132 = vmatprep.subr.bf16.mxu0 0
        %3133 = vmatpush1.bf16.msra.mxu0 0
        %3134 = vmatprep.subr.bf16.mxu0 0
        %3135 = vmatpush1.bf16.msra.mxu0 0
        %3136 = vmatprep.subr.bf16.mxu0 0
        %3137 = vmatpush1.bf16.msra.mxu0 0
        %3138 = vmatprep.subr.bf16.mxu0 0
        %3139 = vmatpush1.bf16.msra.mxu0 0
        %3140 = vmatprep.subr.bf16.mxu0 0
        %3141 = vmatpush1.bf16.msra.mxu0 0
        %3142 = vmatprep.subr.bf16.mxu0 0
        %3143 = vmatpush1.bf16.msra.mxu0 0
        %3144 = vmatprep.subr.bf16.mxu0 0
        %3145 = vmatpush1.bf16.msra.mxu0 0
        %3146 = vmatprep.subr.bf16.mxu0 0
        %3147 = vmatpush1.bf16.msra.mxu0 0
        %3148 = vmatprep.subr.bf16.mxu0 0
        %3149 = vmatpush1.bf16.msra.mxu0 0
        %3150 = vmatprep.mubr.bf16.mxu0 0
        %3151 = vmatmul.mubr.bf16.gmra.mrb[0].mxu0 %v3113
        %v3152 = vpop.f32.mrb[0].mxu0
        %v3153 = vadd.f32 0.0, %v3152
        %v3154 = vpop.f32.mrb[0].mxu0
        %v3155 = vpop.f32.mrb[0].mxu0
        %v3156 = vpop.f32.mrb[0].mxu0
        %3157 = vdwg.mxu0
        %v3161 = vunpack.c.l.s4 1966171168
        %v3162 = vunpack.c.0.s8 %v3161
        %v3163 = vlaneseq
        %v3164 = vshrl.u32 %v3163, 7
        %v3165 = vsub.s32 %v3162, %v3164
        %v3166 = vrot.slane %v3105, %v3165
        %v3167 = vcombine.high %v3166, %v3166
        %v3169 = vunpack.c.l.s4 1966171168
        %v3170 = vunpack.c.0.s8 %v3169
        %v3171 = vlaneseq
        %v3172 = vshrl.u32 %v3171, 7
        %v3173 = vsub.s32 %v3170, %v3172
        %v3174 = vrot.slane %v3166, %v3173
        %v3176 = vunpack.c.l.s4 1966171168
        %v3177 = vunpack.c.0.s8 %v3176
        %v3178 = vlaneseq
        %v3179 = vshrl.u32 %v3178, 7
        %v3180 = vsub.s32 %v3177, %v3179
        %v3181 = vrot.slane %v3167, %v3180
        %v3182 = vcombine.high %v3174, %v3174
        %v3184 = vunpack.c.l.s4 1966171168
        %v3185 = vunpack.c.0.s8 %v3184
        %v3186 = vlaneseq
        %v3187 = vshrl.u32 %v3186, 7
        %v3188 = vsub.s32 %v3185, %v3187
        %v3189 = vrot.slane %v3153, %v3188
        %v3190 = vcombine.high %v3189, %v3189
        %v3192 = vunpack.c.l.s4 1966171168
        %v3193 = vunpack.c.0.s8 %v3192
        %v3194 = vlaneseq
        %v3195 = vshrl.u32 %v3194, 7
        %v3196 = vsub.s32 %v3193, %v3195
        %v3197 = vrot.slane %v3189, %v3196
        %v3199 = vunpack.c.l.s4 1966171168
        %v3200 = vunpack.c.0.s8 %v3199
        %v3201 = vlaneseq
        %v3202 = vshrl.u32 %v3201, 7
        %v3203 = vsub.s32 %v3200, %v3202
        %v3204 = vrot.slane %v3190, %v3203
        %v3205 = vcombine.high %v3197, %v3197
        %v3206 = vcombine.low %v3174, %v3181
        %v3207 = vcombine.low %v3182, %v3197
        %v3208 = vcombine.low %v3204, %v3205
        %v3210 = vunpack.c.l.s4 1966171168
        %v3211 = vunpack.c.0.s8 %v3210
        %v3212 = vlaneseq
        %v3213 = vshrl.u32 %v3212, 7
        %v3214 = vsub.s32 %v3211, %v3213
        %v3215 = vrot.slane %v3206, %v3214
        %v3217 = vunpack.c.l.s4 1966171168
        %v3218 = vunpack.c.0.s8 %v3217
        %v3219 = vlaneseq
        %v3220 = vshrl.u32 %v3219, 7
        %v3221 = vsub.s32 %v3218, %v3220
        %v3222 = vrot.slane %v3207, %v3221
        %v3224 = vunpack.c.l.s4 1966171168
        %v3225 = vunpack.c.0.s8 %v3224
        %v3226 = vlaneseq
        %v3227 = vshrl.u32 %v3226, 7
        %v3228 = vsub.s32 %v3225, %v3227
        %v3229 = vrot.slane %v3208, %v3228
        %v3230 = vcombine.low %v3215, %v3222
        %v3232 = vunpack.c.l.s4 1966171168
        %v3233 = vunpack.c.0.s8 %v3232
        %v3234 = vlaneseq
        %v3235 = vshrl.u32 %v3234, 7
        %v3236 = vsub.s32 %v3233, %v3235
        %v3237 = vrot.slane %v3230, %v3236
        %v3239 = vunpack.c.l.s4 1966171168
        %v3240 = vunpack.c.0.s8 %v3239
        %v3241 = vlaneseq
        %v3242 = vshrl.u32 %v3241, 7
        %v3243 = vsub.s32 %v3240, %v3242
        %v3244 = vrot.slane %v3229, %v3243
        %v3245 = vcombine.low %v3237, %v3244
        %v3247 = vpack.c.bf16 %v3245, %v3245
        %v3250 = vunpack.c.l.b16 %v2477
        %v3251 = vunpack.c.l.b16 %v2478
        %v3252 = vpack.c.b16 %v3251, %v3250
        %v3255 = vsel %vm496, %v3247, 0
        %3257 = vmatprep.subr.bf16.mxu0 0
        %3258 = vmatpush1.bf16.msra.mxu0 %v3252
        %3259 = vmatprep.subr.bf16.mxu0 0
        %3260 = vmatpush1.bf16.msra.mxu0 0
        %3261 = vmatprep.subr.bf16.mxu0 0
        %3262 = vmatpush1.bf16.msra.mxu0 0
        %3263 = vmatprep.subr.bf16.mxu0 0
        %3264 = vmatpush1.bf16.msra.mxu0 0
        %3265 = vmatprep.subr.bf16.mxu0 0
        %3266 = vmatpush1.bf16.msra.mxu0 0
        %3267 = vmatprep.subr.bf16.mxu0 0
        %3268 = vmatpush1.bf16.msra.mxu0 0
        %3269 = vmatprep.subr.bf16.mxu0 0
        %3270 = vmatpush1.bf16.msra.mxu0 0
        %3271 = vmatprep.subr.bf16.mxu0 0
        %3272 = vmatpush1.bf16.msra.mxu0 0
        %3273 = vmatprep.subr.bf16.mxu0 0
        %3274 = vmatpush1.bf16.msra.mxu0 0
        %3275 = vmatprep.subr.bf16.mxu0 0
        %3276 = vmatpush1.bf16.msra.mxu0 0
        %3277 = vmatprep.subr.bf16.mxu0 0
        %3278 = vmatpush1.bf16.msra.mxu0 0
        %3279 = vmatprep.subr.bf16.mxu0 0
        %3280 = vmatpush1.bf16.msra.mxu0 0
        %3281 = vmatprep.subr.bf16.mxu0 0
        %3282 = vmatpush1.bf16.msra.mxu0 0
        %3283 = vmatprep.subr.bf16.mxu0 0
        %3284 = vmatpush1.bf16.msra.mxu0 0
        %3285 = vmatprep.subr.bf16.mxu0 0
        %3286 = vmatpush1.bf16.msra.mxu0 0
        %3287 = vmatprep.subr.bf16.mxu0 0
        %3288 = vmatpush1.bf16.msra.mxu0 0
        %3289 = vmatprep.mubr.bf16.mxu0 0
        %3290 = vmatmul.mubr.bf16.gmra.mrb[0].mxu0 %v3255
        %v3291 = vpop.f32.mrb[0].mxu0
        %v3292 = vadd.f32 0.0, %v3291
        %v3293 = vpop.f32.mrb[0].mxu0
        %v3294 = vpop.f32.mrb[0].mxu0
        %v3295 = vpop.f32.mrb[0].mxu0
        %3296 = vdwg.mxu0
        %v3297 = vadd.f32 %v2937, %v3292
        %vm3298 = vcmask 259072
        %v3299 = vsel %vm3298, %v3297, 0.0
        %3300 = vadd.xlane.f32.xlu0 %v3299
        %v3301 = vpop.xlane.xlu0 %3300
        %v3302 = vmul.f32 %v3301, %v1181
        %v3303 = vsub.f32 %v3297, %v3302
        %v3304 = vmul.f32 %v3303, %v3303
        %v3305 = vsel %vm3298, %v3304, 0.0
        %3306 = vadd.xlane.f32.xlu0 %v3305
        %v3307 = vpop.xlane.xlu0 %3306
        %v3308 = vmul.f32 %v3307, %v1181
        %v3309 = vadd.f32 %v3308, 1e-05
        %v3310 = vrsqrt.pop %v3309
        %v3311 = vmul.f32 %v3303, %v3310
        %s3312 = scalar_lea.vmem [#allocation9], 2
        %v3313 = vld [vmem:[%s3312] sm:$0x1]
        %v3315 = vlaneseq
        %v3316 = vshrl.u32 %v3315, 7
        %v3317 = vsub.s32 0, %v3316
        %v3318 = vrot.slane %v3313, %v3317
        %v3320 = vmul.f32 %v3311, %v3318
        %s3321 = scalar_lea.vmem [#allocation11], 2
        %v3322 = vld [vmem:[%s3321] sm:$0x1]
        %v3324 = vlaneseq
        %v3325 = vshrl.u32 %v3324, 7
        %v3326 = vsub.s32 0, %v3325
        %v3327 = vrot.slane %v3322, %v3326
        %v3329 = vadd.f32 %v3320, %v3327
        %v3330 = vpack.c.bf16 %v3329, %v3329
        %v3333 = vunpack.c.l.s4 1966171168
        %v3334 = vunpack.c.0.s8 %v3333
        %v3335 = vlaneseq
        %v3336 = vshrl.u32 %v3335, 7
        %v3337 = vsub.s32 %v3334, %v3336
        %v3338 = vrot.slane %v3330, %v3337
        %v3339 = vcombine.high %v3338, %v3338
        %v3341 = vunpack.c.l.s4 1966171168
        %v3342 = vunpack.c.0.s8 %v3341
        %v3343 = vlaneseq
        %v3344 = vshrl.u32 %v3343, 7
        %v3345 = vsub.s32 %v3342, %v3344
        %v3346 = vrot.slane %v3338, %v3345
        %v3348 = vunpack.c.l.s4 1966171168
        %v3349 = vunpack.c.0.s8 %v3348
        %v3350 = vlaneseq
        %v3351 = vshrl.u32 %v3350, 7
        %v3352 = vsub.s32 %v3349, %v3351
        %v3353 = vrot.slane %v3339, %v3352
        %v3354 = vunpack.i.l.s16 %v3346
        %v3355 = vunpack.i.h.s16 %v3353
        %v3356 = vpack.i.b16 %v3354, %v3354
        %v3357 = vpack.i.b16 %v3355, %v3355
        %v3359 = vunpack.c.l.s4 286326784
        %v3360 = vunpack.c.0.s8 %v3359
        %v3361 = vlaneseq
        %v3362 = vshrl.u32 %v3361, 7
        %v3363 = vsub.s32 %v3360, %v3362
        %v3364 = vrot.slane %v3356, %v3363
        %v3366 = vunpack.c.l.s4 286326784
        %v3367 = vunpack.c.0.s8 %v3366
        %v3368 = vlaneseq
        %v3369 = vshrl.u32 %v3368, 7
        %v3370 = vsub.s32 %v3367, %v3369
        %v3371 = vrot.slane %v3357, %v3370
        %v3374 = vunpack.c.l.bf16 %v3364
        %v3375 = vunpack.c.l.bf16 %v3371
        %v3376 = vld [vmem:[#allocation12] sm:$0x1]
        %v3378 = vlaneseq
        %v3379 = vshrl.u32 %v3378, 7
        %v3380 = vsub.s32 0, %v3379
        %v3381 = vrot.slane %v3376, %v3380
        %v3383 = vmul.f32 %v3374, %v3381
        %v3384 = vmul.f32 %v3375, %v3381
        %v3387 = vrot.slane %v3384, 7
        %v3388 = vsel %vm1370, %v3387, %v3383
        %v3390 = vsel %vm1267, %v3388, 0.0
        %3391 = vadd.xlane.f32.xlu0 %v3390
        %v3392 = vpop.xlane.xlu0 %3391
        %v3393 = vld [vmem:[#allocation3] sm:$0x1]
        %3395 = vset.pattern.permute.xlu0 0
        %3396 = vperm.xlu0 %3395, %v3393
        %v3397 = vpop.permute.xlu0 %3396
        %v3399 = vlaneseq
        %v3400 = vshrl.u32 %v3399, 7
        %v3401 = vsub.s32 0, %v3400
        %v3402 = vrot.slane %v3397, %v3401
        %v3403 = vadd.f32 %v3392, %v3402
        %v3404 = vxor.u32 %v3403, 2147483648
        %v3405 = vmul.f32 %v3404, 1.442695
        %v3406 = vpow.pop %v3405
        %v3407 = vadd.f32 %v3406, 1.0
        %v3408 = vrcp.pop %v3407
        %v3409 = vmul.f32 1.0, %v3408
        %v3411 = vlaneseq
        %v3412 = vand.u32 %v3411, 127
        %v3413 = vlaneseq
        %v3414 = vshrl.u32 %v3413, 7
        %v3415 = vsub.s32 %v3412, %v3414
        %v3416 = vrot.slane %v3409, %v3415
        %vm3418 = vcmask 8192
        %3419 = vst.msk [vmem:[%s472] sm:$0x1] %vm3418, %v3416
        %p3420 = scmp.lt.s32.totalorder %s28, 1
        %s3421 = scalar_select %p3420, %s28, 1
        %s3422 = scalar_lea.vmem %s11, %s3421
        // Predicated region
        $region89: #{_disc_forward.1} parent=63 // pred_check
          %p3423 = pneg %p282
        $region90: #{_disc_forward.1} parent=63 // pred_check_branch
          %3425 = sbr.rel (%p3423) target = $region92
        $region91: #{_disc_forward.1} parent=63 // pred_region
          _
        $region92: #{_disc_forward.1} parent=63 // pred_fallthru
          _
      $region64: #{_disc_forward.1} parent=5 // pred_fallthru
        _
      %p3426 = scmp.le.s32.totalorder 2, %s23
      // Predicated region
      $region93: #{_disc_forward.1} parent=5 // pred_check
        %p3427 = pneg %p3426
      $region94: #{_disc_forward.1} parent=5 // pred_check_branch
        %3429 = sbr.rel (%p3427) target = $region96
      $region95: #{_disc_forward.1} parent=5 // pred_region
        %s3430 = ssub.s32 %s23, 2
        // Predicated region
        $region97: #{_disc_forward.1} parent=95 // pred_check
          %p3431 = pneg %p288
        $region98: #{_disc_forward.1} parent=95 // pred_check_branch
          %3433 = sbr.rel (%p3431) target = $region100
        $region99: #{_disc_forward.1} parent=95 // pred_region
          %p3434 = scmp.lt.s32.totalorder %s29, 1
          %s3435 = scalar_select %p3434, %s29, 1
          %s3436 = scalar_lea.vmem %s11, %s3435
        $region100: #{_disc_forward.1} parent=95 // pred_fallthru
          _
      $region96: #{_disc_forward.1} parent=5 // pred_fallthru
        _
    $region6: #{_disc_forward.1} parent=1 // loop_footer
      %s27 = sadd.s32 1, %s23
    $region7: #{_disc_forward.1} parent=1 // loop_footer_branch
      %22 = sbr.rel target = $region3
    $region8: #{_disc_forward.1} parent=1 // loop_exit
      _
    %3437 = vsyncpa [#allocation5], 1
    %s3438 = scalar_lea.sflag [#allocation5], 1
    %3439 = vsyncpa %s3438, 1
    %3440 = vsyncpa [#allocation7], 1
    %3441 = vsyncpa [#allocation10], 1
    %3442 = vsyncpa [#allocation13], 1

</llo_original>
